<compile_context>
chip_gen: v5e
topology: v5e:2x2
jax: 0.10.0
libtpu: 0.0.40
codegen_flags: <defaults>
</compile_context>

<pallas_src>
import jax
import jax.numpy as jnp
from jax.experimental import pallas as pl
from jax.experimental.pallas import tpu as pltpu


def _make_kernel(*, beta, n, d, tq, tk, emit_logits, unit_norm):
    def kernel(scale_ref, img_ref, txt_ref, img_al_ref, txt_al_ref, *refs):
        idx = 0
        loss_ref = refs[idx]; idx += 1
        logits_ref = None
        if emit_logits:
            logits_ref = refs[idx]; idx += 1
        if unit_norm:
            l_row, l_col = refs[idx], refs[idx + 1]; idx += 2
            m_row = m_col = None
        else:
            m_row, l_row, m_col, l_col = refs[idx:idx + 4]; idx += 4
        # NOTE: kept as separate (1,1) VMEM scalars (compile-safe; padding waste negligible).
        acc_rlse, acc_clse, acc_diag, acc_img, acc_txt = refs[idx:idx + 5]

        i = pl.program_id(0)
        j = pl.program_id(1)
        ni = pl.num_programs(0)
        nj = pl.num_programs(1)
        scale = scale_ref[0, 0]

        # --- single MXU matmul (bf16 in, f32 accumulate); scale applied on the tile ------
        block = jax.lax.dot_general(
            img_ref[...], txt_ref[...],
            dimension_numbers=(((1,), (1,)), ((), ())),        # img @ txt.T
            preferred_element_type=jnp.float32) * scale        # (tq, tk) f32
        if emit_logits:
            logits_ref[...] = block.astype(logits_ref.dtype)

        # --- init accumulators on the first grid step -------------------------------------
        @pl.when(jnp.logical_and(i == 0, j == 0))
        def _():
            loss_ref[...] = jnp.zeros_like(loss_ref)
            acc_rlse[...] = jnp.zeros_like(acc_rlse)
            acc_clse[...] = jnp.zeros_like(acc_clse)
            acc_diag[...] = jnp.zeros_like(acc_diag)
            acc_img[...] = jnp.zeros_like(acc_img)
            acc_txt[...] = jnp.zeros_like(acc_txt)

        cj = pl.ds(j, 1)   # row of the 2-D column-state scratch used by column tile j

        if unit_norm:
            # |logit| <= scale for L2-normalized features -> fixed shift, ONE exp per tile,
            # reused for both the row-sum and the column-sum.  LSE = scale + log(sum).
            exp_block = jnp.exp(block - scale)
            row_sum = jnp.sum(exp_block, axis=1, keepdims=True)    # (tq, 1)
            col_sum = jnp.sum(exp_block, axis=0, keepdims=True)    # (1, tk)
            # TODO(synk): if a bundle profile shows XLU as the binding slot, move these two
            #   reductions onto the MXU (exp_block @ ones / ones @ exp_block).

            @pl.when(j == 0)
            def _():
                l_row[...] = row_sum

            @pl.when(j > 0)
            def _():
                l_row[...] += row_sum

            @pl.when(j == nj - 1)
            def _():
                acc_rlse[...] += jnp.sum(jnp.log(l_row[...]), keepdims=True)

            @pl.when(i == 0)
            def _():
                l_col[cj, :] = col_sum

            @pl.when(i > 0)
            def _():
                l_col[cj, :] = l_col[cj, :] + col_sum

            @pl.when(i == ni - 1)
            def _():
                acc_clse[...] += jnp.sum(jnp.log(l_col[cj, :]), keepdims=True)
        else:
            # Online (streaming) logsumexp fallback for non-normalized features.
            @pl.when(j == 0)
            def _():
                m_row[...] = jnp.full_like(m_row, -jnp.inf)
                l_row[...] = jnp.zeros_like(l_row)

            m_old = m_row[...]
            m_new = jnp.maximum(m_old, jnp.max(block, axis=1, keepdims=True))
            l_row[...] = (l_row[...] * jnp.exp(m_old - m_new)
                          + jnp.sum(jnp.exp(block - m_new), axis=1, keepdims=True))
            m_row[...] = m_new

            @pl.when(j == nj - 1)
            def _():
                acc_rlse[...] += jnp.sum(m_row[...] + jnp.log(l_row[...]), keepdims=True)

            @pl.when(i == 0)
            def _():
                m_col[cj, :] = jnp.full((1, tk), -jnp.inf, jnp.float32)
                l_col[cj, :] = jnp.zeros((1, tk), jnp.float32)

            mc_old = m_col[cj, :]
            mc_new = jnp.maximum(mc_old, jnp.max(block, axis=0, keepdims=True))
            l_col[cj, :] = (l_col[cj, :] * jnp.exp(mc_old - mc_new)
                            + jnp.sum(jnp.exp(block - mc_new), axis=0, keepdims=True))
            m_col[cj, :] = mc_new

            @pl.when(i == ni - 1)
            def _():
                acc_clse[...] += jnp.sum(m_col[cj, :] + jnp.log(l_col[cj, :]),
                                         keepdims=True)

        # --- diagonal (labels == arange): iota mask on the resident logits tile -----------
        row0 = i * tq
        col0 = j * tk
        has_diag = jnp.logical_and(row0 < col0 + tk, col0 < row0 + tq)

        @pl.when(has_diag)
        def _():
            rows = row0 + jax.lax.broadcasted_iota(jnp.int32, (tq, tk), 0)
            cols = col0 + jax.lax.broadcasted_iota(jnp.int32, (tq, tk), 1)
            acc_diag[...] += jnp.sum(jnp.where(rows == cols, block, 0.0), keepdims=True)

        # --- alignment MSE partial sums, fused onto tiles already resident in VMEM --------
        @pl.when(j == 0)
        def _():
            dimg = img_al_ref[...].astype(jnp.float32) - img_ref[...].astype(jnp.float32)
            acc_img[...] += jnp.sum(dimg * dimg, keepdims=True)

        @pl.when(i == 0)
        def _():
            dtxt = txt_al_ref[...].astype(jnp.float32) - txt_ref[...].astype(jnp.float32)
            acc_txt[...] += jnp.sum(dtxt * dtxt, keepdims=True)

        # --- finalize on the last grid step (normalizations are static scalars) -----------
        @pl.when(jnp.logical_and(i == ni - 1, j == nj - 1))
        def _():
            sim = (acc_rlse[...] + acc_clse[...]
                   - 2.0 * acc_diag[...]) * jnp.float32(0.5 / n)
            if unit_norm:
                sim = sim + scale          # fold the fixed shift back in
            align = (acc_img[...] + acc_txt[...]) * jnp.float32(1.0 / (n * d))
            loss_ref[...] = sim + jnp.float32(beta) * align

    return kernel


def open_clip_adv_align_loss(image_features, text_features,
                             image_features_align, text_features_align,
                             logit_scale, *, beta=1.0,
                             block_q=256, block_k=256,
                             feature_dtype=jnp.bfloat16,
                             logits_dtype=jnp.float32,
                             return_logits=True,
                             assume_unit_norm=True,
                             vmem_limit_bytes=48 * 1024 * 1024):
    """Loss hot-path of OpenClipAdvAlignLoss.

    Returns (loss [scalar f32], logits_per_image [N,N] (or None), labels [N] i32).
    Features are cast to `feature_dtype` (bf16 by default) before hitting the MXU.
    `assume_unit_norm=True` (valid for OpenCLIP's L2-normalized features) enables the
    single-exp fixed-shift softmax path.
    """
    n, d = image_features.shape
    tq = min(block_q, n)
    tk = min(block_k, n)
    assert n % tq == 0 and n % tk == 0, "batch size must divide the tile sizes"
    ni, nj = n // tq, n // tk

    img = image_features.astype(feature_dtype)
    txt = text_features.astype(feature_dtype)
    img_al = image_features_align.astype(feature_dtype)
    txt_al = text_features_align.astype(feature_dtype)
    scale_2d = jnp.asarray(logit_scale, jnp.float32).reshape(1, 1)

    kernel = _make_kernel(beta=float(beta), n=n, d=d, tq=tq, tk=tk,
                          emit_logits=return_logits, unit_norm=assume_unit_norm)

    out_shape = [jax.ShapeDtypeStruct((1, 1), jnp.float32)]
    out_specs = [pl.BlockSpec((1, 1), lambda i, j: (0, 0))]            # loss (resident)
    if return_logits:
        out_shape.append(jax.ShapeDtypeStruct((n, n), logits_dtype))
        out_specs.append(pl.BlockSpec((tq, tk), lambda i, j: (i, j)))  # logits_per_image

    scratch = []
    if assume_unit_norm:
        scratch += [pltpu.VMEM((tq, 1), jnp.float32),      # l_row (current row tile)
                    pltpu.VMEM((nj, tk), jnp.float32)]     # l_col (all column tiles)
    else:
        scratch += [pltpu.VMEM((tq, 1), jnp.float32),      # m_row
                    pltpu.VMEM((tq, 1), jnp.float32),      # l_row
                    pltpu.VMEM((nj, tk), jnp.float32),     # m_col
                    pltpu.VMEM((nj, tk), jnp.float32)]     # l_col
    scratch += [pltpu.VMEM((1, 1), jnp.float32)] * 5       # rlse, clse, diag, imgMSE, txtMSE

    # text_features_align is only read on the i == 0 row; hold its block index constant on
    # every other row so Pallas skips the re-DMA (nj fetches instead of ni*nj).
    txt_al_index = lambda i, j: (jnp.where(i == 0, j, nj - 1), 0)

    outs = pl.pallas_call(
        kernel,
        out_shape=tuple(out_shape),
        grid_spec=pltpu.PrefetchScalarGridSpec(
            num_scalar_prefetch=0,
            grid=(ni, nj),
            in_specs=[
                pl.BlockSpec(memory_space=pltpu.MemorySpace.SMEM),  # logit_scale (1,1)
                pl.BlockSpec((tq, d), lambda i, j: (i, 0)),         # image_features
                pl.BlockSpec((tk, d), lambda i, j: (j, 0)),         # text_features
                pl.BlockSpec((tq, d), lambda i, j: (i, 0)),         # image_features_align
                pl.BlockSpec((tk, d), txt_al_index),                # text_features_align
            ],
            out_specs=tuple(out_specs),
            scratch_shapes=scratch),
        compiler_params=pltpu.CompilerParams(
            # both axes carry reduction state (row/col LSE, scalar accumulators)
            dimension_semantics=("arbitrary", "arbitrary"),
            vmem_limit_bytes=vmem_limit_bytes),
    )(scale_2d, img, txt, img_al, txt_al)

    loss = outs[0][0, 0]
    logits = outs[1] if return_logits else None
    labels = jnp.arange(n, dtype=jnp.int32)   # glue, not hot path
    return loss, logits, labels


def _reference(img, txt, img_al, txt_al, scale, beta):
    logits = scale * jnp.dot(img, txt.T, precision=jax.lax.Precision.HIGHEST)
    labels = jnp.arange(img.shape[0])

    def ce(lo):
        logp = jax.nn.log_softmax(lo, axis=-1)
        return -jnp.mean(logp[jnp.arange(lo.shape[0]), labels])

    sim = 0.5 * (ce(logits) + ce(logits.T))
    align = jnp.mean((img_al - img) ** 2) + jnp.mean((txt_al - txt) ** 2)
    return sim + beta * align, logits


if __name__ == "__main__":
    # TODO(synk): the PGD adversarial loop (optimizer.step, model backprop), the frozen
    # ViT-L-14 align-model forward, lid_mle LID tracking and distributed gather_features
    # have no standalone-kernel equivalent; align-model outputs are synthesized here.
    key = jax.random.PRNGKey(0)
    k1, k2, k3, k4 = jax.random.split(key, 4)

    N, D = 512, 256            # small synthetic batch -> 2x2 tile grid at default 256 tiles
    beta = 1.0

    def unit_norm(x):
        return x / jnp.linalg.norm(x, axis=-1, keepdims=True)

    image_features = unit_norm(jax.random.normal(k1, (N, D), jnp.float32))
    text_features = unit_norm(jax.random.normal(k2, (N, D), jnp.float32))
    image_features_align = unit_norm(jax.random.normal(k3, (N, D), jnp.float32))
    text_features_align = unit_norm(jax.random.normal(k4, (N, D), jnp.float32))
    logit_scale = jnp.exp(jnp.float32(jnp.log(1.0 / 0.07)))   # OpenCLIP default scale

    # Default path: bf16 features to the MXU, fixed-shift softmax, f32 logits output.
    loss, logits, labels = open_clip_adv_align_loss(
        image_features, text_features,
        image_features_align, text_features_align,
        logit_scale, beta=beta)

    # Loss-only path (drops the [N,N] logits HBM writeback entirely).
    loss_only, no_logits, _ = open_clip_adv_align_loss(
        image_features, text_features,
        image_features_align, text_features_align,
        logit_scale, beta=beta, return_logits=False)

    # Online-softmax fallback (no unit-norm assumption).
    loss_online, _, _ = open_clip_adv_align_loss(
        image_features, text_features,
        image_features_align, text_features_align,
        logit_scale, beta=beta, return_logits=False, assume_unit_norm=False)

    jax.block_until_ready((loss, logits, labels, loss_only, loss_online))

    # Reference uses the same bf16-rounded features the kernel consumes.
    rnd = lambda x: x.astype(jnp.bfloat16).astype(jnp.float32)
    ref_loss, ref_logits = _reference(rnd(image_features), rnd(text_features),
                                      rnd(image_features_align), rnd(text_features_align),
                                      logit_scale, beta)

    assert no_logits is None
    assert labels.shape == (N,)
    assert jnp.allclose(loss, ref_loss, rtol=1e-3, atol=1e-3), (loss, ref_loss)
    assert jnp.allclose(loss_only, ref_loss, rtol=1e-3, atol=1e-3), (loss_only, ref_loss)
    assert jnp.allclose(loss_online, ref_loss, rtol=1e-3, atol=1e-3), (loss_online, ref_loss)
    assert jnp.allclose(logits, ref_logits, rtol=1e-3, atol=1e-3)

    print("KERNEL_OK")
</pallas_src>

<mosaic_0001>
module attributes {stable_mosaic.version = 11 : i64} {
  func.func @kernel(%arg0: i32, %arg1: i32, %arg2: memref<1x1xf32, #tpu.memory_space<smem>>, %arg3: memref<256x256xbf16, #tpu.memory_space<vmem>>, %arg4: memref<256x256xbf16, #tpu.memory_space<vmem>>, %arg5: memref<256x256xbf16, #tpu.memory_space<vmem>>, %arg6: memref<256x256xbf16, #tpu.memory_space<vmem>>, %arg7: memref<1x1xf32, #tpu.memory_space<vmem>>, %arg8: memref<256x256xf32, #tpu.memory_space<vmem>>, %arg9: memref<256x1xf32, #tpu.memory_space<vmem>>, %arg10: memref<2x256xf32, #tpu.memory_space<vmem>>, %arg11: memref<1x1xf32, #tpu.memory_space<vmem>>, %arg12: memref<1x1xf32, #tpu.memory_space<vmem>>, %arg13: memref<1x1xf32, #tpu.memory_space<vmem>>, %arg14: memref<1x1xf32, #tpu.memory_space<vmem>>, %arg15: memref<1x1xf32, #tpu.memory_space<vmem>>) attributes {dimension_semantics = [#tpu.dimension_semantics<arbitrary>, #tpu.dimension_semantics<arbitrary>], iteration_bounds = array<i64: 2, 2>, scalar_prefetch = 0 : i64, scratch_operands = 7 : i64, tpu.core_type = #tpu.core_type<tc>, window_params = [{transform_indices = @transform_0, window_bounds = array<i64: 1, 1>}, {transform_indices = @transform_1, window_bounds = array<i64: 256, 256>}, {transform_indices = @transform_2, window_bounds = array<i64: 256, 256>}, {transform_indices = @transform_3, window_bounds = array<i64: 256, 256>}, {transform_indices = @transform_4, window_bounds = array<i64: 256, 256>}, {pipeline_mode = #tpu.pipeline_mode<synchronous>, transform_indices = @transform_5, window_bounds = array<i64: 1, 1>}, {transform_indices = @transform_6, window_bounds = array<i64: 256, 256>}]} {
    %c0 = arith.constant 0 : index
    %c0_0 = arith.constant 0 : index
    %0 = memref.load %arg2[%c0, %c0_0] : memref<1x1xf32, #tpu.memory_space<smem>>
    %c0_1 = arith.constant 0 : index
    %c0_2 = arith.constant 0 : index
    %1 = vector.load %arg3[%c0_1, %c0_2] : memref<256x256xbf16, #tpu.memory_space<vmem>>, vector<256x256xbf16>
    %c0_3 = arith.constant 0 : index
    %c0_4 = arith.constant 0 : index
    %2 = vector.load %arg4[%c0_3, %c0_4] : memref<256x256xbf16, #tpu.memory_space<vmem>>, vector<256x256xbf16>
    %cst = arith.constant dense<0.000000e+00> : vector<256x256xf32>
    %3 = tpu.matmul %1, %2, %cst {dimension_numbers = #tpu.dot_dimension_numbers<[1], [1], [0], [0], [0, 0, 1, 0], [], []>} : vector<256x256xbf16>, vector<256x256xbf16>, vector<256x256xf32> -> vector<256x256xf32>
    %4 = vector.broadcast %0 : f32 to vector<256x256xf32>
    %5 = arith.mulf %3, %4 : vector<256x256xf32>
    %c0_5 = arith.constant 0 : index
    %c0_6 = arith.constant 0 : index
    %6 = vector.load %arg8[%c0_5, %c0_6] : memref<256x256xf32, #tpu.memory_space<vmem>>, vector<256x256xf32>
    tpu.vector_store %arg8[%c0_5, %c0_6], %5 {strides = array<i32>} : memref<256x256xf32, #tpu.memory_space<vmem>>, vector<256x256xf32>,
    %c0_i32 = arith.constant 0 : i32
    %7 = arith.cmpi eq, %arg0, %c0_i32 : i32
    %c0_i32_7 = arith.constant 0 : i32
    %8 = arith.cmpi eq, %arg1, %c0_i32_7 : i32
    %9 = arith.andi %7, %8 : i1
    %10 = arith.extui %9 : i1 to i32
    %c0_i32_8 = arith.constant 0 : i32
    %11 = arith.cmpi ne, %10, %c0_i32_8 : i32
    scf.if %11 {
      %cst_33 = arith.constant 0.000000e+00 : f32
      %57 = vector.broadcast %cst_33 : f32 to vector<1x1xf32>
      %c0_34 = arith.constant 0 : index
      %c0_35 = arith.constant 0 : index
      %58 = vector.load %arg7[%c0_34, %c0_35] : memref<1x1xf32, #tpu.memory_space<vmem>>, vector<1x1xf32>
      tpu.vector_store %arg7[%c0_34, %c0_35], %57 {strides = array<i32>} : memref<1x1xf32, #tpu.memory_space<vmem>>, vector<1x1xf32>,
      %cst_36 = arith.constant 0.000000e+00 : f32
      %59 = vector.broadcast %cst_36 : f32 to vector<1x1xf32>
      %c0_37 = arith.constant 0 : index
      %c0_38 = arith.constant 0 : index
      %60 = vector.load %arg11[%c0_37, %c0_38] : memref<1x1xf32, #tpu.memory_space<vmem>>, vector<1x1xf32>
      tpu.vector_store %arg11[%c0_37, %c0_38], %59 {strides = array<i32>} : memref<1x1xf32, #tpu.memory_space<vmem>>, vector<1x1xf32>,
      %cst_39 = arith.constant 0.000000e+00 : f32
      %61 = vector.broadcast %cst_39 : f32 to vector<1x1xf32>
      %c0_40 = arith.constant 0 : index
      %c0_41 = arith.constant 0 : index
      %62 = vector.load %arg12[%c0_40, %c0_41] : memref<1x1xf32, #tpu.memory_space<vmem>>, vector<1x1xf32>
      tpu.vector_store %arg12[%c0_40, %c0_41], %61 {strides = array<i32>} : memref<1x1xf32, #tpu.memory_space<vmem>>, vector<1x1xf32>,
      %cst_42 = arith.constant 0.000000e+00 : f32
      %63 = vector.broadcast %cst_42 : f32 to vector<1x1xf32>
      %c0_43 = arith.constant 0 : index
      %c0_44 = arith.constant 0 : index
      %64 = vector.load %arg13[%c0_43, %c0_44] : memref<1x1xf32, #tpu.memory_space<vmem>>, vector<1x1xf32>
      tpu.vector_store %arg13[%c0_43, %c0_44], %63 {strides = array<i32>} : memref<1x1xf32, #tpu.memory_space<vmem>>, vector<1x1xf32>,
      %cst_45 = arith.constant 0.000000e+00 : f32
      %65 = vector.broadcast %cst_45 : f32 to vector<1x1xf32>
      %c0_46 = arith.constant 0 : index
      %c0_47 = arith.constant 0 : index
      %66 = vector.load %arg14[%c0_46, %c0_47] : memref<1x1xf32, #tpu.memory_space<vmem>>, vector<1x1xf32>
      tpu.vector_store %arg14[%c0_46, %c0_47], %65 {strides = array<i32>} : memref<1x1xf32, #tpu.memory_space<vmem>>, vector<1x1xf32>,
      %cst_48 = arith.constant 0.000000e+00 : f32
      %67 = vector.broadcast %cst_48 : f32 to vector<1x1xf32>
      %c0_49 = arith.constant 0 : index
      %c0_50 = arith.constant 0 : index
      %68 = vector.load %arg15[%c0_49, %c0_50] : memref<1x1xf32, #tpu.memory_space<vmem>>, vector<1x1xf32>
      tpu.vector_store %arg15[%c0_49, %c0_50], %67 {strides = array<i32>} : memref<1x1xf32, #tpu.memory_space<vmem>>, vector<1x1xf32>,
    } else {
    }
    %12 = vector.broadcast %0 : f32 to vector<256x256xf32>
    %13 = arith.subf %5, %12 : vector<256x256xf32>
    %14 = math.exp %13 : vector<256x256xf32>
    %cst_9 = arith.constant dense<0.000000e+00> : vector<256xf32>
    %15 = vector.multi_reduction <add>, %14, %cst_9 [1] : vector<256x256xf32> to vector<256xf32>
    %16 = vector.shape_cast %15 : vector<256xf32> to vector<256x1xf32>
    %cst_10 = arith.constant dense<0.000000e+00> : vector<256xf32>
    %17 = vector.multi_reduction <add>, %14, %cst_10 [0] : vector<256x256xf32> to vector<256xf32>
    %18 = vector.shape_cast %17 : vector<256xf32> to vector<1x256xf32>
    %c0_i32_11 = arith.constant 0 : i32
    %19 = arith.cmpi eq, %arg1, %c0_i32_11 : i32
    %20 = arith.extui %19 : i1 to i32
    %c0_i32_12 = arith.constant 0 : i32
    %21 = arith.cmpi ne, %20, %c0_i32_12 : i32
    scf.if %21 {
      %c0_33 = arith.constant 0 : index
      %c0_34 = arith.constant 0 : index
      %57 = vector.load %arg9[%c0_33, %c0_34] : memref<256x1xf32, #tpu.memory_space<vmem>>, vector<256x1xf32>
      tpu.vector_store %arg9[%c0_33, %c0_34], %16 {strides = array<i32>} : memref<256x1xf32, #tpu.memory_space<vmem>>, vector<256x1xf32>,
    } else {
    }
    %c0_i32_13 = arith.constant 0 : i32
    %22 = arith.cmpi sgt, %arg1, %c0_i32_13 : i32
    %23 = arith.extui %22 : i1 to i32
    %c0_i32_14 = arith.constant 0 : i32
    %24 = arith.cmpi ne, %23, %c0_i32_14 : i32
    scf.if %24 {
      %c0_33 = arith.constant 0 : index
      %c0_34 = arith.constant 0 : index
      %57 = vector.load %arg9[%c0_33, %c0_34] : memref<256x1xf32, #tpu.memory_space<vmem>>, vector<256x1xf32>
      %58 = arith.addf %57, %16 : vector<256x1xf32>
      %c0_35 = arith.constant 0 : index
      %c0_36 = arith.constant 0 : index
      %59 = vector.load %arg9[%c0_35, %c0_36] : memref<256x1xf32, #tpu.memory_space<vmem>>, vector<256x1xf32>
      tpu.vector_store %arg9[%c0_35, %c0_36], %58 {strides = array<i32>} : memref<256x1xf32, #tpu.memory_space<vmem>>, vector<256x1xf32>,
    } else {
    }
    %c1_i32 = arith.constant 1 : i32
    %25 = arith.cmpi eq, %arg1, %c1_i32 : i32
    %26 = arith.extui %25 : i1 to i32
    %c0_i32_15 = arith.constant 0 : i32
    %27 = arith.cmpi ne, %26, %c0_i32_15 : i32
    scf.if %27 {
      %c0_33 = arith.constant 0 : index
      %c0_34 = arith.constant 0 : index
      %57 = vector.load %arg11[%c0_33, %c0_34] : memref<1x1xf32, #tpu.memory_space<vmem>>, vector<1x1xf32>
      %c0_35 = arith.constant 0 : index
      %c0_36 = arith.constant 0 : index
      %58 = vector.load %arg9[%c0_35, %c0_36] : memref<256x1xf32, #tpu.memory_space<vmem>>, vector<256x1xf32>
      %59 = math.log %58 : vector<256x1xf32>
      %60 = vector.shape_cast %59 : vector<256x1xf32> to vector<1x256x1xf32>
      %cst_37 = arith.constant dense<0.000000e+00> : vector<1xf32>
      %61 = vector.multi_reduction <add>, %60, %cst_37 [1, 2] : vector<1x256x1xf32> to vector<1xf32>
      %62 = vector.shape_cast %61 : vector<1xf32> to vector<1x1x1xf32>
      %63 = vector.extract %62[0, 0, 0] : f32 from vector<1x1x1xf32>
      %64 = vector.broadcast %63 : f32 to vector<1x1xf32>
      %65 = arith.addf %57, %64 : vector<1x1xf32>
      %c0_38 = arith.constant 0 : index
      %c0_39 = arith.constant 0 : index
      %66 = vector.load %arg11[%c0_38, %c0_39] : memref<1x1xf32, #tpu.memory_space<vmem>>, vector<1x1xf32>
      tpu.vector_store %arg11[%c0_38, %c0_39], %65 {strides = array<i32>} : memref<1x1xf32, #tpu.memory_space<vmem>>, vector<1x1xf32>,
    } else {
    }
    %c0_i32_16 = arith.constant 0 : i32
    %28 = arith.cmpi eq, %arg0, %c0_i32_16 : i32
    %29 = arith.extui %28 : i1 to i32
    %c0_i32_17 = arith.constant 0 : i32
    %30 = arith.cmpi ne, %29, %c0_i32_17 : i32
    scf.if %30 {
      %57 = arith.index_cast %arg1 : i32 to index
      %c0_33 = arith.constant 0 : index
      %58 = vector.load %arg10[%57, %c0_33] : memref<2x256xf32, #tpu.memory_space<vmem>>, vector<1x256xf32>
      tpu.vector_store %arg10[%57, %c0_33], %18 {strides = array<i32>} : memref<2x256xf32, #tpu.memory_space<vmem>>, vector<1x256xf32>,
    } else {
    }
    %c0_i32_18 = arith.constant 0 : i32
    %31 = arith.cmpi sgt, %arg0, %c0_i32_18 : i32
    %32 = arith.extui %31 : i1 to i32
    %c0_i32_19 = arith.constant 0 : i32
    %33 = arith.cmpi ne, %32, %c0_i32_19 : i32
    scf.if %33 {
      %57 = arith.index_cast %arg1 : i32 to index
      %c0_33 = arith.constant 0 : index
      %58 = vector.load %arg10[%57, %c0_33] : memref<2x256xf32, #tpu.memory_space<vmem>>, vector<1x256xf32>
      %59 = arith.addf %58, %18 : vector<1x256xf32>
      %60 = arith.index_cast %arg1 : i32 to index
      %c0_34 = arith.constant 0 : index
      %61 = vector.load %arg10[%60, %c0_34] : memref<2x256xf32, #tpu.memory_space<vmem>>, vector<1x256xf32>
      tpu.vector_store %arg10[%60, %c0_34], %59 {strides = array<i32>} : memref<2x256xf32, #tpu.memory_space<vmem>>, vector<1x256xf32>,
    } else {
    }
    %c1_i32_20 = arith.constant 1 : i32
    %34 = arith.cmpi eq, %arg0, %c1_i32_20 : i32
    %35 = arith.extui %34 : i1 to i32
    %c0_i32_21 = arith.constant 0 : i32
    %36 = arith.cmpi ne, %35, %c0_i32_21 : i32
    scf.if %36 {
      %c0_33 = arith.constant 0 : index
      %c0_34 = arith.constant 0 : index
      %57 = vector.load %arg12[%c0_33, %c0_34] : memref<1x1xf32, #tpu.memory_space<vmem>>, vector<1x1xf32>
      %58 = arith.index_cast %arg1 : i32 to index
      %c0_35 = arith.constant 0 : index
      %59 = vector.load %arg10[%58, %c0_35] : memref<2x256xf32, #tpu.memory_space<vmem>>, vector<1x256xf32>
      %60 = math.log %59 : vector<1x256xf32>
      %61 = vector.shape_cast %60 : vector<1x256xf32> to vector<1x1x256xf32>
      %cst_36 = arith.constant dense<0.000000e+00> : vector<1xf32>
      %62 = vector.multi_reduction <add>, %61, %cst_36 [1, 2] : vector<1x1x256xf32> to vector<1xf32>
      %63 = vector.shape_cast %62 : vector<1xf32> to vector<1x1x1xf32>
      %64 = vector.extract %63[0, 0, 0] : f32 from vector<1x1x1xf32>
      %65 = vector.broadcast %64 : f32 to vector<1x1xf32>
      %66 = arith.addf %57, %65 : vector<1x1xf32>
      %c0_37 = arith.constant 0 : index
      %c0_38 = arith.constant 0 : index
      %67 = vector.load %arg12[%c0_37, %c0_38] : memref<1x1xf32, #tpu.memory_space<vmem>>, vector<1x1xf32>
      tpu.vector_store %arg12[%c0_37, %c0_38], %66 {strides = array<i32>} : memref<1x1xf32, #tpu.memory_space<vmem>>, vector<1x1xf32>,
    } else {
    }
    %c256_i32 = arith.constant 256 : i32
    %37 = arith.muli %arg0, %c256_i32 : i32
    %c256_i32_22 = arith.constant 256 : i32
    %38 = arith.muli %arg1, %c256_i32_22 : i32
    %c256_i32_23 = arith.constant 256 : i32
    %39 = arith.addi %38, %c256_i32_23 : i32
    %40 = arith.cmpi slt, %37, %39 : i32
    %c256_i32_24 = arith.constant 256 : i32
    %41 = arith.addi %37, %c256_i32_24 : i32
    %42 = arith.cmpi slt, %38, %41 : i32
    %43 = arith.andi %40, %42 : i1
    %44 = arith.extui %43 : i1 to i32
    %c0_i32_25 = arith.constant 0 : i32
    %45 = arith.cmpi ne, %44, %c0_i32_25 : i32
    scf.if %45 {
      %57 = tpu.iota {dimensions = array<i32: 0>} : vector<256x256xi32>
      %58 = vector.broadcast %37 : i32 to vector<256x256xi32>
      %59 = arith.addi %58, %57 : vector<256x256xi32>
      %60 = tpu.iota {dimensions = array<i32: 1>} : vector<256x256xi32>
      %61 = vector.broadcast %38 : i32 to vector<256x256xi32>
      %62 = arith.addi %61, %60 : vector<256x256xi32>
      %c0_33 = arith.constant 0 : index
      %c0_34 = arith.constant 0 : index
      %63 = vector.load %arg13[%c0_33, %c0_34] : memref<1x1xf32, #tpu.memory_space<vmem>>, vector<1x1xf32>
      %64 = arith.cmpi eq, %59, %62 : vector<256x256xi32>
      %cst_35 = arith.constant 0.000000e+00 : f32
      %65 = vector.broadcast %cst_35 : f32 to vector<256x256xf32>
      %66 = arith.select %64, %5, %65 : vector<256x256xi1>, vector<256x256xf32>
      %67 = vector.shape_cast %66 : vector<256x256xf32> to vector<1x256x256xf32>
      %cst_36 = arith.constant dense<0.000000e+00> : vector<1xf32>
      %68 = vector.multi_reduction <add>, %67, %cst_36 [1, 2] : vector<1x256x256xf32> to vector<1xf32>
      %69 = vector.shape_cast %68 : vector<1xf32> to vector<1x1x1xf32>
      %70 = vector.extract %69[0, 0, 0] : f32 from vector<1x1x1xf32>
      %71 = vector.broadcast %70 : f32 to vector<1x1xf32>
      %72 = arith.addf %63, %71 : vector<1x1xf32>
      %c0_37 = arith.constant 0 : index
      %c0_38 = arith.constant 0 : index
      %73 = vector.load %arg13[%c0_37, %c0_38] : memref<1x1xf32, #tpu.memory_space<vmem>>, vector<1x1xf32>
      tpu.vector_store %arg13[%c0_37, %c0_38], %72 {strides = array<i32>} : memref<1x1xf32, #tpu.memory_space<vmem>>, vector<1x1xf32>,
    } else {
    }
    %c0_i32_26 = arith.constant 0 : i32
    %46 = arith.cmpi eq, %arg1, %c0_i32_26 : i32
    %47 = arith.extui %46 : i1 to i32
    %c0_i32_27 = arith.constant 0 : i32
    %48 = arith.cmpi ne, %47, %c0_i32_27 : i32
    scf.if %48 {
      %c0_33 = arith.constant 0 : index
      %c0_34 = arith.constant 0 : index
      %57 = vector.load %arg5[%c0_33, %c0_34] : memref<256x256xbf16, #tpu.memory_space<vmem>>, vector<256x256xbf16>
      %58 = arith.extf %57 : vector<256x256xbf16> to vector<256x256xf32>
      %c0_35 = arith.constant 0 : index
      %c0_36 = arith.constant 0 : index
      %59 = vector.load %arg3[%c0_35, %c0_36] : memref<256x256xbf16, #tpu.memory_space<vmem>>, vector<256x256xbf16>
      %60 = arith.extf %59 : vector<256x256xbf16> to vector<256x256xf32>
      %61 = arith.subf %58, %60 : vector<256x256xf32>
      %c0_37 = arith.constant 0 : index
      %c0_38 = arith.constant 0 : index
      %62 = vector.load %arg14[%c0_37, %c0_38] : memref<1x1xf32, #tpu.memory_space<vmem>>, vector<1x1xf32>
      %63 = arith.mulf %61, %61 : vector<256x256xf32>
      %64 = vector.shape_cast %63 : vector<256x256xf32> to vector<1x256x256xf32>
      %cst_39 = arith.constant dense<0.000000e+00> : vector<1xf32>
      %65 = vector.multi_reduction <add>, %64, %cst_39 [1, 2] : vector<1x256x256xf32> to vector<1xf32>
      %66 = vector.shape_cast %65 : vector<1xf32> to vector<1x1x1xf32>
      %67 = vector.extract %66[0, 0, 0] : f32 from vector<1x1x1xf32>
      %68 = vector.broadcast %67 : f32 to vector<1x1xf32>
      %69 = arith.addf %62, %68 : vector<1x1xf32>
      %c0_40 = arith.constant 0 : index
      %c0_41 = arith.constant 0 : index
      %70 = vector.load %arg14[%c0_40, %c0_41] : memref<1x1xf32, #tpu.memory_space<vmem>>, vector<1x1xf32>
      tpu.vector_store %arg14[%c0_40, %c0_41], %69 {strides = array<i32>} : memref<1x1xf32, #tpu.memory_space<vmem>>, vector<1x1xf32>,
    } else {
    }
    %c0_i32_28 = arith.constant 0 : i32
    %49 = arith.cmpi eq, %arg0, %c0_i32_28 : i32
    %50 = arith.extui %49 : i1 to i32
    %c0_i32_29 = arith.constant 0 : i32
    %51 = arith.cmpi ne, %50, %c0_i32_29 : i32
    scf.if %51 {
      %c0_33 = arith.constant 0 : index
      %c0_34 = arith.constant 0 : index
      %57 = vector.load %arg6[%c0_33, %c0_34] : memref<256x256xbf16, #tpu.memory_space<vmem>>, vector<256x256xbf16>
      %58 = arith.extf %57 : vector<256x256xbf16> to vector<256x256xf32>
      %c0_35 = arith.constant 0 : index
      %c0_36 = arith.constant 0 : index
      %59 = vector.load %arg4[%c0_35, %c0_36] : memref<256x256xbf16, #tpu.memory_space<vmem>>, vector<256x256xbf16>
      %60 = arith.extf %59 : vector<256x256xbf16> to vector<256x256xf32>
      %61 = arith.subf %58, %60 : vector<256x256xf32>
      %c0_37 = arith.constant 0 : index
      %c0_38 = arith.constant 0 : index
      %62 = vector.load %arg15[%c0_37, %c0_38] : memref<1x1xf32, #tpu.memory_space<vmem>>, vector<1x1xf32>
      %63 = arith.mulf %61, %61 : vector<256x256xf32>
      %64 = vector.shape_cast %63 : vector<256x256xf32> to vector<1x256x256xf32>
      %cst_39 = arith.constant dense<0.000000e+00> : vector<1xf32>
      %65 = vector.multi_reduction <add>, %64, %cst_39 [1, 2] : vector<1x256x256xf32> to vector<1xf32>
      %66 = vector.shape_cast %65 : vector<1xf32> to vector<1x1x1xf32>
      %67 = vector.extract %66[0, 0, 0] : f32 from vector<1x1x1xf32>
      %68 = vector.broadcast %67 : f32 to vector<1x1xf32>
      %69 = arith.addf %62, %68 : vector<1x1xf32>
      %c0_40 = arith.constant 0 : index
      %c0_41 = arith.constant 0 : index
      %70 = vector.load %arg15[%c0_40, %c0_41] : memref<1x1xf32, #tpu.memory_space<vmem>>, vector<1x1xf32>
      tpu.vector_store %arg15[%c0_40, %c0_41], %69 {strides = array<i32>} : memref<1x1xf32, #tpu.memory_space<vmem>>, vector<1x1xf32>,
    } else {
    }
    %c1_i32_30 = arith.constant 1 : i32
    %52 = arith.cmpi eq, %arg0, %c1_i32_30 : i32
    %c1_i32_31 = arith.constant 1 : i32
    %53 = arith.cmpi eq, %arg1, %c1_i32_31 : i32
    %54 = arith.andi %52, %53 : i1
    %55 = arith.extui %54 : i1 to i32
    %c0_i32_32 = arith.constant 0 : i32
    %56 = arith.cmpi ne, %55, %c0_i32_32 : i32
    scf.if %56 {
      %c0_33 = arith.constant 0 : index
      %c0_34 = arith.constant 0 : index
      %57 = vector.load %arg11[%c0_33, %c0_34] : memref<1x1xf32, #tpu.memory_space<vmem>>, vector<1x1xf32>
      %c0_35 = arith.constant 0 : index
      %c0_36 = arith.constant 0 : index
      %58 = vector.load %arg12[%c0_35, %c0_36] : memref<1x1xf32, #tpu.memory_space<vmem>>, vector<1x1xf32>
      %59 = arith.addf %57, %58 : vector<1x1xf32>
      %c0_37 = arith.constant 0 : index
      %c0_38 = arith.constant 0 : index
      %60 = vector.load %arg13[%c0_37, %c0_38] : memref<1x1xf32, #tpu.memory_space<vmem>>, vector<1x1xf32>
      %cst_39 = arith.constant 2.000000e+00 : f32
      %61 = vector.broadcast %cst_39 : f32 to vector<1x1xf32>
      %62 = arith.mulf %61, %60 : vector<1x1xf32>
      %63 = arith.subf %59, %62 : vector<1x1xf32>
      %cst_40 = arith.constant 9.765625E-4 : f32
      %64 = vector.broadcast %cst_40 : f32 to vector<1x1xf32>
      %65 = arith.mulf %63, %64 : vector<1x1xf32>
      %66 = vector.broadcast %0 : f32 to vector<1x1xf32>
      %67 = arith.addf %65, %66 : vector<1x1xf32>
      %c0_41 = arith.constant 0 : index
      %c0_42 = arith.constant 0 : index
      %68 = vector.load %arg14[%c0_41, %c0_42] : memref<1x1xf32, #tpu.memory_space<vmem>>, vector<1x1xf32>
      %c0_43 = arith.constant 0 : index
      %c0_44 = arith.constant 0 : index
      %69 = vector.load %arg15[%c0_43, %c0_44] : memref<1x1xf32, #tpu.memory_space<vmem>>, vector<1x1xf32>
      %70 = arith.addf %68, %69 : vector<1x1xf32>
      %cst_45 = arith.constant 7.62939453E-6 : f32
      %71 = vector.broadcast %cst_45 : f32 to vector<1x1xf32>
      %72 = arith.mulf %70, %71 : vector<1x1xf32>
      %cst_46 = arith.constant 1.000000e+00 : f32
      %73 = vector.broadcast %cst_46 : f32 to vector<1x1xf32>
      %74 = arith.mulf %73, %72 : vector<1x1xf32>
      %75 = arith.addf %67, %74 : vector<1x1xf32>
      %c0_47 = arith.constant 0 : index
      %c0_48 = arith.constant 0 : index
      %76 = vector.load %arg7[%c0_47, %c0_48] : memref<1x1xf32, #tpu.memory_space<vmem>>, vector<1x1xf32>
      tpu.vector_store %arg7[%c0_47, %c0_48], %75 {strides = array<i32>} : memref<1x1xf32, #tpu.memory_space<vmem>>, vector<1x1xf32>,
    } else {
    }
    return
  }
  func.func @transform_0(%arg0: i32, %arg1: i32) -> (i32, i32) {
    %c0_i32 = arith.constant 0 : i32
    %c0_i32_0 = arith.constant 0 : i32
    %c0_i32_1 = arith.constant 0 : i32
    return %c0_i32, %c0_i32_0 : i32, i32
  }
  func.func @transform_1(%arg0: i32, %arg1: i32) -> (i32, i32) {
    %c0_i32 = arith.constant 0 : i32
    %c0_i32_0 = arith.constant 0 : i32
    return %arg0, %c0_i32 : i32, i32
  }
  func.func @transform_2(%arg0: i32, %arg1: i32) -> (i32, i32) {
    %c0_i32 = arith.constant 0 : i32
    %c0_i32_0 = arith.constant 0 : i32
    return %arg1, %c0_i32 : i32, i32
  }
  func.func @transform_3(%arg0: i32, %arg1: i32) -> (i32, i32) {
    %c0_i32 = arith.constant 0 : i32
    %c0_i32_0 = arith.constant 0 : i32
    return %arg0, %c0_i32 : i32, i32
  }
  func.func @transform_4(%arg0: i32, %arg1: i32) -> (i32, i32) {
    %c0_i32 = arith.constant 0 : i32
    %0 = arith.cmpi eq, %arg0, %c0_i32 : i32
    %c1_i32 = arith.constant 1 : i32
    %1 = arith.select %0, %arg1, %c1_i32 : i32
    %c0_i32_0 = arith.constant 0 : i32
    %c0_i32_1 = arith.constant 0 : i32
    return %1, %c0_i32_0 : i32, i32
  }
  func.func @transform_5(%arg0: i32, %arg1: i32) -> (i32, i32) {
    %c0_i32 = arith.constant 0 : i32
    %c0_i32_0 = arith.constant 0 : i32
    %c0_i32_1 = arith.constant 0 : i32
    return %c0_i32, %c0_i32_0 : i32, i32
  }
  func.func @transform_6(%arg0: i32, %arg1: i32) -> (i32, i32) {
    %c0_i32 = arith.constant 0 : i32
    return %arg0, %arg1 : i32, i32
  }
}

</mosaic_0001>

<llo_original>
// kernel: tpu_custom_call.1
$region0: #{tpu_custom_call.1}
  #allocation0 [shape = 'u32[]', space=smem, size = 0x4, offset = 0x4, fixed_abs, tag = 'smem constant byte address 0x4 - core index']
  #allocation1 [shape = 'u32[72,128]{1,0:T(1,128)}', space=vmem, size = 0x9000, scoped, tag = 'internal scratch']
  #allocation2 [shape = 'f32[256,1]{1,0:T(8,128)}', space=vmem, size = 0x20000, scoped, tag = 'scratch operand']
  #allocation3 [shape = 'f32[2,256]{1,0:T(2,128)}', space=vmem, size = 0x800, scoped, tag = 'scratch operand']
  #allocation4 [shape = 'f32[1,1]{1,0:T(1,128)}', space=vmem, size = 0x200, scoped, tag = 'scratch operand']
  #allocation5 [shape = 'f32[1,1]{1,0:T(1,128)}', space=vmem, size = 0x200, scoped, tag = 'scratch operand']
  #allocation6 [shape = 'f32[1,1]{1,0:T(1,128)}', space=vmem, size = 0x200, scoped, tag = 'scratch operand']
  #allocation7 [shape = 'f32[1,1]{1,0:T(1,128)}', space=vmem, size = 0x200, scoped, tag = 'scratch operand']
  #allocation8 [shape = 'f32[1,1]{1,0:T(1,128)}', space=vmem, size = 0x200, scoped, tag = 'scratch operand']
  #allocation9 [shape = 'f32[1,1]{1,0:T(1,128)S(6)}', space=smem, size = 0x200, scoped, tag = 'scoped memory for tpu_custom_call.1']
  %s0 = inlined_call_operand.<no memory space> [shape: f32[1,1], index: 0, kind: input, shape index: {}]
  %s1 = inlined_call_operand.hbm [shape: bf16[512,256], index: 1, kind: input, shape index: {}]
  %s2 = inlined_call_operand.hbm [shape: bf16[512,256], index: 2, kind: input, shape index: {}]
  %s3 = inlined_call_operand.hbm [shape: bf16[512,256], index: 3, kind: input, shape index: {}]
  %s4 = inlined_call_operand.hbm [shape: bf16[512,256], index: 4, kind: input, shape index: {}]
  %s5 = inlined_call_operand.hbm [shape: f32[1,1], index: 5, kind: output, shape index: {0}]
  %s6 = inlined_call_operand.hbm [shape: f32[512,512], index: 6, kind: output, shape index: {1}]
  %7 = xla_tuple %s5, %s6
  %s8 = sld [smem:[#allocation0]]
  $region121: #{tpu_custom_call.1} parent=0
    _
  %s10 = ssub.s32 1, %s8
  %s11 = scalar_select 0, %s10, %s8
  %12 = sst [smem:[#allocation9]] %s0
  $region1: #{tpu_custom_call.1} parent=0
    #allocation10 [shape = 'u8[262144]{0}', space=vmem, size = 0x40000, scoped, tag = 'input window, operand 1']
    #allocation11 [shape = 's32[2]{0}', space=sflag, size = 0x8, scoped, tag = 'scoped memory for tpu_custom_call.1']
    #allocation12 [shape = 's32[2]{0}', space=sflag, size = 0x8, scoped, tag = 'scoped memory for tpu_custom_call.1']
    #allocation13 [shape = 'u8[262144]{0}', space=vmem, size = 0x40000, scoped, tag = 'input window, operand 2']
    #allocation14 [shape = 's32[2]{0}', space=sflag, size = 0x8, scoped, tag = 'scoped memory for tpu_custom_call.1']
    #allocation15 [shape = 'u8[262144]{0}', space=vmem, size = 0x40000, scoped, tag = 'input window, operand 3']
    #allocation16 [shape = 'u8[262144]{0}', space=vmem, size = 0x40000, scoped, tag = 'input window, operand 4']
    #allocation17 [shape = 's32[2]{0}', space=sflag, size = 0x8, scoped, tag = 'scoped memory for tpu_custom_call.1']
    #allocation18 [shape = 'u8[512]{0}', space=vmem, size = 0x400, scoped, tag = 'output window, operand 0, single buffered']
    #allocation19 [shape = 'u8[524288]{0}', space=vmem, size = 0x80000, scoped, tag = 'output window, operand 1']
    #allocation20 [shape = 's32[2]{0}', space=sflag, size = 0x8, scoped, tag = 'scoped memory for tpu_custom_call.1']
    %13 = vsyncpa [#allocation11], 0
    %s14 = scalar_lea.sflag [#allocation11], 1
    %15 = vsyncpa %s14, 0
    %16 = vsyncpa [#allocation14], 0
    %s17 = scalar_lea.sflag [#allocation14], 1
    %18 = vsyncpa %s17, 0
    %19 = vsyncpa [#allocation17], 0
    %s20 = scalar_lea.sflag [#allocation17], 1
    %21 = vsyncpa %s20, 0
    %22 = vsyncpa [#allocation12], 0
    %23 = vsyncpa [#allocation20], 0
    %s24 = scalar_lea.sflag [#allocation20], 1
    %25 = vsyncpa %s24, 0
    loop: start=0, step=1, limit=6
    $region2: #{tpu_custom_call.1} parent=1 // loop_pre_header
      _
    $region3: #{tpu_custom_call.1} parent=1 // loop_header
      %s27 = sphi 0, %s31
      %p28 = scmp.ge.s32.totalorder %s27, 6
      %s34 = sphi 0, %s46
      %s35 = sphi 0, %s42
      %s36 = sphi 0, %s34
      %s37 = sphi 0, %s35
      %s38 = sphi 0, %s36
      %s39 = sphi 0, %s37
      %s47 = sphi 0, %s47
      %s49 = sphi 0, %s47
      %s50 = sphi 0, %s49
      %s64 = sphi 0, %s50
      %s70 = sphi 0, %s72
      %s73 = sphi 0, %s70
      %s74 = sphi 0, %s73
      %s90 = sphi 0, %s74
      %s96 = sphi 0, %s98
      %s99 = sphi 0, %s96
      %s100 = sphi 0, %s99
      %s116 = sphi 0, %s100
      %s122 = sphi 0, %s124
      %s125 = sphi 0, %s122
      %s126 = sphi 0, %s125
      %s142 = sphi 0, %s126
      %s152 = sphi 0, %s154
      %s155 = sphi 0, %s152
      %s156 = sphi 0, %s155
      %s172 = sphi 0, %s156
      %s176 = sphi 0, %s176
      %s178 = sphi 0, %s176
      %s179 = sphi 0, %s178
      %s193 = sphi 0, %s179
      %s201 = sphi 0, %s203
      %s204 = sphi 0, %s201
      %s205 = sphi 0, %s204
      %s221 = sphi 0, %s205
    $region4: #{tpu_custom_call.1} parent=1 // loop_header_branch
      %30 = sbr.rel (%p28) target = $region8
    $region5: #{tpu_custom_call.1} parent=1 // loop_body
      %s32 = ssub.s32 %s27, 1
      %s33 = ssub.s32 %s27, 2
      %s40 = sadd.s32 1, %s35
      %p41 = scmp.ge.s32.totalorder %s40, 2
      %s42 = scalar_select %p41, 0, %s40
      %s43 = sadd.s32 1, %s34
      %s44 = scalar_select %p41, %s43, %s34
      %p45 = scmp.ge.s32.totalorder %s44, 2
      %s46 = scalar_select %p45, 0, %s44
      %s48 = sadd.s32 %s47, 1
      %p51 = scmp.eq.s32.totalorder %s27, 3
      %p52 = scmp.ne.s32.totalorder %s47, %s49
      %p53 = scmp.eq.s32.totalorder %s27, 0
      %p54 = por %p52, %p53
      %p55 = scmp.ne.s32.totalorder %s47, %s49
      %p56 = scmp.eq.s32.totalorder %s32, 3
      %p57 = por %p55, %p56
      %p58 = scmp.ne.s32.totalorder %s49, %s50
      %p59 = scmp.eq.s32.totalorder %s32, 0
      %p60 = por %p58, %p59
      %p61 = scmp.ne.s32.totalorder %s49, %s50
      %p62 = scmp.eq.s32.totalorder %s33, 3
      %p63 = por %p61, %p62
      %p65 = scmp.ne.s32.totalorder %s50, %s64
      %p66 = scmp.eq.s32.totalorder %s33, 0
      %p67 = por %p65, %p66
      %s68 = ssub.s32 %s34, %s46
      %p69 = scmp.eq.s32.totalorder %s68, 0
      %s71 = sadd.s32 %s70, 1
      %s72 = scalar_select %p69, %s70, %s71
      %p75 = pneg %p69
      %p76 = scmp.eq.s32.totalorder %s27, 3
      %p77 = por %p75, %p76
      %p78 = scmp.ne.s32.totalorder %s70, %s73
      %p79 = scmp.eq.s32.totalorder %s27, 0
      %p80 = por %p78, %p79
      %p81 = scmp.ne.s32.totalorder %s70, %s73
      %p82 = scmp.eq.s32.totalorder %s32, 3
      %p83 = por %p81, %p82
      %p84 = scmp.ne.s32.totalorder %s73, %s74
      %p85 = scmp.eq.s32.totalorder %s32, 0
      %p86 = por %p84, %p85
      %p87 = scmp.ne.s32.totalorder %s73, %s74
      %p88 = scmp.eq.s32.totalorder %s33, 3
      %p89 = por %p87, %p88
      %p91 = scmp.ne.s32.totalorder %s74, %s90
      %p92 = scmp.eq.s32.totalorder %s33, 0
      %p93 = por %p91, %p92
      %s94 = ssub.s32 %s35, %s42
      %p95 = scmp.eq.s32.totalorder %s94, 0
      %s97 = sadd.s32 %s96, 1
      %s98 = scalar_select %p95, %s96, %s97
      %p101 = pneg %p95
      %p102 = scmp.eq.s32.totalorder %s27, 3
      %p103 = por %p101, %p102
      %p104 = scmp.ne.s32.totalorder %s96, %s99
      %p105 = scmp.eq.s32.totalorder %s27, 0
      %p106 = por %p104, %p105
      %p107 = scmp.ne.s32.totalorder %s96, %s99
      %p108 = scmp.eq.s32.totalorder %s32, 3
      %p109 = por %p107, %p108
      %p110 = scmp.ne.s32.totalorder %s99, %s100
      %p111 = scmp.eq.s32.totalorder %s32, 0
      %p112 = por %p110, %p111
      %p113 = scmp.ne.s32.totalorder %s99, %s100
      %p114 = scmp.eq.s32.totalorder %s33, 3
      %p115 = por %p113, %p114
      %p117 = scmp.ne.s32.totalorder %s100, %s116
      %p118 = scmp.eq.s32.totalorder %s33, 0
      %p119 = por %p117, %p118
      %s120 = ssub.s32 %s34, %s46
      %p121 = scmp.eq.s32.totalorder %s120, 0
      %s123 = sadd.s32 %s122, 1
      %s124 = scalar_select %p121, %s122, %s123
      %p127 = pneg %p121
      %p128 = scmp.eq.s32.totalorder %s27, 3
      %p129 = por %p127, %p128
      %p130 = scmp.ne.s32.totalorder %s122, %s125
      %p131 = scmp.eq.s32.totalorder %s27, 0
      %p132 = por %p130, %p131
      %p133 = scmp.ne.s32.totalorder %s122, %s125
      %p134 = scmp.eq.s32.totalorder %s32, 3
      %p135 = por %p133, %p134
      %p136 = scmp.ne.s32.totalorder %s125, %s126
      %p137 = scmp.eq.s32.totalorder %s32, 0
      %p138 = por %p136, %p137
      %p139 = scmp.ne.s32.totalorder %s125, %s126
      %p140 = scmp.eq.s32.totalorder %s33, 3
      %p141 = por %p139, %p140
      %p143 = scmp.ne.s32.totalorder %s126, %s142
      %p144 = scmp.eq.s32.totalorder %s33, 0
      %p145 = por %p143, %p144
      %p146 = scmp.eq.s32.totalorder %s34, 0
      %s147 = scalar_select %p146, %s35, 1
      %p148 = scmp.eq.s32.totalorder %s46, 0
      %s149 = scalar_select %p148, %s42, 1
      %s150 = ssub.s32 %s147, %s149
      %p151 = scmp.eq.s32.totalorder %s150, 0
      %s153 = sadd.s32 %s152, 1
      %s154 = scalar_select %p151, %s152, %s153
      %p157 = pneg %p151
      %p158 = scmp.eq.s32.totalorder %s27, 3
      %p159 = por %p157, %p158
      %p160 = scmp.ne.s32.totalorder %s152, %s155
      %p161 = scmp.eq.s32.totalorder %s27, 0
      %p162 = por %p160, %p161
      %p163 = scmp.ne.s32.totalorder %s152, %s155
      %p164 = scmp.eq.s32.totalorder %s32, 3
      %p165 = por %p163, %p164
      %p166 = scmp.ne.s32.totalorder %s155, %s156
      %p167 = scmp.eq.s32.totalorder %s32, 0
      %p168 = por %p166, %p167
      %p169 = scmp.ne.s32.totalorder %s155, %s156
      %p170 = scmp.eq.s32.totalorder %s33, 3
      %p171 = por %p169, %p170
      %p173 = scmp.ne.s32.totalorder %s156, %s172
      %p174 = scmp.eq.s32.totalorder %s33, 0
      %p175 = por %p173, %p174
      %s177 = sadd.s32 %s176, 1
      %p180 = scmp.eq.s32.totalorder %s27, 3
      %p181 = scmp.ne.s32.totalorder %s176, %s178
      %p182 = scmp.eq.s32.totalorder %s27, 0
      %p183 = por %p181, %p182
      %p184 = scmp.ne.s32.totalorder %s176, %s178
      %p185 = scmp.eq.s32.totalorder %s32, 3
      %p186 = por %p184, %p185
      %p187 = scmp.ne.s32.totalorder %s178, %s179
      %p188 = scmp.eq.s32.totalorder %s32, 0
      %p189 = por %p187, %p188
      %p190 = scmp.ne.s32.totalorder %s178, %s179
      %p191 = scmp.eq.s32.totalorder %s33, 3
      %p192 = por %p190, %p191
      %p194 = scmp.ne.s32.totalorder %s179, %s193
      %p195 = scmp.eq.s32.totalorder %s33, 0
      %p196 = por %p194, %p195
      %s197 = ssub.s32 %s34, %s46
      %s198 = ssub.s32 %s35, %s42
      %s199 = sor.u32 %s197, %s198
      %p200 = scmp.eq.s32.totalorder %s199, 0
      %s202 = sadd.s32 %s201, 1
      %s203 = scalar_select %p200, %s201, %s202
      %p206 = pneg %p200
      %p207 = scmp.eq.s32.totalorder %s27, 3
      %p208 = por %p206, %p207
      %p209 = scmp.ne.s32.totalorder %s201, %s204
      %p210 = scmp.eq.s32.totalorder %s27, 0
      %p211 = por %p209, %p210
      %p212 = scmp.ne.s32.totalorder %s201, %s204
      %p213 = scmp.eq.s32.totalorder %s32, 3
      %p214 = por %p212, %p213
      %p215 = scmp.ne.s32.totalorder %s204, %s205
      %p216 = scmp.eq.s32.totalorder %s32, 0
      %p217 = por %p215, %p216
      %p218 = scmp.ne.s32.totalorder %s204, %s205
      %p219 = scmp.eq.s32.totalorder %s33, 3
      %p220 = por %p218, %p219
      %p222 = scmp.ne.s32.totalorder %s205, %s221
      %p223 = scmp.eq.s32.totalorder %s33, 0
      %p224 = por %p222, %p223
      %p225 = scmp.le.s32.totalorder 1, %s27
      %p226 = scmp.lt.s32.totalorder %s27, 5
      %p227 = pnand %p225, %p226
      %p228 = pneg %p227
      // Predicated region
      $region9: #{tpu_custom_call.1} parent=5 // pred_check
        _
      $region10: #{tpu_custom_call.1} parent=5 // pred_check_branch
        %230 = sbr.rel (%p227) target = $region12
      $region11: #{tpu_custom_call.1} parent=5 // pred_region
        %s231 = ssub.s32 %s27, 1
        // Predicated region
        $region13: #{tpu_custom_call.1} parent=11 // pred_check
          %p232 = pneg %p60
        $region14: #{tpu_custom_call.1} parent=11 // pred_check_branch
          %234 = sbr.rel (%p232) target = $region16
        $region15: #{tpu_custom_call.1} parent=11 // pred_region
          _
        $region16: #{tpu_custom_call.1} parent=11 // pred_fallthru
          _
      $region12: #{tpu_custom_call.1} parent=5 // pred_fallthru
        _
      %p235 = scmp.lt.s32.totalorder %s27, 4
      // Predicated region
      $region17: #{tpu_custom_call.1} parent=5 // pred_check
        %p236 = pneg %p235
      $region18: #{tpu_custom_call.1} parent=5 // pred_check_branch
        %238 = sbr.rel (%p236) target = $region20
      $region19: #{tpu_custom_call.1} parent=5 // pred_region
        // Predicated region
        $region21: #{tpu_custom_call.1} parent=19 // pred_check
          %p239 = pneg %p80
        $region22: #{tpu_custom_call.1} parent=19 // pred_check_branch
          %241 = sbr.rel (%p239) target = $region24
        $region23: #{tpu_custom_call.1} parent=19 // pred_region
          %s242 = sand.u32 %s70, 1
          %s243 = scalar_lea.sflag [#allocation11], %s242
          %s244 = sand.u32 %s70, 1
          %s245 = smul.addr %s244, 256
          %s246 = scalar_lea.vmem [#allocation10], %s245
          %s247 = smul.u32 32, %s34
          %249 = vsyncadd %s243, 0
          %s250 = smul.addr %s247, 2
          %s251 = smul.addr %s250, 4
          %s252 = scalar_lea.hbm %s1, %s251
          %s253 = sshll.u32 %s252, 4
          %s254 = int_to_ptr.hbm [resolvable:$true] %s253
          %s255 = sshll.u32 %s246, 4
          %s256 = int_to_ptr.vmem [resolvable:$true] %s255
          %261 = dma.hbm_to_vmem [thread:$0]  %s254, 4096, %s256, %s243, 128, 128, 8
        $region24: #{tpu_custom_call.1} parent=19 // pred_fallthru
          _
        // Predicated region
        $region25: #{tpu_custom_call.1} parent=19 // pred_check
          %p262 = pneg %p106
        $region26: #{tpu_custom_call.1} parent=19 // pred_check_branch
          %264 = sbr.rel (%p262) target = $region28
        $region27: #{tpu_custom_call.1} parent=19 // pred_region
          %s265 = sand.u32 %s27, 1
          %s266 = scalar_lea.sflag [#allocation14], %s265
          %s267 = sand.u32 %s96, 1
          %s268 = smul.addr %s267, 256
          %s269 = scalar_lea.vmem [#allocation13], %s268
          %s270 = smul.u32 32, %s35
          %272 = vsyncadd %s266, 0
          %s273 = smul.addr %s270, 2
          %s274 = smul.addr %s273, 4
          %s275 = scalar_lea.hbm %s2, %s274
          %s276 = sshll.u32 %s275, 4
          %s277 = int_to_ptr.hbm [resolvable:$true] %s276
          %s278 = sshll.u32 %s269, 4
          %s279 = int_to_ptr.vmem [resolvable:$true] %s278
          %284 = dma.hbm_to_vmem [thread:$0]  %s277, 4096, %s279, %s266, 128, 128, 8
        $region28: #{tpu_custom_call.1} parent=19 // pred_fallthru
          _
        // Predicated region
        $region29: #{tpu_custom_call.1} parent=19 // pred_check
          %p285 = pneg %p132
        $region30: #{tpu_custom_call.1} parent=19 // pred_check_branch
          %287 = sbr.rel (%p285) target = $region32
        $region31: #{tpu_custom_call.1} parent=19 // pred_region
          %s288 = sand.u32 %s27, 1
          %s289 = scalar_lea.sflag [#allocation14], %s288
          %s290 = sand.u32 %s122, 1
          %s291 = smul.addr %s290, 256
          %s292 = scalar_lea.vmem [#allocation15], %s291
          %s293 = smul.u32 32, %s34
          %295 = vsyncadd %s289, 0
          %s296 = smul.addr %s293, 2
          %s297 = smul.addr %s296, 4
          %s298 = scalar_lea.hbm %s3, %s297
          %s299 = sshll.u32 %s298, 4
          %s300 = int_to_ptr.hbm [resolvable:$true] %s299
          %s301 = sshll.u32 %s292, 4
          %s302 = int_to_ptr.vmem [resolvable:$true] %s301
          %307 = dma.hbm_to_vmem [thread:$0]  %s300, 4096, %s302, %s289, 128, 128, 8
        $region32: #{tpu_custom_call.1} parent=19 // pred_fallthru
          _
        // Predicated region
        $region33: #{tpu_custom_call.1} parent=19 // pred_check
          %p308 = pneg %p162
        $region34: #{tpu_custom_call.1} parent=19 // pred_check_branch
          %310 = sbr.rel (%p308) target = $region36
        $region35: #{tpu_custom_call.1} parent=19 // pred_region
          %s311 = sand.u32 %s152, 1
          %s312 = scalar_lea.sflag [#allocation17], %s311
          %s313 = sand.u32 %s152, 1
          %s314 = smul.addr %s313, 256
          %s315 = scalar_lea.vmem [#allocation16], %s314
          %p316 = scmp.eq.s32.totalorder %s34, 0
          %s317 = scalar_select %p316, %s35, 1
          %s318 = smul.u32 32, %s317
          %320 = vsyncadd %s312, 0
          %s321 = smul.addr %s318, 2
          %s322 = smul.addr %s321, 4
          %s323 = scalar_lea.hbm %s4, %s322
          %s324 = sshll.u32 %s323, 4
          %s325 = int_to_ptr.hbm [resolvable:$true] %s324
          %s326 = sshll.u32 %s315, 4
          %s327 = int_to_ptr.vmem [resolvable:$true] %s326
          %332 = dma.hbm_to_vmem [thread:$0]  %s325, 4096, %s327, %s312, 128, 128, 8
        $region36: #{tpu_custom_call.1} parent=19 // pred_fallthru
          _
      $region20: #{tpu_custom_call.1} parent=5 // pred_fallthru
        _
      %p333 = scmp.le.s32.totalorder 1, %s27
      %p334 = scmp.lt.s32.totalorder %s27, 5
      %p335 = pnand %p333, %p334
      %p336 = pneg %p335
      // Predicated region
      $region37: #{tpu_custom_call.1} parent=5 // pred_check
        _
      $region38: #{tpu_custom_call.1} parent=5 // pred_check_branch
        %338 = sbr.rel (%p335) target = $region40
      $region39: #{tpu_custom_call.1} parent=5 // pred_region
        %s339 = ssub.s32 %s27, 1
        %s340 = sand.u32 %s73, 1
        %s341 = scalar_lea.sflag [#allocation11], %s340
        %s342 = sand.u32 %s73, 1
        %s343 = smul.addr %s342, 256
        %s344 = scalar_lea.vmem [#allocation10], %s343
        // Predicated region
        $region41: #{tpu_custom_call.1} parent=39 // pred_check
          %p345 = pneg %p86
        $region42: #{tpu_custom_call.1} parent=39 // pred_check_branch
          %347 = sbr.rel (%p345) target = $region44
        $region43: #{tpu_custom_call.1} parent=39 // pred_region
          %349 = dma.done %s341, 4096
        $region44: #{tpu_custom_call.1} parent=39 // pred_fallthru
          _
        %s350 = sand.u32 %s32, 1
        %s351 = scalar_lea.sflag [#allocation14], %s350
        %s352 = sand.u32 %s99, 1
        %s353 = smul.addr %s352, 256
        %s354 = scalar_lea.vmem [#allocation13], %s353
        // Predicated region
        $region45: #{tpu_custom_call.1} parent=39 // pred_check
          %p355 = pneg %p112
        $region46: #{tpu_custom_call.1} parent=39 // pred_check_branch
          %357 = sbr.rel (%p355) target = $region48
        $region47: #{tpu_custom_call.1} parent=39 // pred_region
          %359 = dma.done %s351, 4096
        $region48: #{tpu_custom_call.1} parent=39 // pred_fallthru
          _
        %s360 = sand.u32 %s32, 1
        %s361 = scalar_lea.sflag [#allocation14], %s360
        %s362 = sand.u32 %s125, 1
        %s363 = smul.addr %s362, 256
        %s364 = scalar_lea.vmem [#allocation15], %s363
        // Predicated region
        $region49: #{tpu_custom_call.1} parent=39 // pred_check
          %p365 = pneg %p138
        $region50: #{tpu_custom_call.1} parent=39 // pred_check_branch
          %367 = sbr.rel (%p365) target = $region52
        $region51: #{tpu_custom_call.1} parent=39 // pred_region
          %369 = dma.done %s361, 4096
        $region52: #{tpu_custom_call.1} parent=39 // pred_fallthru
          _
        %s370 = sand.u32 %s155, 1
        %s371 = scalar_lea.sflag [#allocation17], %s370
        %s372 = sand.u32 %s155, 1
        %s373 = smul.addr %s372, 256
        %s374 = scalar_lea.vmem [#allocation16], %s373
        // Predicated region
        $region53: #{tpu_custom_call.1} parent=39 // pred_check
          %p375 = pneg %p168
        $region54: #{tpu_custom_call.1} parent=39 // pred_check_branch
          %377 = sbr.rel (%p375) target = $region56
        $region55: #{tpu_custom_call.1} parent=39 // pred_region
          %379 = dma.done %s371, 4096
        $region56: #{tpu_custom_call.1} parent=39 // pred_fallthru
          _
        %p380 = pneg %p60
        %p381 = pneg %p57
        %s382 = sand.u32 %s73, 1
        %s383 = scalar_lea.sflag [#allocation11], %s382
        %s384 = sand.u32 %s73, 1
        %s385 = smul.addr %s384, 256
        %s386 = scalar_lea.vmem [#allocation10], %s385
        %p387 = pneg %p86
        %p388 = pneg %p83
        %s389 = sand.u32 %s32, 1
        %s390 = scalar_lea.sflag [#allocation14], %s389
        %s391 = sand.u32 %s99, 1
        %s392 = smul.addr %s391, 256
        %s393 = scalar_lea.vmem [#allocation13], %s392
        %p394 = pneg %p112
        %p395 = pneg %p109
        %s396 = sand.u32 %s32, 1
        %s397 = scalar_lea.sflag [#allocation14], %s396
        %s398 = sand.u32 %s125, 1
        %s399 = smul.addr %s398, 256
        %s400 = scalar_lea.vmem [#allocation15], %s399
        %p401 = pneg %p138
        %p402 = pneg %p135
        %s403 = sand.u32 %s155, 1
        %s404 = scalar_lea.sflag [#allocation17], %s403
        %s405 = sand.u32 %s155, 1
        %s406 = smul.addr %s405, 256
        %s407 = scalar_lea.vmem [#allocation16], %s406
        %p408 = pneg %p168
        %p409 = pneg %p165
        %p410 = pneg %p189
        %p411 = pneg %p186
        %p412 = pneg %p217
        %p413 = pneg %p214
        %s414 = sand.u32 %s204, 1
        %s415 = scalar_lea.sflag [#allocation20], %s414
        %s416 = sand.u32 %s204, 1
        %s417 = smul.addr %s416, 512
        %s418 = scalar_lea.vmem [#allocation19], %s417
        %s419 = smul.u32 32, %s36
        %s420 = smul.u32 32, %s37
        %s421 = smul.u32 32, %s36
        %p422 = scmp.eq.s32.totalorder %s36, 0
        %s423 = scalar_select %p422, %s37, 1
        %s424 = smul.u32 32, %s423
        %s425 = smul.u32 32, %s36
        %s426 = smul.u32 2, %s37
        %s427 = sld [smem:[#allocation9]]
        %v428 = vld [vmem:[%s344] sm:$0xff]
        %v429 = vld [vmem:[%s344 + $0x8] sm:$0xff]
        %v430 = vld [vmem:[%s344 + $0x10] sm:$0xff]
        %v431 = vld [vmem:[%s344 + $0x18] sm:$0xff]
        %v432 = vld [vmem:[%s344 + $0x20] sm:$0xff]
        %v433 = vld [vmem:[%s344 + $0x28] sm:$0xff]
        %v434 = vld [vmem:[%s344 + $0x30] sm:$0xff]
        %v435 = vld [vmem:[%s344 + $0x38] sm:$0xff]
        %v436 = vld [vmem:[%s344 + $0x40] sm:$0xff]
        %v437 = vld [vmem:[%s344 + $0x48] sm:$0xff]
        %v438 = vld [vmem:[%s344 + $0x50] sm:$0xff]
        %v439 = vld [vmem:[%s344 + $0x58] sm:$0xff]
        %v440 = vld [vmem:[%s344 + $0x60] sm:$0xff]
        %v441 = vld [vmem:[%s344 + $0x68] sm:$0xff]
        %v442 = vld [vmem:[%s344 + $0x70] sm:$0xff]
        %v443 = vld [vmem:[%s344 + $0x78] sm:$0xff]
        %v444 = vld [vmem:[%s344 + $0x80] sm:$0xff]
        %v445 = vld [vmem:[%s344 + $0x88] sm:$0xff]
        %v446 = vld [vmem:[%s344 + $0x90] sm:$0xff]
        %v447 = vld [vmem:[%s344 + $0x98] sm:$0xff]
        %v448 = vld [vmem:[%s344 + $0xa0] sm:$0xff]
        %v449 = vld [vmem:[%s344 + $0xa8] sm:$0xff]
        %v450 = vld [vmem:[%s344 + $0xb0] sm:$0xff]
        %v451 = vld [vmem:[%s344 + $0xb8] sm:$0xff]
        %v452 = vld [vmem:[%s344 + $0xc0] sm:$0xff]
        %v453 = vld [vmem:[%s344 + $0xc8] sm:$0xff]
        %v454 = vld [vmem:[%s344 + $0xd0] sm:$0xff]
        %v455 = vld [vmem:[%s344 + $0xd8] sm:$0xff]
        %v456 = vld [vmem:[%s344 + $0xe0] sm:$0xff]
        %v457 = vld [vmem:[%s344 + $0xe8] sm:$0xff]
        %v458 = vld [vmem:[%s344 + $0xf0] sm:$0xff]
        %v459 = vld [vmem:[%s344 + $0xf8] sm:$0xff]
        %v460 = vld [vmem:[%s354] sm:$0xff]
        %v461 = vld [vmem:[%s354 + $0x8] sm:$0xff]
        %v462 = vld [vmem:[%s354 + $0x10] sm:$0xff]
        %v463 = vld [vmem:[%s354 + $0x18] sm:$0xff]
        %v464 = vld [vmem:[%s354 + $0x20] sm:$0xff]
        %v465 = vld [vmem:[%s354 + $0x28] sm:$0xff]
        %v466 = vld [vmem:[%s354 + $0x30] sm:$0xff]
        %v467 = vld [vmem:[%s354 + $0x38] sm:$0xff]
        %v468 = vld [vmem:[%s354 + $0x40] sm:$0xff]
        %v469 = vld [vmem:[%s354 + $0x48] sm:$0xff]
        %v470 = vld [vmem:[%s354 + $0x50] sm:$0xff]
        %v471 = vld [vmem:[%s354 + $0x58] sm:$0xff]
        %v472 = vld [vmem:[%s354 + $0x60] sm:$0xff]
        %v473 = vld [vmem:[%s354 + $0x68] sm:$0xff]
        %v474 = vld [vmem:[%s354 + $0x70] sm:$0xff]
        %v475 = vld [vmem:[%s354 + $0x78] sm:$0xff]
        %v476 = vld [vmem:[%s354 + $0x80] sm:$0xff]
        %v477 = vld [vmem:[%s354 + $0x88] sm:$0xff]
        %v478 = vld [vmem:[%s354 + $0x90] sm:$0xff]
        %v479 = vld [vmem:[%s354 + $0x98] sm:$0xff]
        %v480 = vld [vmem:[%s354 + $0xa0] sm:$0xff]
        %v481 = vld [vmem:[%s354 + $0xa8] sm:$0xff]
        %v482 = vld [vmem:[%s354 + $0xb0] sm:$0xff]
        %v483 = vld [vmem:[%s354 + $0xb8] sm:$0xff]
        %v484 = vld [vmem:[%s354 + $0xc0] sm:$0xff]
        %v485 = vld [vmem:[%s354 + $0xc8] sm:$0xff]
        %v486 = vld [vmem:[%s354 + $0xd0] sm:$0xff]
        %v487 = vld [vmem:[%s354 + $0xd8] sm:$0xff]
        %v488 = vld [vmem:[%s354 + $0xe0] sm:$0xff]
        %v489 = vld [vmem:[%s354 + $0xe8] sm:$0xff]
        %v490 = vld [vmem:[%s354 + $0xf0] sm:$0xff]
        %v491 = vld [vmem:[%s354 + $0xf8] sm:$0xff]
        %v524 = vunpack.c.l.b16 %v428
        %v525 = vunpack.c.h.b16 %v428
        %v526 = vunpack.c.l.b16 %v429
        %v527 = vunpack.c.h.b16 %v429
        %v528 = vunpack.c.l.b16 %v430
        %v529 = vunpack.c.h.b16 %v430
        %v530 = vunpack.c.l.b16 %v431
        %v531 = vunpack.c.h.b16 %v431
        %v532 = vunpack.c.l.b16 %v432
        %v533 = vunpack.c.h.b16 %v432
        %v534 = vunpack.c.l.b16 %v433
        %v535 = vunpack.c.h.b16 %v433
        %v536 = vunpack.c.l.b16 %v434
        %v537 = vunpack.c.h.b16 %v434
        %v538 = vunpack.c.l.b16 %v435
        %v539 = vunpack.c.h.b16 %v435
        %v540 = vunpack.c.l.b16 %v436
        %v541 = vunpack.c.h.b16 %v436
        %v542 = vunpack.c.l.b16 %v437
        %v543 = vunpack.c.h.b16 %v437
        %v544 = vunpack.c.l.b16 %v438
        %v545 = vunpack.c.h.b16 %v438
        %v546 = vunpack.c.l.b16 %v439
        %v547 = vunpack.c.h.b16 %v439
        %v548 = vunpack.c.l.b16 %v440
        %v549 = vunpack.c.h.b16 %v440
        %v550 = vunpack.c.l.b16 %v441
        %v551 = vunpack.c.h.b16 %v441
        %v552 = vunpack.c.l.b16 %v442
        %v553 = vunpack.c.h.b16 %v442
        %v554 = vunpack.c.l.b16 %v443
        %v555 = vunpack.c.h.b16 %v443
        %v556 = vunpack.c.l.b16 %v444
        %v557 = vunpack.c.h.b16 %v444
        %v558 = vunpack.c.l.b16 %v445
        %v559 = vunpack.c.h.b16 %v445
        %v560 = vunpack.c.l.b16 %v446
        %v561 = vunpack.c.h.b16 %v446
        %v562 = vunpack.c.l.b16 %v447
        %v563 = vunpack.c.h.b16 %v447
        %v564 = vunpack.c.l.b16 %v448
        %v565 = vunpack.c.h.b16 %v448
        %v566 = vunpack.c.l.b16 %v449
        %v567 = vunpack.c.h.b16 %v449
        %v568 = vunpack.c.l.b16 %v450
        %v569 = vunpack.c.h.b16 %v450
        %v570 = vunpack.c.l.b16 %v451
        %v571 = vunpack.c.h.b16 %v451
        %v572 = vunpack.c.l.b16 %v452
        %v573 = vunpack.c.h.b16 %v452
        %v574 = vunpack.c.l.b16 %v453
        %v575 = vunpack.c.h.b16 %v453
        %v576 = vunpack.c.l.b16 %v454
        %v577 = vunpack.c.h.b16 %v454
        %v578 = vunpack.c.l.b16 %v455
        %v579 = vunpack.c.h.b16 %v455
        %v580 = vunpack.c.l.b16 %v456
        %v581 = vunpack.c.h.b16 %v456
        %v582 = vunpack.c.l.b16 %v457
        %v583 = vunpack.c.h.b16 %v457
        %v584 = vunpack.c.l.b16 %v458
        %v585 = vunpack.c.h.b16 %v458
        %v586 = vunpack.c.l.b16 %v459
        %v587 = vunpack.c.h.b16 %v459
        %v588 = vpack.c.b16 %v526, %v524
        %v589 = vpack.c.b16 %v527, %v525
        %v590 = vpack.c.b16 %v530, %v528
        %v591 = vpack.c.b16 %v531, %v529
        %v592 = vpack.c.b16 %v534, %v532
        %v593 = vpack.c.b16 %v535, %v533
        %v594 = vpack.c.b16 %v538, %v536
        %v595 = vpack.c.b16 %v539, %v537
        %v596 = vpack.c.b16 %v542, %v540
        %v597 = vpack.c.b16 %v543, %v541
        %v598 = vpack.c.b16 %v546, %v544
        %v599 = vpack.c.b16 %v547, %v545
        %v600 = vpack.c.b16 %v550, %v548
        %v601 = vpack.c.b16 %v551, %v549
        %v602 = vpack.c.b16 %v554, %v552
        %v603 = vpack.c.b16 %v555, %v553
        %v604 = vpack.c.b16 %v558, %v556
        %v605 = vpack.c.b16 %v559, %v557
        %v606 = vpack.c.b16 %v562, %v560
        %v607 = vpack.c.b16 %v563, %v561
        %v608 = vpack.c.b16 %v566, %v564
        %v609 = vpack.c.b16 %v567, %v565
        %v610 = vpack.c.b16 %v570, %v568
        %v611 = vpack.c.b16 %v571, %v569
        %v612 = vpack.c.b16 %v574, %v572
        %v613 = vpack.c.b16 %v575, %v573
        %v614 = vpack.c.b16 %v578, %v576
        %v615 = vpack.c.b16 %v579, %v577
        %v616 = vpack.c.b16 %v582, %v580
        %v617 = vpack.c.b16 %v583, %v581
        %v618 = vpack.c.b16 %v586, %v584
        %v619 = vpack.c.b16 %v587, %v585
        %v684 = vunpack.c.l.b16 %v460
        %v685 = vunpack.c.h.b16 %v460
        %v686 = vunpack.c.l.b16 %v461
        %v687 = vunpack.c.h.b16 %v461
        %v688 = vunpack.c.l.b16 %v462
        %v689 = vunpack.c.h.b16 %v462
        %v690 = vunpack.c.l.b16 %v463
        %v691 = vunpack.c.h.b16 %v463
        %v692 = vunpack.c.l.b16 %v464
        %v693 = vunpack.c.h.b16 %v464
        %v694 = vunpack.c.l.b16 %v465
        %v695 = vunpack.c.h.b16 %v465
        %v696 = vunpack.c.l.b16 %v466
        %v697 = vunpack.c.h.b16 %v466
        %v698 = vunpack.c.l.b16 %v467
        %v699 = vunpack.c.h.b16 %v467
        %v700 = vunpack.c.l.b16 %v468
        %v701 = vunpack.c.h.b16 %v468
        %v702 = vunpack.c.l.b16 %v469
        %v703 = vunpack.c.h.b16 %v469
        %v704 = vunpack.c.l.b16 %v470
        %v705 = vunpack.c.h.b16 %v470
        %v706 = vunpack.c.l.b16 %v471
        %v707 = vunpack.c.h.b16 %v471
        %v708 = vunpack.c.l.b16 %v472
        %v709 = vunpack.c.h.b16 %v472
        %v710 = vunpack.c.l.b16 %v473
        %v711 = vunpack.c.h.b16 %v473
        %v712 = vunpack.c.l.b16 %v474
        %v713 = vunpack.c.h.b16 %v474
        %v714 = vunpack.c.l.b16 %v475
        %v715 = vunpack.c.h.b16 %v475
        %v716 = vunpack.c.l.b16 %v476
        %v717 = vunpack.c.h.b16 %v476
        %v718 = vunpack.c.l.b16 %v477
        %v719 = vunpack.c.h.b16 %v477
        %v720 = vunpack.c.l.b16 %v478
        %v721 = vunpack.c.h.b16 %v478
        %v722 = vunpack.c.l.b16 %v479
        %v723 = vunpack.c.h.b16 %v479
        %v724 = vunpack.c.l.b16 %v480
        %v725 = vunpack.c.h.b16 %v480
        %v726 = vunpack.c.l.b16 %v481
        %v727 = vunpack.c.h.b16 %v481
        %v728 = vunpack.c.l.b16 %v482
        %v729 = vunpack.c.h.b16 %v482
        %v730 = vunpack.c.l.b16 %v483
        %v731 = vunpack.c.h.b16 %v483
        %v732 = vunpack.c.l.b16 %v484
        %v733 = vunpack.c.h.b16 %v484
        %v734 = vunpack.c.l.b16 %v485
        %v735 = vunpack.c.h.b16 %v485
        %v736 = vunpack.c.l.b16 %v486
        %v737 = vunpack.c.h.b16 %v486
        %v738 = vunpack.c.l.b16 %v487
        %v739 = vunpack.c.h.b16 %v487
        %v740 = vunpack.c.l.b16 %v488
        %v741 = vunpack.c.h.b16 %v488
        %v742 = vunpack.c.l.b16 %v489
        %v743 = vunpack.c.h.b16 %v489
        %v744 = vunpack.c.l.b16 %v490
        %v745 = vunpack.c.h.b16 %v490
        %v746 = vunpack.c.l.b16 %v491
        %v747 = vunpack.c.h.b16 %v491
        %v748 = vpack.c.b16 %v686, %v684
        %v749 = vpack.c.b16 %v687, %v685
        %v750 = vpack.c.b16 %v690, %v688
        %v751 = vpack.c.b16 %v691, %v689
        %v752 = vpack.c.b16 %v694, %v692
        %v753 = vpack.c.b16 %v695, %v693
        %v754 = vpack.c.b16 %v698, %v696
        %v755 = vpack.c.b16 %v699, %v697
        %v756 = vpack.c.b16 %v702, %v700
        %v757 = vpack.c.b16 %v703, %v701
        %v758 = vpack.c.b16 %v706, %v704
        %v759 = vpack.c.b16 %v707, %v705
        %v760 = vpack.c.b16 %v710, %v708
        %v761 = vpack.c.b16 %v711, %v709
        %v762 = vpack.c.b16 %v714, %v712
        %v763 = vpack.c.b16 %v715, %v713
        %v764 = vpack.c.b16 %v718, %v716
        %v765 = vpack.c.b16 %v719, %v717
        %v766 = vpack.c.b16 %v722, %v720
        %v767 = vpack.c.b16 %v723, %v721
        %v768 = vpack.c.b16 %v726, %v724
        %v769 = vpack.c.b16 %v727, %v725
        %v770 = vpack.c.b16 %v730, %v728
        %v771 = vpack.c.b16 %v731, %v729
        %v772 = vpack.c.b16 %v734, %v732
        %v773 = vpack.c.b16 %v735, %v733
        %v774 = vpack.c.b16 %v738, %v736
        %v775 = vpack.c.b16 %v739, %v737
        %v776 = vpack.c.b16 %v742, %v740
        %v777 = vpack.c.b16 %v743, %v741
        %v778 = vpack.c.b16 %v746, %v744
        %v779 = vpack.c.b16 %v747, %v745
        %812 = vmatpush.bf16.xpose.msra.mxu0 %v762
        %813 = vmatpush.bf16.xpose.msra.mxu0 %v760
        %814 = vmatpush.bf16.xpose.msra.mxu0 %v758
        %815 = vmatpush.bf16.xpose.msra.mxu0 %v756
        %816 = vmatpush.bf16.xpose.msra.mxu0 %v754
        %817 = vmatpush.bf16.xpose.msra.mxu0 %v752
        %818 = vmatpush.bf16.xpose.msra.mxu0 %v750
        %819 = vmatpush.bf16.xpose.msra.mxu0 %v748
        %820 = vmatmul.bf16.gmra.mxu0 %v588
        %v821 = vpop.f32.mrf.mxu0
        %v822 = vadd.f32 0.0, %v821
        %v823 = vpop.f32.mrf.mxu0
        %v824 = vadd.f32 0.0, %v823
        %825 = vmatmul.bf16.gmra.mxu0 %v590
        %v826 = vpop.f32.mrf.mxu0
        %v827 = vadd.f32 0.0, %v826
        %v828 = vpop.f32.mrf.mxu0
        %v829 = vadd.f32 0.0, %v828
        %830 = vmatmul.bf16.gmra.mxu0 %v592
        %v831 = vpop.f32.mrf.mxu0
        %v832 = vadd.f32 0.0, %v831
        %v833 = vpop.f32.mrf.mxu0
        %v834 = vadd.f32 0.0, %v833
        %835 = vmatmul.bf16.gmra.mxu0 %v594
        %v836 = vpop.f32.mrf.mxu0
        %v837 = vadd.f32 0.0, %v836
        %v838 = vpop.f32.mrf.mxu0
        %v839 = vadd.f32 0.0, %v838
        %840 = vmatmul.bf16.gmra.mxu0 %v596
        %v841 = vpop.f32.mrf.mxu0
        %v842 = vadd.f32 0.0, %v841
        %v843 = vpop.f32.mrf.mxu0
        %v844 = vadd.f32 0.0, %v843
        %845 = vmatmul.bf16.gmra.mxu0 %v598
        %v846 = vpop.f32.mrf.mxu0
        %v847 = vadd.f32 0.0, %v846
        %v848 = vpop.f32.mrf.mxu0
        %v849 = vadd.f32 0.0, %v848
        %850 = vmatmul.bf16.gmra.mxu0 %v600
        %v851 = vpop.f32.mrf.mxu0
        %v852 = vadd.f32 0.0, %v851
        %v853 = vpop.f32.mrf.mxu0
        %v854 = vadd.f32 0.0, %v853
        %855 = vmatmul.bf16.gmra.mxu0 %v602
        %v856 = vpop.f32.mrf.mxu0
        %v857 = vadd.f32 0.0, %v856
        %v858 = vpop.f32.mrf.mxu0
        %v859 = vadd.f32 0.0, %v858
        %860 = vmatmul.bf16.gmra.mxu0 %v604
        %v861 = vpop.f32.mrf.mxu0
        %v862 = vadd.f32 0.0, %v861
        %v863 = vpop.f32.mrf.mxu0
        %v864 = vadd.f32 0.0, %v863
        %865 = vmatmul.bf16.gmra.mxu0 %v606
        %v866 = vpop.f32.mrf.mxu0
        %v867 = vadd.f32 0.0, %v866
        %v868 = vpop.f32.mrf.mxu0
        %v869 = vadd.f32 0.0, %v868
        %870 = vmatmul.bf16.gmra.mxu0 %v608
        %v871 = vpop.f32.mrf.mxu0
        %v872 = vadd.f32 0.0, %v871
        %v873 = vpop.f32.mrf.mxu0
        %v874 = vadd.f32 0.0, %v873
        %875 = vmatmul.bf16.gmra.mxu0 %v610
        %v876 = vpop.f32.mrf.mxu0
        %v877 = vadd.f32 0.0, %v876
        %v878 = vpop.f32.mrf.mxu0
        %v879 = vadd.f32 0.0, %v878
        %880 = vmatmul.bf16.gmra.mxu0 %v612
        %v881 = vpop.f32.mrf.mxu0
        %v882 = vadd.f32 0.0, %v881
        %v883 = vpop.f32.mrf.mxu0
        %v884 = vadd.f32 0.0, %v883
        %885 = vmatmul.bf16.gmra.mxu0 %v614
        %v886 = vpop.f32.mrf.mxu0
        %v887 = vadd.f32 0.0, %v886
        %v888 = vpop.f32.mrf.mxu0
        %v889 = vadd.f32 0.0, %v888
        %890 = vmatmul.bf16.gmra.mxu0 %v616
        %v891 = vpop.f32.mrf.mxu0
        %v892 = vadd.f32 0.0, %v891
        %v893 = vpop.f32.mrf.mxu0
        %v894 = vadd.f32 0.0, %v893
        %895 = vmatmul.bf16.gmra.mxu0 %v618
        %v896 = vpop.f32.mrf.mxu0
        %v897 = vadd.f32 0.0, %v896
        %v898 = vpop.f32.mrf.mxu0
        %v899 = vadd.f32 0.0, %v898
        %900 = vdwg.mxu0
        %901 = vmatpush.bf16.xpose.msra.mxu0 %v763
        %902 = vmatpush.bf16.xpose.msra.mxu0 %v761
        %903 = vmatpush.bf16.xpose.msra.mxu0 %v759
        %904 = vmatpush.bf16.xpose.msra.mxu0 %v757
        %905 = vmatpush.bf16.xpose.msra.mxu0 %v755
        %906 = vmatpush.bf16.xpose.msra.mxu0 %v753
        %907 = vmatpush.bf16.xpose.msra.mxu0 %v751
        %908 = vmatpush.bf16.xpose.msra.mxu0 %v749
        %909 = vmatmul.bf16.gmra.mxu0 %v589
        %v910 = vpop.f32.mrf.mxu0
        %v911 = vadd.f32 %v822, %v910
        %v912 = vpop.f32.mrf.mxu0
        %v913 = vadd.f32 %v824, %v912
        %914 = vmatmul.bf16.gmra.mxu0 %v591
        %v915 = vpop.f32.mrf.mxu0
        %v916 = vadd.f32 %v827, %v915
        %v917 = vpop.f32.mrf.mxu0
        %v918 = vadd.f32 %v829, %v917
        %919 = vmatmul.bf16.gmra.mxu0 %v593
        %v920 = vpop.f32.mrf.mxu0
        %v921 = vadd.f32 %v832, %v920
        %v922 = vpop.f32.mrf.mxu0
        %v923 = vadd.f32 %v834, %v922
        %924 = vmatmul.bf16.gmra.mxu0 %v595
        %v925 = vpop.f32.mrf.mxu0
        %v926 = vadd.f32 %v837, %v925
        %v927 = vpop.f32.mrf.mxu0
        %v928 = vadd.f32 %v839, %v927
        %929 = vmatmul.bf16.gmra.mxu0 %v597
        %v930 = vpop.f32.mrf.mxu0
        %v931 = vadd.f32 %v842, %v930
        %v932 = vpop.f32.mrf.mxu0
        %v933 = vadd.f32 %v844, %v932
        %934 = vmatmul.bf16.gmra.mxu0 %v599
        %v935 = vpop.f32.mrf.mxu0
        %v936 = vadd.f32 %v847, %v935
        %v937 = vpop.f32.mrf.mxu0
        %v938 = vadd.f32 %v849, %v937
        %939 = vmatmul.bf16.gmra.mxu0 %v601
        %v940 = vpop.f32.mrf.mxu0
        %v941 = vadd.f32 %v852, %v940
        %v942 = vpop.f32.mrf.mxu0
        %v943 = vadd.f32 %v854, %v942
        %944 = vmatmul.bf16.gmra.mxu0 %v603
        %v945 = vpop.f32.mrf.mxu0
        %v946 = vadd.f32 %v857, %v945
        %v947 = vpop.f32.mrf.mxu0
        %v948 = vadd.f32 %v859, %v947
        %949 = vmatmul.bf16.gmra.mxu0 %v605
        %v950 = vpop.f32.mrf.mxu0
        %v951 = vadd.f32 %v862, %v950
        %v952 = vpop.f32.mrf.mxu0
        %v953 = vadd.f32 %v864, %v952
        %954 = vmatmul.bf16.gmra.mxu0 %v607
        %v955 = vpop.f32.mrf.mxu0
        %v956 = vadd.f32 %v867, %v955
        %v957 = vpop.f32.mrf.mxu0
        %v958 = vadd.f32 %v869, %v957
        %959 = vmatmul.bf16.gmra.mxu0 %v609
        %v960 = vpop.f32.mrf.mxu0
        %v961 = vadd.f32 %v872, %v960
        %v962 = vpop.f32.mrf.mxu0
        %v963 = vadd.f32 %v874, %v962
        %964 = vmatmul.bf16.gmra.mxu0 %v611
        %v965 = vpop.f32.mrf.mxu0
        %v966 = vadd.f32 %v877, %v965
        %v967 = vpop.f32.mrf.mxu0
        %v968 = vadd.f32 %v879, %v967
        %969 = vmatmul.bf16.gmra.mxu0 %v613
        %v970 = vpop.f32.mrf.mxu0
        %v971 = vadd.f32 %v882, %v970
        %v972 = vpop.f32.mrf.mxu0
        %v973 = vadd.f32 %v884, %v972
        %974 = vmatmul.bf16.gmra.mxu0 %v615
        %v975 = vpop.f32.mrf.mxu0
        %v976 = vadd.f32 %v887, %v975
        %v977 = vpop.f32.mrf.mxu0
        %v978 = vadd.f32 %v889, %v977
        %979 = vmatmul.bf16.gmra.mxu0 %v617
        %v980 = vpop.f32.mrf.mxu0
        %v981 = vadd.f32 %v892, %v980
        %v982 = vpop.f32.mrf.mxu0
        %v983 = vadd.f32 %v894, %v982
        %984 = vmatmul.bf16.gmra.mxu0 %v619
        %v985 = vpop.f32.mrf.mxu0
        %v986 = vadd.f32 %v897, %v985
        %v987 = vpop.f32.mrf.mxu0
        %v988 = vadd.f32 %v899, %v987
        %989 = vdwg.mxu0
        %990 = vmatpush.bf16.xpose.msra.mxu0 %v778
        %991 = vmatpush.bf16.xpose.msra.mxu0 %v776
        %992 = vmatpush.bf16.xpose.msra.mxu0 %v774
        %993 = vmatpush.bf16.xpose.msra.mxu0 %v772
        %994 = vmatpush.bf16.xpose.msra.mxu0 %v770
        %995 = vmatpush.bf16.xpose.msra.mxu0 %v768
        %996 = vmatpush.bf16.xpose.msra.mxu0 %v766
        %997 = vmatpush.bf16.xpose.msra.mxu0 %v764
        %998 = vmatmul.bf16.gmra.mxu0 %v588
        %v999 = vpop.f32.mrf.mxu0
        %v1000 = vadd.f32 0.0, %v999
        %v1001 = vpop.f32.mrf.mxu0
        %v1002 = vadd.f32 0.0, %v1001
        %1003 = vmatmul.bf16.gmra.mxu0 %v590
        %v1004 = vpop.f32.mrf.mxu0
        %v1005 = vadd.f32 0.0, %v1004
        %v1006 = vpop.f32.mrf.mxu0
        %v1007 = vadd.f32 0.0, %v1006
        %1008 = vmatmul.bf16.gmra.mxu0 %v592
        %v1009 = vpop.f32.mrf.mxu0
        %v1010 = vadd.f32 0.0, %v1009
        %v1011 = vpop.f32.mrf.mxu0
        %v1012 = vadd.f32 0.0, %v1011
        %1013 = vmatmul.bf16.gmra.mxu0 %v594
        %v1014 = vpop.f32.mrf.mxu0
        %v1015 = vadd.f32 0.0, %v1014
        %v1016 = vpop.f32.mrf.mxu0
        %v1017 = vadd.f32 0.0, %v1016
        %1018 = vmatmul.bf16.gmra.mxu0 %v596
        %v1019 = vpop.f32.mrf.mxu0
        %v1020 = vadd.f32 0.0, %v1019
        %v1021 = vpop.f32.mrf.mxu0
        %v1022 = vadd.f32 0.0, %v1021
        %1023 = vmatmul.bf16.gmra.mxu0 %v598
        %v1024 = vpop.f32.mrf.mxu0
        %v1025 = vadd.f32 0.0, %v1024
        %v1026 = vpop.f32.mrf.mxu0
        %v1027 = vadd.f32 0.0, %v1026
        %1028 = vmatmul.bf16.gmra.mxu0 %v600
        %v1029 = vpop.f32.mrf.mxu0
        %v1030 = vadd.f32 0.0, %v1029
        %v1031 = vpop.f32.mrf.mxu0
        %v1032 = vadd.f32 0.0, %v1031
        %1033 = vmatmul.bf16.gmra.mxu0 %v602
        %v1034 = vpop.f32.mrf.mxu0
        %v1035 = vadd.f32 0.0, %v1034
        %v1036 = vpop.f32.mrf.mxu0
        %v1037 = vadd.f32 0.0, %v1036
        %1038 = vmatmul.bf16.gmra.mxu0 %v604
        %v1039 = vpop.f32.mrf.mxu0
        %v1040 = vadd.f32 0.0, %v1039
        %v1041 = vpop.f32.mrf.mxu0
        %v1042 = vadd.f32 0.0, %v1041
        %1043 = vmatmul.bf16.gmra.mxu0 %v606
        %v1044 = vpop.f32.mrf.mxu0
        %v1045 = vadd.f32 0.0, %v1044
        %v1046 = vpop.f32.mrf.mxu0
        %v1047 = vadd.f32 0.0, %v1046
        %1048 = vmatmul.bf16.gmra.mxu0 %v608
        %v1049 = vpop.f32.mrf.mxu0
        %v1050 = vadd.f32 0.0, %v1049
        %v1051 = vpop.f32.mrf.mxu0
        %v1052 = vadd.f32 0.0, %v1051
        %1053 = vmatmul.bf16.gmra.mxu0 %v610
        %v1054 = vpop.f32.mrf.mxu0
        %v1055 = vadd.f32 0.0, %v1054
        %v1056 = vpop.f32.mrf.mxu0
        %v1057 = vadd.f32 0.0, %v1056
        %1058 = vmatmul.bf16.gmra.mxu0 %v612
        %v1059 = vpop.f32.mrf.mxu0
        %v1060 = vadd.f32 0.0, %v1059
        %v1061 = vpop.f32.mrf.mxu0
        %v1062 = vadd.f32 0.0, %v1061
        %1063 = vmatmul.bf16.gmra.mxu0 %v614
        %v1064 = vpop.f32.mrf.mxu0
        %v1065 = vadd.f32 0.0, %v1064
        %v1066 = vpop.f32.mrf.mxu0
        %v1067 = vadd.f32 0.0, %v1066
        %1068 = vmatmul.bf16.gmra.mxu0 %v616
        %v1069 = vpop.f32.mrf.mxu0
        %v1070 = vadd.f32 0.0, %v1069
        %v1071 = vpop.f32.mrf.mxu0
        %v1072 = vadd.f32 0.0, %v1071
        %1073 = vmatmul.bf16.gmra.mxu0 %v618
        %v1074 = vpop.f32.mrf.mxu0
        %v1075 = vadd.f32 0.0, %v1074
        %v1076 = vpop.f32.mrf.mxu0
        %v1077 = vadd.f32 0.0, %v1076
        %1078 = vdwg.mxu0
        %1079 = vmatpush.bf16.xpose.msra.mxu0 %v779
        %1080 = vmatpush.bf16.xpose.msra.mxu0 %v777
        %1081 = vmatpush.bf16.xpose.msra.mxu0 %v775
        %1082 = vmatpush.bf16.xpose.msra.mxu0 %v773
        %1083 = vmatpush.bf16.xpose.msra.mxu0 %v771
        %1084 = vmatpush.bf16.xpose.msra.mxu0 %v769
        %1085 = vmatpush.bf16.xpose.msra.mxu0 %v767
        %1086 = vmatpush.bf16.xpose.msra.mxu0 %v765
        %1087 = vmatmul.bf16.gmra.mxu0 %v589
        %v1088 = vpop.f32.mrf.mxu0
        %v1089 = vadd.f32 %v1000, %v1088
        %v1090 = vpop.f32.mrf.mxu0
        %v1091 = vadd.f32 %v1002, %v1090
        %1092 = vmatmul.bf16.gmra.mxu0 %v591
        %v1093 = vpop.f32.mrf.mxu0
        %v1094 = vadd.f32 %v1005, %v1093
        %v1095 = vpop.f32.mrf.mxu0
        %v1096 = vadd.f32 %v1007, %v1095
        %1097 = vmatmul.bf16.gmra.mxu0 %v593
        %v1098 = vpop.f32.mrf.mxu0
        %v1099 = vadd.f32 %v1010, %v1098
        %v1100 = vpop.f32.mrf.mxu0
        %v1101 = vadd.f32 %v1012, %v1100
        %1102 = vmatmul.bf16.gmra.mxu0 %v595
        %v1103 = vpop.f32.mrf.mxu0
        %v1104 = vadd.f32 %v1015, %v1103
        %v1105 = vpop.f32.mrf.mxu0
        %v1106 = vadd.f32 %v1017, %v1105
        %1107 = vmatmul.bf16.gmra.mxu0 %v597
        %v1108 = vpop.f32.mrf.mxu0
        %v1109 = vadd.f32 %v1020, %v1108
        %v1110 = vpop.f32.mrf.mxu0
        %v1111 = vadd.f32 %v1022, %v1110
        %1112 = vmatmul.bf16.gmra.mxu0 %v599
        %v1113 = vpop.f32.mrf.mxu0
        %v1114 = vadd.f32 %v1025, %v1113
        %v1115 = vpop.f32.mrf.mxu0
        %v1116 = vadd.f32 %v1027, %v1115
        %1117 = vmatmul.bf16.gmra.mxu0 %v601
        %v1118 = vpop.f32.mrf.mxu0
        %v1119 = vadd.f32 %v1030, %v1118
        %v1120 = vpop.f32.mrf.mxu0
        %v1121 = vadd.f32 %v1032, %v1120
        %1122 = vmatmul.bf16.gmra.mxu0 %v603
        %v1123 = vpop.f32.mrf.mxu0
        %v1124 = vadd.f32 %v1035, %v1123
        %v1125 = vpop.f32.mrf.mxu0
        %v1126 = vadd.f32 %v1037, %v1125
        %1127 = vmatmul.bf16.gmra.mxu0 %v605
        %v1128 = vpop.f32.mrf.mxu0
        %v1129 = vadd.f32 %v1040, %v1128
        %v1130 = vpop.f32.mrf.mxu0
        %v1131 = vadd.f32 %v1042, %v1130
        %1132 = vmatmul.bf16.gmra.mxu0 %v607
        %v1133 = vpop.f32.mrf.mxu0
        %v1134 = vadd.f32 %v1045, %v1133
        %v1135 = vpop.f32.mrf.mxu0
        %v1136 = vadd.f32 %v1047, %v1135
        %1137 = vmatmul.bf16.gmra.mxu0 %v609
        %v1138 = vpop.f32.mrf.mxu0
        %v1139 = vadd.f32 %v1050, %v1138
        %v1140 = vpop.f32.mrf.mxu0
        %v1141 = vadd.f32 %v1052, %v1140
        %1142 = vmatmul.bf16.gmra.mxu0 %v611
        %v1143 = vpop.f32.mrf.mxu0
        %v1144 = vadd.f32 %v1055, %v1143
        %v1145 = vpop.f32.mrf.mxu0
        %v1146 = vadd.f32 %v1057, %v1145
        %1147 = vmatmul.bf16.gmra.mxu0 %v613
        %v1148 = vpop.f32.mrf.mxu0
        %v1149 = vadd.f32 %v1060, %v1148
        %v1150 = vpop.f32.mrf.mxu0
        %v1151 = vadd.f32 %v1062, %v1150
        %1152 = vmatmul.bf16.gmra.mxu0 %v615
        %v1153 = vpop.f32.mrf.mxu0
        %v1154 = vadd.f32 %v1065, %v1153
        %v1155 = vpop.f32.mrf.mxu0
        %v1156 = vadd.f32 %v1067, %v1155
        %1157 = vmatmul.bf16.gmra.mxu0 %v617
        %v1158 = vpop.f32.mrf.mxu0
        %v1159 = vadd.f32 %v1070, %v1158
        %v1160 = vpop.f32.mrf.mxu0
        %v1161 = vadd.f32 %v1072, %v1160
        %1162 = vmatmul.bf16.gmra.mxu0 %v619
        %v1163 = vpop.f32.mrf.mxu0
        %v1164 = vadd.f32 %v1075, %v1163
        %v1165 = vpop.f32.mrf.mxu0
        %v1166 = vadd.f32 %v1077, %v1165
        %1167 = vdwg.mxu0
        %v1168 = vstv %s427
        %v1169 = vmul.f32 %v911, %v1168
        %v1170 = vmul.f32 %v1089, %v1168
        %v1171 = vmul.f32 %v913, %v1168
        %v1172 = vmul.f32 %v1091, %v1168
        %v1173 = vmul.f32 %v916, %v1168
        %v1174 = vmul.f32 %v1094, %v1168
        %v1175 = vmul.f32 %v918, %v1168
        %v1176 = vmul.f32 %v1096, %v1168
        %v1177 = vmul.f32 %v921, %v1168
        %v1178 = vmul.f32 %v1099, %v1168
        %v1179 = vmul.f32 %v923, %v1168
        %v1180 = vmul.f32 %v1101, %v1168
        %v1181 = vmul.f32 %v926, %v1168
        %v1182 = vmul.f32 %v1104, %v1168
        %v1183 = vmul.f32 %v928, %v1168
        %v1184 = vmul.f32 %v1106, %v1168
        %v1185 = vmul.f32 %v931, %v1168
        %v1186 = vmul.f32 %v1109, %v1168
        %v1187 = vmul.f32 %v933, %v1168
        %v1188 = vmul.f32 %v1111, %v1168
        %v1189 = vmul.f32 %v936, %v1168
        %v1190 = vmul.f32 %v1114, %v1168
        %v1191 = vmul.f32 %v938, %v1168
        %v1192 = vmul.f32 %v1116, %v1168
        %v1193 = vmul.f32 %v941, %v1168
        %v1194 = vmul.f32 %v1119, %v1168
        %v1195 = vmul.f32 %v943, %v1168
        %v1196 = vmul.f32 %v1121, %v1168
        %v1197 = vmul.f32 %v946, %v1168
        %v1198 = vmul.f32 %v1124, %v1168
        %v1199 = vmul.f32 %v948, %v1168
        %v1200 = vmul.f32 %v1126, %v1168
        %v1201 = vmul.f32 %v951, %v1168
        %v1202 = vmul.f32 %v1129, %v1168
        %v1203 = vmul.f32 %v953, %v1168
        %v1204 = vmul.f32 %v1131, %v1168
        %v1205 = vmul.f32 %v956, %v1168
        %v1206 = vmul.f32 %v1134, %v1168
        %v1207 = vmul.f32 %v958, %v1168
        %v1208 = vmul.f32 %v1136, %v1168
        %v1209 = vmul.f32 %v961, %v1168
        %v1210 = vmul.f32 %v1139, %v1168
        %v1211 = vmul.f32 %v963, %v1168
        %v1212 = vmul.f32 %v1141, %v1168
        %v1213 = vmul.f32 %v966, %v1168
        %v1214 = vmul.f32 %v1144, %v1168
        %v1215 = vmul.f32 %v968, %v1168
        %v1216 = vmul.f32 %v1146, %v1168
        %v1217 = vmul.f32 %v971, %v1168
        %v1218 = vmul.f32 %v1149, %v1168
        %v1219 = vmul.f32 %v973, %v1168
        %v1220 = vmul.f32 %v1151, %v1168
        %v1221 = vmul.f32 %v976, %v1168
        %v1222 = vmul.f32 %v1154, %v1168
        %v1223 = vmul.f32 %v978, %v1168
        %v1224 = vmul.f32 %v1156, %v1168
        %v1225 = vmul.f32 %v981, %v1168
        %v1226 = vmul.f32 %v1159, %v1168
        %v1227 = vmul.f32 %v983, %v1168
        %v1228 = vmul.f32 %v1161, %v1168
        %v1229 = vmul.f32 %v986, %v1168
        %v1230 = vmul.f32 %v1164, %v1168
        %v1231 = vmul.f32 %v988, %v1168
        %v1232 = vmul.f32 %v1166, %v1168
        %1233 = vst [vmem:[%s418] sm:$0xff] %v1169
        %1234 = vst [vmem:[%s418 + $0x8] sm:$0xff] %v1170
        %1235 = vst [vmem:[%s418 + $0x10] sm:$0xff] %v1171
        %1236 = vst [vmem:[%s418 + $0x18] sm:$0xff] %v1172
        %1237 = vst [vmem:[%s418 + $0x20] sm:$0xff] %v1173
        %1238 = vst [vmem:[%s418 + $0x28] sm:$0xff] %v1174
        %1239 = vst [vmem:[%s418 + $0x30] sm:$0xff] %v1175
        %1240 = vst [vmem:[%s418 + $0x38] sm:$0xff] %v1176
        %1241 = vst [vmem:[%s418 + $0x40] sm:$0xff] %v1177
        %1242 = vst [vmem:[%s418 + $0x48] sm:$0xff] %v1178
        %1243 = vst [vmem:[%s418 + $0x50] sm:$0xff] %v1179
        %1244 = vst [vmem:[%s418 + $0x58] sm:$0xff] %v1180
        %1245 = vst [vmem:[%s418 + $0x60] sm:$0xff] %v1181
        %1246 = vst [vmem:[%s418 + $0x68] sm:$0xff] %v1182
        %1247 = vst [vmem:[%s418 + $0x70] sm:$0xff] %v1183
        %1248 = vst [vmem:[%s418 + $0x78] sm:$0xff] %v1184
        %1249 = vst [vmem:[%s418 + $0x80] sm:$0xff] %v1185
        %1250 = vst [vmem:[%s418 + $0x88] sm:$0xff] %v1186
        %1251 = vst [vmem:[%s418 + $0x90] sm:$0xff] %v1187
        %1252 = vst [vmem:[%s418 + $0x98] sm:$0xff] %v1188
        %1253 = vst [vmem:[%s418 + $0xa0] sm:$0xff] %v1189
        %1254 = vst [vmem:[%s418 + $0xa8] sm:$0xff] %v1190
        %1255 = vst [vmem:[%s418 + $0xb0] sm:$0xff] %v1191
        %1256 = vst [vmem:[%s418 + $0xb8] sm:$0xff] %v1192
        %1257 = vst [vmem:[%s418 + $0xc0] sm:$0xff] %v1193
        %1258 = vst [vmem:[%s418 + $0xc8] sm:$0xff] %v1194
        %1259 = vst [vmem:[%s418 + $0xd0] sm:$0xff] %v1195
        %1260 = vst [vmem:[%s418 + $0xd8] sm:$0xff] %v1196
        %1261 = vst [vmem:[%s418 + $0xe0] sm:$0xff] %v1197
        %1262 = vst [vmem:[%s418 + $0xe8] sm:$0xff] %v1198
        %1263 = vst [vmem:[%s418 + $0xf0] sm:$0xff] %v1199
        %1264 = vst [vmem:[%s418 + $0xf8] sm:$0xff] %v1200
        %1265 = vst [vmem:[%s418 + $0x100] sm:$0xff] %v1201
        %1266 = vst [vmem:[%s418 + $0x108] sm:$0xff] %v1202
        %1267 = vst [vmem:[%s418 + $0x110] sm:$0xff] %v1203
        %1268 = vst [vmem:[%s418 + $0x118] sm:$0xff] %v1204
        %1269 = vst [vmem:[%s418 + $0x120] sm:$0xff] %v1205
        %1270 = vst [vmem:[%s418 + $0x128] sm:$0xff] %v1206
        %1271 = vst [vmem:[%s418 + $0x130] sm:$0xff] %v1207
        %1272 = vst [vmem:[%s418 + $0x138] sm:$0xff] %v1208
        %1273 = vst [vmem:[%s418 + $0x140] sm:$0xff] %v1209
        %1274 = vst [vmem:[%s418 + $0x148] sm:$0xff] %v1210
        %1275 = vst [vmem:[%s418 + $0x150] sm:$0xff] %v1211
        %1276 = vst [vmem:[%s418 + $0x158] sm:$0xff] %v1212
        %1277 = vst [vmem:[%s418 + $0x160] sm:$0xff] %v1213
        %1278 = vst [vmem:[%s418 + $0x168] sm:$0xff] %v1214
        %1279 = vst [vmem:[%s418 + $0x170] sm:$0xff] %v1215
        %1280 = vst [vmem:[%s418 + $0x178] sm:$0xff] %v1216
        %1281 = vst [vmem:[%s418 + $0x180] sm:$0xff] %v1217
        %1282 = vst [vmem:[%s418 + $0x188] sm:$0xff] %v1218
        %1283 = vst [vmem:[%s418 + $0x190] sm:$0xff] %v1219
        %1284 = vst [vmem:[%s418 + $0x198] sm:$0xff] %v1220
        %1285 = vst [vmem:[%s418 + $0x1a0] sm:$0xff] %v1221
        %1286 = vst [vmem:[%s418 + $0x1a8] sm:$0xff] %v1222
        %1287 = vst [vmem:[%s418 + $0x1b0] sm:$0xff] %v1223
        %1288 = vst [vmem:[%s418 + $0x1b8] sm:$0xff] %v1224
        %1289 = vst [vmem:[%s418 + $0x1c0] sm:$0xff] %v1225
        %1290 = vst [vmem:[%s418 + $0x1c8] sm:$0xff] %v1226
        %1291 = vst [vmem:[%s418 + $0x1d0] sm:$0xff] %v1227
        %1292 = vst [vmem:[%s418 + $0x1d8] sm:$0xff] %v1228
        %1293 = vst [vmem:[%s418 + $0x1e0] sm:$0xff] %v1229
        %1294 = vst [vmem:[%s418 + $0x1e8] sm:$0xff] %v1230
        %1295 = vst [vmem:[%s418 + $0x1f0] sm:$0xff] %v1231
        %1296 = vst [vmem:[%s418 + $0x1f8] sm:$0xff] %v1232
        %p1297 = scmp.eq.s32.totalorder %s36, 0
        %p1298 = scmp.eq.s32.totalorder %s37, 0
        %p1299 = pnand %p1297, %p1298
        %p1300 = pneg %p1299
        // Predicated region
        $region57: #{tpu_custom_call.1} parent=39 // pred_check
          _
        $region58: #{tpu_custom_call.1} parent=39 // pred_check_branch
          %1302 = sbr.rel (%p1299) target = $region60
        $region59: #{tpu_custom_call.1} parent=39 // pred_region
          %vm1303 = vcmask 0
          %1304 = vst.msk [vmem:[#allocation18] sm:$0x1] %vm1303, 0.0
          %1305 = vst.msk [vmem:[#allocation4] sm:$0x1] %vm1303, 0.0
          %1306 = vst.msk [vmem:[#allocation5] sm:$0x1] %vm1303, 0.0
          %1307 = vst.msk [vmem:[#allocation6] sm:$0x1] %vm1303, 0.0
          %1308 = vst.msk [vmem:[#allocation7] sm:$0x1] %vm1303, 0.0
          %1309 = vst.msk [vmem:[#allocation8] sm:$0x1] %vm1303, 0.0
        $region60: #{tpu_custom_call.1} parent=39 // pred_fallthru
          _
        %v1310 = vsub.f32 %v1169, %v1168
        %v1311 = vsub.f32 %v1170, %v1168
        %v1312 = vsub.f32 %v1171, %v1168
        %v1313 = vsub.f32 %v1172, %v1168
        %v1314 = vsub.f32 %v1173, %v1168
        %v1315 = vsub.f32 %v1174, %v1168
        %v1316 = vsub.f32 %v1175, %v1168
        %v1317 = vsub.f32 %v1176, %v1168
        %v1318 = vsub.f32 %v1177, %v1168
        %v1319 = vsub.f32 %v1178, %v1168
        %v1320 = vsub.f32 %v1179, %v1168
        %v1321 = vsub.f32 %v1180, %v1168
        %v1322 = vsub.f32 %v1181, %v1168
        %v1323 = vsub.f32 %v1182, %v1168
        %v1324 = vsub.f32 %v1183, %v1168
        %v1325 = vsub.f32 %v1184, %v1168
        %v1326 = vsub.f32 %v1185, %v1168
        %v1327 = vsub.f32 %v1186, %v1168
        %v1328 = vsub.f32 %v1187, %v1168
        %v1329 = vsub.f32 %v1188, %v1168
        %v1330 = vsub.f32 %v1189, %v1168
        %v1331 = vsub.f32 %v1190, %v1168
        %v1332 = vsub.f32 %v1191, %v1168
        %v1333 = vsub.f32 %v1192, %v1168
        %v1334 = vsub.f32 %v1193, %v1168
        %v1335 = vsub.f32 %v1194, %v1168
        %v1336 = vsub.f32 %v1195, %v1168
        %v1337 = vsub.f32 %v1196, %v1168
        %v1338 = vsub.f32 %v1197, %v1168
        %v1339 = vsub.f32 %v1198, %v1168
        %v1340 = vsub.f32 %v1199, %v1168
        %v1341 = vsub.f32 %v1200, %v1168
        %v1342 = vsub.f32 %v1201, %v1168
        %v1343 = vsub.f32 %v1202, %v1168
        %v1344 = vsub.f32 %v1203, %v1168
        %v1345 = vsub.f32 %v1204, %v1168
        %v1346 = vsub.f32 %v1205, %v1168
        %v1347 = vsub.f32 %v1206, %v1168
        %v1348 = vsub.f32 %v1207, %v1168
        %v1349 = vsub.f32 %v1208, %v1168
        %v1350 = vsub.f32 %v1209, %v1168
        %v1351 = vsub.f32 %v1210, %v1168
        %v1352 = vsub.f32 %v1211, %v1168
        %v1353 = vsub.f32 %v1212, %v1168
        %v1354 = vsub.f32 %v1213, %v1168
        %v1355 = vsub.f32 %v1214, %v1168
        %v1356 = vsub.f32 %v1215, %v1168
        %v1357 = vsub.f32 %v1216, %v1168
        %v1358 = vsub.f32 %v1217, %v1168
        %v1359 = vsub.f32 %v1218, %v1168
        %v1360 = vsub.f32 %v1219, %v1168
        %v1361 = vsub.f32 %v1220, %v1168
        %v1362 = vsub.f32 %v1221, %v1168
        %v1363 = vsub.f32 %v1222, %v1168
        %v1364 = vsub.f32 %v1223, %v1168
        %v1365 = vsub.f32 %v1224, %v1168
        %v1366 = vsub.f32 %v1225, %v1168
        %v1367 = vsub.f32 %v1226, %v1168
        %v1368 = vsub.f32 %v1227, %v1168
        %v1369 = vsub.f32 %v1228, %v1168
        %v1370 = vsub.f32 %v1229, %v1168
        %v1371 = vsub.f32 %v1230, %v1168
        %v1372 = vsub.f32 %v1231, %v1168
        %v1373 = vsub.f32 %v1232, %v1168
        %v1374 = vmul.f32 %v1310, 1.442695
        %v1375 = vpow.pop %v1374
        %v1376 = vmul.f32 %v1311, 1.442695
        %v1377 = vpow.pop %v1376
        %v1378 = vmul.f32 %v1312, 1.442695
        %v1379 = vpow.pop %v1378
        %v1380 = vmul.f32 %v1313, 1.442695
        %v1381 = vpow.pop %v1380
        %v1382 = vmul.f32 %v1314, 1.442695
        %v1383 = vpow.pop %v1382
        %v1384 = vmul.f32 %v1315, 1.442695
        %v1385 = vpow.pop %v1384
        %v1386 = vmul.f32 %v1316, 1.442695
        %v1387 = vpow.pop %v1386
        %v1388 = vmul.f32 %v1317, 1.442695
        %v1389 = vpow.pop %v1388
        %v1390 = vmul.f32 %v1318, 1.442695
        %v1391 = vpow.pop %v1390
        %v1392 = vmul.f32 %v1319, 1.442695
        %v1393 = vpow.pop %v1392
        %v1394 = vmul.f32 %v1320, 1.442695
        %v1395 = vpow.pop %v1394
        %v1396 = vmul.f32 %v1321, 1.442695
        %v1397 = vpow.pop %v1396
        %v1398 = vmul.f32 %v1322, 1.442695
        %v1399 = vpow.pop %v1398
        %v1400 = vmul.f32 %v1323, 1.442695
        %v1401 = vpow.pop %v1400
        %v1402 = vmul.f32 %v1324, 1.442695
        %v1403 = vpow.pop %v1402
        %v1404 = vmul.f32 %v1325, 1.442695
        %v1405 = vpow.pop %v1404
        %v1406 = vmul.f32 %v1326, 1.442695
        %v1407 = vpow.pop %v1406
        %v1408 = vmul.f32 %v1327, 1.442695
        %v1409 = vpow.pop %v1408
        %v1410 = vmul.f32 %v1328, 1.442695
        %v1411 = vpow.pop %v1410
        %v1412 = vmul.f32 %v1329, 1.442695
        %v1413 = vpow.pop %v1412
        %v1414 = vmul.f32 %v1330, 1.442695
        %v1415 = vpow.pop %v1414
        %v1416 = vmul.f32 %v1331, 1.442695
        %v1417 = vpow.pop %v1416
        %v1418 = vmul.f32 %v1332, 1.442695
        %v1419 = vpow.pop %v1418
        %v1420 = vmul.f32 %v1333, 1.442695
        %v1421 = vpow.pop %v1420
        %v1422 = vmul.f32 %v1334, 1.442695
        %v1423 = vpow.pop %v1422
        %v1424 = vmul.f32 %v1335, 1.442695
        %v1425 = vpow.pop %v1424
        %v1426 = vmul.f32 %v1336, 1.442695
        %v1427 = vpow.pop %v1426
        %v1428 = vmul.f32 %v1337, 1.442695
        %v1429 = vpow.pop %v1428
        %v1430 = vmul.f32 %v1338, 1.442695
        %v1431 = vpow.pop %v1430
        %v1432 = vmul.f32 %v1339, 1.442695
        %v1433 = vpow.pop %v1432
        %v1434 = vmul.f32 %v1340, 1.442695
        %v1435 = vpow.pop %v1434
        %v1436 = vmul.f32 %v1341, 1.442695
        %v1437 = vpow.pop %v1436
        %v1438 = vmul.f32 %v1342, 1.442695
        %v1439 = vpow.pop %v1438
        %v1440 = vmul.f32 %v1343, 1.442695
        %v1441 = vpow.pop %v1440
        %v1442 = vmul.f32 %v1344, 1.442695
        %v1443 = vpow.pop %v1442
        %v1444 = vmul.f32 %v1345, 1.442695
        %v1445 = vpow.pop %v1444
        %v1446 = vmul.f32 %v1346, 1.442695
        %v1447 = vpow.pop %v1446
        %v1448 = vmul.f32 %v1347, 1.442695
        %v1449 = vpow.pop %v1448
        %v1450 = vmul.f32 %v1348, 1.442695
        %v1451 = vpow.pop %v1450
        %v1452 = vmul.f32 %v1349, 1.442695
        %v1453 = vpow.pop %v1452
        %v1454 = vmul.f32 %v1350, 1.442695
        %v1455 = vpow.pop %v1454
        %v1456 = vmul.f32 %v1351, 1.442695
        %v1457 = vpow.pop %v1456
        %v1458 = vmul.f32 %v1352, 1.442695
        %v1459 = vpow.pop %v1458
        %v1460 = vmul.f32 %v1353, 1.442695
        %v1461 = vpow.pop %v1460
        %v1462 = vmul.f32 %v1354, 1.442695
        %v1463 = vpow.pop %v1462
        %v1464 = vmul.f32 %v1355, 1.442695
        %v1465 = vpow.pop %v1464
        %v1466 = vmul.f32 %v1356, 1.442695
        %v1467 = vpow.pop %v1466
        %v1468 = vmul.f32 %v1357, 1.442695
        %v1469 = vpow.pop %v1468
        %v1470 = vmul.f32 %v1358, 1.442695
        %v1471 = vpow.pop %v1470
        %v1472 = vmul.f32 %v1359, 1.442695
        %v1473 = vpow.pop %v1472
        %v1474 = vmul.f32 %v1360, 1.442695
        %v1475 = vpow.pop %v1474
        %v1476 = vmul.f32 %v1361, 1.442695
        %v1477 = vpow.pop %v1476
        %v1478 = vmul.f32 %v1362, 1.442695
        %v1479 = vpow.pop %v1478
        %v1480 = vmul.f32 %v1363, 1.442695
        %v1481 = vpow.pop %v1480
        %v1482 = vmul.f32 %v1364, 1.442695
        %v1483 = vpow.pop %v1482
        %v1484 = vmul.f32 %v1365, 1.442695
        %v1485 = vpow.pop %v1484
        %v1486 = vmul.f32 %v1366, 1.442695
        %v1487 = vpow.pop %v1486
        %v1488 = vmul.f32 %v1367, 1.442695
        %v1489 = vpow.pop %v1488
        %v1490 = vmul.f32 %v1368, 1.442695
        %v1491 = vpow.pop %v1490
        %v1492 = vmul.f32 %v1369, 1.442695
        %v1493 = vpow.pop %v1492
        %v1494 = vmul.f32 %v1370, 1.442695
        %v1495 = vpow.pop %v1494
        %v1496 = vmul.f32 %v1371, 1.442695
        %v1497 = vpow.pop %v1496
        %v1498 = vmul.f32 %v1372, 1.442695
        %v1499 = vpow.pop %v1498
        %v1500 = vmul.f32 %v1373, 1.442695
        %v1501 = vpow.pop %v1500
        %v1502 = vadd.f32 %v1375, %v1377
        %1503 = vadd.xlane.f32.xlu0 %v1502
        %v1504 = vpop.xlane.xlu0 %1503
        %v1505 = vadd.f32 %v1379, %v1381
        %1506 = vadd.xlane.f32.xlu0 %v1505
        %v1507 = vpop.xlane.xlu0 %1506
        %v1508 = vadd.f32 %v1383, %v1385
        %1509 = vadd.xlane.f32.xlu0 %v1508
        %v1510 = vpop.xlane.xlu0 %1509
        %v1511 = vadd.f32 %v1387, %v1389
        %1512 = vadd.xlane.f32.xlu0 %v1511
        %v1513 = vpop.xlane.xlu0 %1512
        %v1514 = vadd.f32 %v1391, %v1393
        %1515 = vadd.xlane.f32.xlu0 %v1514
        %v1516 = vpop.xlane.xlu0 %1515
        %v1517 = vadd.f32 %v1395, %v1397
        %1518 = vadd.xlane.f32.xlu0 %v1517
        %v1519 = vpop.xlane.xlu0 %1518
        %v1520 = vadd.f32 %v1399, %v1401
        %1521 = vadd.xlane.f32.xlu0 %v1520
        %v1522 = vpop.xlane.xlu0 %1521
        %v1523 = vadd.f32 %v1403, %v1405
        %1524 = vadd.xlane.f32.xlu0 %v1523
        %v1525 = vpop.xlane.xlu0 %1524
        %v1526 = vadd.f32 %v1407, %v1409
        %1527 = vadd.xlane.f32.xlu0 %v1526
        %v1528 = vpop.xlane.xlu0 %1527
        %v1529 = vadd.f32 %v1411, %v1413
        %1530 = vadd.xlane.f32.xlu0 %v1529
        %v1531 = vpop.xlane.xlu0 %1530
        %v1532 = vadd.f32 %v1415, %v1417
        %1533 = vadd.xlane.f32.xlu0 %v1532
        %v1534 = vpop.xlane.xlu0 %1533
        %v1535 = vadd.f32 %v1419, %v1421
        %1536 = vadd.xlane.f32.xlu0 %v1535
        %v1537 = vpop.xlane.xlu0 %1536
        %v1538 = vadd.f32 %v1423, %v1425
        %1539 = vadd.xlane.f32.xlu0 %v1538
        %v1540 = vpop.xlane.xlu0 %1539
        %v1541 = vadd.f32 %v1427, %v1429
        %1542 = vadd.xlane.f32.xlu0 %v1541
        %v1543 = vpop.xlane.xlu0 %1542
        %v1544 = vadd.f32 %v1431, %v1433
        %1545 = vadd.xlane.f32.xlu0 %v1544
        %v1546 = vpop.xlane.xlu0 %1545
        %v1547 = vadd.f32 %v1435, %v1437
        %1548 = vadd.xlane.f32.xlu0 %v1547
        %v1549 = vpop.xlane.xlu0 %1548
        %v1550 = vadd.f32 %v1439, %v1441
        %1551 = vadd.xlane.f32.xlu0 %v1550
        %v1552 = vpop.xlane.xlu0 %1551
        %v1553 = vadd.f32 %v1443, %v1445
        %1554 = vadd.xlane.f32.xlu0 %v1553
        %v1555 = vpop.xlane.xlu0 %1554
        %v1556 = vadd.f32 %v1447, %v1449
        %1557 = vadd.xlane.f32.xlu0 %v1556
        %v1558 = vpop.xlane.xlu0 %1557
        %v1559 = vadd.f32 %v1451, %v1453
        %1560 = vadd.xlane.f32.xlu0 %v1559
        %v1561 = vpop.xlane.xlu0 %1560
        %v1562 = vadd.f32 %v1455, %v1457
        %1563 = vadd.xlane.f32.xlu0 %v1562
        %v1564 = vpop.xlane.xlu0 %1563
        %v1565 = vadd.f32 %v1459, %v1461
        %1566 = vadd.xlane.f32.xlu0 %v1565
        %v1567 = vpop.xlane.xlu0 %1566
        %v1568 = vadd.f32 %v1463, %v1465
        %1569 = vadd.xlane.f32.xlu0 %v1568
        %v1570 = vpop.xlane.xlu0 %1569
        %v1571 = vadd.f32 %v1467, %v1469
        %1572 = vadd.xlane.f32.xlu0 %v1571
        %v1573 = vpop.xlane.xlu0 %1572
        %v1574 = vadd.f32 %v1471, %v1473
        %1575 = vadd.xlane.f32.xlu0 %v1574
        %v1576 = vpop.xlane.xlu0 %1575
        %v1577 = vadd.f32 %v1475, %v1477
        %1578 = vadd.xlane.f32.xlu0 %v1577
        %v1579 = vpop.xlane.xlu0 %1578
        %v1580 = vadd.f32 %v1479, %v1481
        %1581 = vadd.xlane.f32.xlu0 %v1580
        %v1582 = vpop.xlane.xlu0 %1581
        %v1583 = vadd.f32 %v1483, %v1485
        %1584 = vadd.xlane.f32.xlu0 %v1583
        %v1585 = vpop.xlane.xlu0 %1584
        %v1586 = vadd.f32 %v1487, %v1489
        %1587 = vadd.xlane.f32.xlu0 %v1586
        %v1588 = vpop.xlane.xlu0 %1587
        %v1589 = vadd.f32 %v1491, %v1493
        %1590 = vadd.xlane.f32.xlu0 %v1589
        %v1591 = vpop.xlane.xlu0 %1590
        %v1592 = vadd.f32 %v1495, %v1497
        %1593 = vadd.xlane.f32.xlu0 %v1592
        %v1594 = vpop.xlane.xlu0 %1593
        %v1595 = vadd.f32 %v1499, %v1501
        %1596 = vadd.xlane.f32.xlu0 %v1595
        %v1597 = vpop.xlane.xlu0 %1596
        %v1598 = vadd.f32 %v1375, %v1379
        %v1599 = vadd.f32 %v1598, %v1383
        %v1600 = vadd.f32 %v1599, %v1387
        %v1601 = vadd.f32 %v1600, %v1391
        %v1602 = vadd.f32 %v1601, %v1395
        %v1603 = vadd.f32 %v1602, %v1399
        %v1604 = vadd.f32 %v1603, %v1403
        %v1605 = vadd.f32 %v1604, %v1407
        %v1606 = vadd.f32 %v1605, %v1411
        %v1607 = vadd.f32 %v1606, %v1415
        %v1608 = vadd.f32 %v1607, %v1419
        %v1609 = vadd.f32 %v1608, %v1423
        %v1610 = vadd.f32 %v1609, %v1427
        %v1611 = vadd.f32 %v1610, %v1431
        %v1612 = vadd.f32 %v1611, %v1435
        %v1613 = vadd.f32 %v1612, %v1439
        %v1614 = vadd.f32 %v1613, %v1443
        %v1615 = vadd.f32 %v1614, %v1447
        %v1616 = vadd.f32 %v1615, %v1451
        %v1617 = vadd.f32 %v1616, %v1455
        %v1618 = vadd.f32 %v1617, %v1459
        %v1619 = vadd.f32 %v1618, %v1463
        %v1620 = vadd.f32 %v1619, %v1467
        %v1621 = vadd.f32 %v1620, %v1471
        %v1622 = vadd.f32 %v1621, %v1475
        %v1623 = vadd.f32 %v1622, %v1479
        %v1624 = vadd.f32 %v1623, %v1483
        %v1625 = vadd.f32 %v1624, %v1487
        %v1626 = vadd.f32 %v1625, %v1491
        %v1627 = vadd.f32 %v1626, %v1495
        %v1628 = vadd.f32 %v1627, %v1499
        %v1629 = vrot.slane %v1628, 4
        %v1630 = vadd.f32 %v1628, %v1629
        %v1631 = vrot.slane %v1630, 2
        %v1632 = vadd.f32 %v1630, %v1631
        %v1633 = vrot.slane %v1632, 1
        %v1634 = vadd.f32 %v1632, %v1633
        %v1635 = vadd.f32 %v1377, %v1381
        %v1636 = vadd.f32 %v1635, %v1385
        %v1637 = vadd.f32 %v1636, %v1389
        %v1638 = vadd.f32 %v1637, %v1393
        %v1639 = vadd.f32 %v1638, %v1397
        %v1640 = vadd.f32 %v1639, %v1401
        %v1641 = vadd.f32 %v1640, %v1405
        %v1642 = vadd.f32 %v1641, %v1409
        %v1643 = vadd.f32 %v1642, %v1413
        %v1644 = vadd.f32 %v1643, %v1417
        %v1645 = vadd.f32 %v1644, %v1421
        %v1646 = vadd.f32 %v1645, %v1425
        %v1647 = vadd.f32 %v1646, %v1429
        %v1648 = vadd.f32 %v1647, %v1433
        %v1649 = vadd.f32 %v1648, %v1437
        %v1650 = vadd.f32 %v1649, %v1441
        %v1651 = vadd.f32 %v1650, %v1445
        %v1652 = vadd.f32 %v1651, %v1449
        %v1653 = vadd.f32 %v1652, %v1453
        %v1654 = vadd.f32 %v1653, %v1457
        %v1655 = vadd.f32 %v1654, %v1461
        %v1656 = vadd.f32 %v1655, %v1465
        %v1657 = vadd.f32 %v1656, %v1469
        %v1658 = vadd.f32 %v1657, %v1473
        %v1659 = vadd.f32 %v1658, %v1477
        %v1660 = vadd.f32 %v1659, %v1481
        %v1661 = vadd.f32 %v1660, %v1485
        %v1662 = vadd.f32 %v1661, %v1489
        %v1663 = vadd.f32 %v1662, %v1493
        %v1664 = vadd.f32 %v1663, %v1497
        %v1665 = vadd.f32 %v1664, %v1501
        %v1666 = vrot.slane %v1665, 4
        %v1667 = vadd.f32 %v1665, %v1666
        %v1668 = vrot.slane %v1667, 2
        %v1669 = vadd.f32 %v1667, %v1668
        %v1670 = vrot.slane %v1669, 1
        %v1671 = vadd.f32 %v1669, %v1670
        // Predicated region
        $region61: #{tpu_custom_call.1} parent=39 // pred_check
          %p1672 = pneg %p1298
        $region62: #{tpu_custom_call.1} parent=39 // pred_check_branch
          %1674 = sbr.rel (%p1672) target = $region64
        $region63: #{tpu_custom_call.1} parent=39 // pred_region
          %vm1675 = vcmask 7168
          %1676 = vst.msk [vmem:[#allocation2] sm:$0xff] %vm1675, %v1504
          %1677 = vst.msk [vmem:[#allocation2 + $0x8] sm:$0xff] %vm1675, %v1507
          %1678 = vst.msk [vmem:[#allocation2 + $0x10] sm:$0xff] %vm1675, %v1510
          %1679 = vst.msk [vmem:[#allocation2 + $0x18] sm:$0xff] %vm1675, %v1513
          %1680 = vst.msk [vmem:[#allocation2 + $0x20] sm:$0xff] %vm1675, %v1516
          %1681 = vst.msk [vmem:[#allocation2 + $0x28] sm:$0xff] %vm1675, %v1519
          %1682 = vst.msk [vmem:[#allocation2 + $0x30] sm:$0xff] %vm1675, %v1522
          %1683 = vst.msk [vmem:[#allocation2 + $0x38] sm:$0xff] %vm1675, %v1525
          %1684 = vst.msk [vmem:[#allocation2 + $0x40] sm:$0xff] %vm1675, %v1528
          %1685 = vst.msk [vmem:[#allocation2 + $0x48] sm:$0xff] %vm1675, %v1531
          %1686 = vst.msk [vmem:[#allocation2 + $0x50] sm:$0xff] %vm1675, %v1534
          %1687 = vst.msk [vmem:[#allocation2 + $0x58] sm:$0xff] %vm1675, %v1537
          %1688 = vst.msk [vmem:[#allocation2 + $0x60] sm:$0xff] %vm1675, %v1540
          %1689 = vst.msk [vmem:[#allocation2 + $0x68] sm:$0xff] %vm1675, %v1543
          %1690 = vst.msk [vmem:[#allocation2 + $0x70] sm:$0xff] %vm1675, %v1546
          %1691 = vst.msk [vmem:[#allocation2 + $0x78] sm:$0xff] %vm1675, %v1549
          %1692 = vst.msk [vmem:[#allocation2 + $0x80] sm:$0xff] %vm1675, %v1552
          %1693 = vst.msk [vmem:[#allocation2 + $0x88] sm:$0xff] %vm1675, %v1555
          %1694 = vst.msk [vmem:[#allocation2 + $0x90] sm:$0xff] %vm1675, %v1558
          %1695 = vst.msk [vmem:[#allocation2 + $0x98] sm:$0xff] %vm1675, %v1561
          %1696 = vst.msk [vmem:[#allocation2 + $0xa0] sm:$0xff] %vm1675, %v1564
          %1697 = vst.msk [vmem:[#allocation2 + $0xa8] sm:$0xff] %vm1675, %v1567
          %1698 = vst.msk [vmem:[#allocation2 + $0xb0] sm:$0xff] %vm1675, %v1570
          %1699 = vst.msk [vmem:[#allocation2 + $0xb8] sm:$0xff] %vm1675, %v1573
          %1700 = vst.msk [vmem:[#allocation2 + $0xc0] sm:$0xff] %vm1675, %v1576
          %1701 = vst.msk [vmem:[#allocation2 + $0xc8] sm:$0xff] %vm1675, %v1579
          %1702 = vst.msk [vmem:[#allocation2 + $0xd0] sm:$0xff] %vm1675, %v1582
          %1703 = vst.msk [vmem:[#allocation2 + $0xd8] sm:$0xff] %vm1675, %v1585
          %1704 = vst.msk [vmem:[#allocation2 + $0xe0] sm:$0xff] %vm1675, %v1588
          %1705 = vst.msk [vmem:[#allocation2 + $0xe8] sm:$0xff] %vm1675, %v1591
          %1706 = vst.msk [vmem:[#allocation2 + $0xf0] sm:$0xff] %vm1675, %v1594
          %1707 = vst.msk [vmem:[#allocation2 + $0xf8] sm:$0xff] %vm1675, %v1597
        $region64: #{tpu_custom_call.1} parent=39 // pred_fallthru
          _
        %p1708 = scmp.gt.s32.totalorder %s37, 0
        // Predicated region
        $region65: #{tpu_custom_call.1} parent=39 // pred_check
          %p1709 = pneg %p1708
        $region66: #{tpu_custom_call.1} parent=39 // pred_check_branch
          %1711 = sbr.rel (%p1709) target = $region68
        $region67: #{tpu_custom_call.1} parent=39 // pred_region
          %v1712 = vld [vmem:[#allocation2] sm:$0xff]
          %v1713 = vld [vmem:[#allocation2 + $0x8] sm:$0xff]
          %v1714 = vld [vmem:[#allocation2 + $0x10] sm:$0xff]
          %v1715 = vld [vmem:[#allocation2 + $0x18] sm:$0xff]
          %v1716 = vld [vmem:[#allocation2 + $0x20] sm:$0xff]
          %v1717 = vld [vmem:[#allocation2 + $0x28] sm:$0xff]
          %v1718 = vld [vmem:[#allocation2 + $0x30] sm:$0xff]
          %v1719 = vld [vmem:[#allocation2 + $0x38] sm:$0xff]
          %v1720 = vld [vmem:[#allocation2 + $0x40] sm:$0xff]
          %v1721 = vld [vmem:[#allocation2 + $0x48] sm:$0xff]
          %v1722 = vld [vmem:[#allocation2 + $0x50] sm:$0xff]
          %v1723 = vld [vmem:[#allocation2 + $0x58] sm:$0xff]
          %v1724 = vld [vmem:[#allocation2 + $0x60] sm:$0xff]
          %v1725 = vld [vmem:[#allocation2 + $0x68] sm:$0xff]
          %v1726 = vld [vmem:[#allocation2 + $0x70] sm:$0xff]
          %v1727 = vld [vmem:[#allocation2 + $0x78] sm:$0xff]
          %v1728 = vld [vmem:[#allocation2 + $0x80] sm:$0xff]
          %v1729 = vld [vmem:[#allocation2 + $0x88] sm:$0xff]
          %v1730 = vld [vmem:[#allocation2 + $0x90] sm:$0xff]
          %v1731 = vld [vmem:[#allocation2 + $0x98] sm:$0xff]
          %v1732 = vld [vmem:[#allocation2 + $0xa0] sm:$0xff]
          %v1733 = vld [vmem:[#allocation2 + $0xa8] sm:$0xff]
          %v1734 = vld [vmem:[#allocation2 + $0xb0] sm:$0xff]
          %v1735 = vld [vmem:[#allocation2 + $0xb8] sm:$0xff]
          %v1736 = vld [vmem:[#allocation2 + $0xc0] sm:$0xff]
          %v1737 = vld [vmem:[#allocation2 + $0xc8] sm:$0xff]
          %v1738 = vld [vmem:[#allocation2 + $0xd0] sm:$0xff]
          %v1739 = vld [vmem:[#allocation2 + $0xd8] sm:$0xff]
          %v1740 = vld [vmem:[#allocation2 + $0xe0] sm:$0xff]
          %v1741 = vld [vmem:[#allocation2 + $0xe8] sm:$0xff]
          %v1742 = vld [vmem:[#allocation2 + $0xf0] sm:$0xff]
          %v1743 = vld [vmem:[#allocation2 + $0xf8] sm:$0xff]
          %v1744 = vadd.f32 %v1712, %v1504
          %v1745 = vadd.f32 %v1713, %v1507
          %v1746 = vadd.f32 %v1714, %v1510
          %v1747 = vadd.f32 %v1715, %v1513
          %v1748 = vadd.f32 %v1716, %v1516
          %v1749 = vadd.f32 %v1717, %v1519
          %v1750 = vadd.f32 %v1718, %v1522
          %v1751 = vadd.f32 %v1719, %v1525
          %v1752 = vadd.f32 %v1720, %v1528
          %v1753 = vadd.f32 %v1721, %v1531
          %v1754 = vadd.f32 %v1722, %v1534
          %v1755 = vadd.f32 %v1723, %v1537
          %v1756 = vadd.f32 %v1724, %v1540
          %v1757 = vadd.f32 %v1725, %v1543
          %v1758 = vadd.f32 %v1726, %v1546
          %v1759 = vadd.f32 %v1727, %v1549
          %v1760 = vadd.f32 %v1728, %v1552
          %v1761 = vadd.f32 %v1729, %v1555
          %v1762 = vadd.f32 %v1730, %v1558
          %v1763 = vadd.f32 %v1731, %v1561
          %v1764 = vadd.f32 %v1732, %v1564
          %v1765 = vadd.f32 %v1733, %v1567
          %v1766 = vadd.f32 %v1734, %v1570
          %v1767 = vadd.f32 %v1735, %v1573
          %v1768 = vadd.f32 %v1736, %v1576
          %v1769 = vadd.f32 %v1737, %v1579
          %v1770 = vadd.f32 %v1738, %v1582
          %v1771 = vadd.f32 %v1739, %v1585
          %v1772 = vadd.f32 %v1740, %v1588
          %v1773 = vadd.f32 %v1741, %v1591
          %v1774 = vadd.f32 %v1742, %v1594
          %v1775 = vadd.f32 %v1743, %v1597
          %vm1776 = vcmask 7168
          %1777 = vst.msk [vmem:[#allocation2] sm:$0xff] %vm1776, %v1744
          %1778 = vst.msk [vmem:[#allocation2 + $0x8] sm:$0xff] %vm1776, %v1745
          %1779 = vst.msk [vmem:[#allocation2 + $0x10] sm:$0xff] %vm1776, %v1746
          %1780 = vst.msk [vmem:[#allocation2 + $0x18] sm:$0xff] %vm1776, %v1747
          %1781 = vst.msk [vmem:[#allocation2 + $0x20] sm:$0xff] %vm1776, %v1748
          %1782 = vst.msk [vmem:[#allocation2 + $0x28] sm:$0xff] %vm1776, %v1749
          %1783 = vst.msk [vmem:[#allocation2 + $0x30] sm:$0xff] %vm1776, %v1750
          %1784 = vst.msk [vmem:[#allocation2 + $0x38] sm:$0xff] %vm1776, %v1751
          %1785 = vst.msk [vmem:[#allocation2 + $0x40] sm:$0xff] %vm1776, %v1752
          %1786 = vst.msk [vmem:[#allocation2 + $0x48] sm:$0xff] %vm1776, %v1753
          %1787 = vst.msk [vmem:[#allocation2 + $0x50] sm:$0xff] %vm1776, %v1754
          %1788 = vst.msk [vmem:[#allocation2 + $0x58] sm:$0xff] %vm1776, %v1755
          %1789 = vst.msk [vmem:[#allocation2 + $0x60] sm:$0xff] %vm1776, %v1756
          %1790 = vst.msk [vmem:[#allocation2 + $0x68] sm:$0xff] %vm1776, %v1757
          %1791 = vst.msk [vmem:[#allocation2 + $0x70] sm:$0xff] %vm1776, %v1758
          %1792 = vst.msk [vmem:[#allocation2 + $0x78] sm:$0xff] %vm1776, %v1759
          %1793 = vst.msk [vmem:[#allocation2 + $0x80] sm:$0xff] %vm1776, %v1760
          %1794 = vst.msk [vmem:[#allocation2 + $0x88] sm:$0xff] %vm1776, %v1761
          %1795 = vst.msk [vmem:[#allocation2 + $0x90] sm:$0xff] %vm1776, %v1762
          %1796 = vst.msk [vmem:[#allocation2 + $0x98] sm:$0xff] %vm1776, %v1763
          %1797 = vst.msk [vmem:[#allocation2 + $0xa0] sm:$0xff] %vm1776, %v1764
          %1798 = vst.msk [vmem:[#allocation2 + $0xa8] sm:$0xff] %vm1776, %v1765
          %1799 = vst.msk [vmem:[#allocation2 + $0xb0] sm:$0xff] %vm1776, %v1766
          %1800 = vst.msk [vmem:[#allocation2 + $0xb8] sm:$0xff] %vm1776, %v1767
          %1801 = vst.msk [vmem:[#allocation2 + $0xc0] sm:$0xff] %vm1776, %v1768
          %1802 = vst.msk [vmem:[#allocation2 + $0xc8] sm:$0xff] %vm1776, %v1769
          %1803 = vst.msk [vmem:[#allocation2 + $0xd0] sm:$0xff] %vm1776, %v1770
          %1804 = vst.msk [vmem:[#allocation2 + $0xd8] sm:$0xff] %vm1776, %v1771
          %1805 = vst.msk [vmem:[#allocation2 + $0xe0] sm:$0xff] %vm1776, %v1772
          %1806 = vst.msk [vmem:[#allocation2 + $0xe8] sm:$0xff] %vm1776, %v1773
          %1807 = vst.msk [vmem:[#allocation2 + $0xf0] sm:$0xff] %vm1776, %v1774
          %1808 = vst.msk [vmem:[#allocation2 + $0xf8] sm:$0xff] %vm1776, %v1775
        $region68: #{tpu_custom_call.1} parent=39 // pred_fallthru
          _
        %p1809 = scmp.eq.s32.totalorder %s37, 1
        // Predicated region
        $region69: #{tpu_custom_call.1} parent=39 // pred_check
          %p1810 = pneg %p1809
        $region70: #{tpu_custom_call.1} parent=39 // pred_check_branch
          %1812 = sbr.rel (%p1810) target = $region72
        $region71: #{tpu_custom_call.1} parent=39 // pred_region
          %v1813 = vld [vmem:[#allocation4] sm:$0x1]
          %v1814 = vld [vmem:[#allocation2] sm:$0xff]
          %v1815 = vld [vmem:[#allocation2 + $0x8] sm:$0xff]
          %v1816 = vld [vmem:[#allocation2 + $0x10] sm:$0xff]
          %v1817 = vld [vmem:[#allocation2 + $0x18] sm:$0xff]
          %v1818 = vld [vmem:[#allocation2 + $0x20] sm:$0xff]
          %v1819 = vld [vmem:[#allocation2 + $0x28] sm:$0xff]
          %v1820 = vld [vmem:[#allocation2 + $0x30] sm:$0xff]
          %v1821 = vld [vmem:[#allocation2 + $0x38] sm:$0xff]
          %v1822 = vld [vmem:[#allocation2 + $0x40] sm:$0xff]
          %v1823 = vld [vmem:[#allocation2 + $0x48] sm:$0xff]
          %v1824 = vld [vmem:[#allocation2 + $0x50] sm:$0xff]
          %v1825 = vld [vmem:[#allocation2 + $0x58] sm:$0xff]
          %v1826 = vld [vmem:[#allocation2 + $0x60] sm:$0xff]
          %v1827 = vld [vmem:[#allocation2 + $0x68] sm:$0xff]
          %v1828 = vld [vmem:[#allocation2 + $0x70] sm:$0xff]
          %v1829 = vld [vmem:[#allocation2 + $0x78] sm:$0xff]
          %v1830 = vld [vmem:[#allocation2 + $0x80] sm:$0xff]
          %v1831 = vld [vmem:[#allocation2 + $0x88] sm:$0xff]
          %v1832 = vld [vmem:[#allocation2 + $0x90] sm:$0xff]
          %v1833 = vld [vmem:[#allocation2 + $0x98] sm:$0xff]
          %v1834 = vld [vmem:[#allocation2 + $0xa0] sm:$0xff]
          %v1835 = vld [vmem:[#allocation2 + $0xa8] sm:$0xff]
          %v1836 = vld [vmem:[#allocation2 + $0xb0] sm:$0xff]
          %v1837 = vld [vmem:[#allocation2 + $0xb8] sm:$0xff]
          %v1838 = vld [vmem:[#allocation2 + $0xc0] sm:$0xff]
          %v1839 = vld [vmem:[#allocation2 + $0xc8] sm:$0xff]
          %v1840 = vld [vmem:[#allocation2 + $0xd0] sm:$0xff]
          %v1841 = vld [vmem:[#allocation2 + $0xd8] sm:$0xff]
          %v1842 = vld [vmem:[#allocation2 + $0xe0] sm:$0xff]
          %v1843 = vld [vmem:[#allocation2 + $0xe8] sm:$0xff]
          %v1844 = vld [vmem:[#allocation2 + $0xf0] sm:$0xff]
          %v1845 = vld [vmem:[#allocation2 + $0xf8] sm:$0xff]
          %v1846 = vlog2.pop %v1814
          %v1847 = vmul.f32 %v1846, 0.6931472
          %v1848 = vlog2.pop %v1815
          %v1849 = vmul.f32 %v1848, 0.6931472
          %v1850 = vlog2.pop %v1816
          %v1851 = vmul.f32 %v1850, 0.6931472
          %v1852 = vlog2.pop %v1817
          %v1853 = vmul.f32 %v1852, 0.6931472
          %v1854 = vlog2.pop %v1818
          %v1855 = vmul.f32 %v1854, 0.6931472
          %v1856 = vlog2.pop %v1819
          %v1857 = vmul.f32 %v1856, 0.6931472
          %v1858 = vlog2.pop %v1820
          %v1859 = vmul.f32 %v1858, 0.6931472
          %v1860 = vlog2.pop %v1821
          %v1861 = vmul.f32 %v1860, 0.6931472
          %v1862 = vlog2.pop %v1822
          %v1863 = vmul.f32 %v1862, 0.6931472
          %v1864 = vlog2.pop %v1823
          %v1865 = vmul.f32 %v1864, 0.6931472
          %v1866 = vlog2.pop %v1824
          %v1867 = vmul.f32 %v1866, 0.6931472
          %v1868 = vlog2.pop %v1825
          %v1869 = vmul.f32 %v1868, 0.6931472
          %v1870 = vlog2.pop %v1826
          %v1871 = vmul.f32 %v1870, 0.6931472
          %v1872 = vlog2.pop %v1827
          %v1873 = vmul.f32 %v1872, 0.6931472
          %v1874 = vlog2.pop %v1828
          %v1875 = vmul.f32 %v1874, 0.6931472
          %v1876 = vlog2.pop %v1829
          %v1877 = vmul.f32 %v1876, 0.6931472
          %v1878 = vlog2.pop %v1830
          %v1879 = vmul.f32 %v1878, 0.6931472
          %v1880 = vlog2.pop %v1831
          %v1881 = vmul.f32 %v1880, 0.6931472
          %v1882 = vlog2.pop %v1832
          %v1883 = vmul.f32 %v1882, 0.6931472
          %v1884 = vlog2.pop %v1833
          %v1885 = vmul.f32 %v1884, 0.6931472
          %v1886 = vlog2.pop %v1834
          %v1887 = vmul.f32 %v1886, 0.6931472
          %v1888 = vlog2.pop %v1835
          %v1889 = vmul.f32 %v1888, 0.6931472
          %v1890 = vlog2.pop %v1836
          %v1891 = vmul.f32 %v1890, 0.6931472
          %v1892 = vlog2.pop %v1837
          %v1893 = vmul.f32 %v1892, 0.6931472
          %v1894 = vlog2.pop %v1838
          %v1895 = vmul.f32 %v1894, 0.6931472
          %v1896 = vlog2.pop %v1839
          %v1897 = vmul.f32 %v1896, 0.6931472
          %v1898 = vlog2.pop %v1840
          %v1899 = vmul.f32 %v1898, 0.6931472
          %v1900 = vlog2.pop %v1841
          %v1901 = vmul.f32 %v1900, 0.6931472
          %v1902 = vlog2.pop %v1842
          %v1903 = vmul.f32 %v1902, 0.6931472
          %v1904 = vlog2.pop %v1843
          %v1905 = vmul.f32 %v1904, 0.6931472
          %v1906 = vlog2.pop %v1844
          %v1907 = vmul.f32 %v1906, 0.6931472
          %v1908 = vlog2.pop %v1845
          %v1909 = vmul.f32 %v1908, 0.6931472
          %vm1910 = vcmask 7168
          %v1911 = vsel %vm1910, %v1847, 0.0
          %v1912 = vsel %vm1910, %v1849, 0.0
          %v1913 = vadd.f32 %v1911, %v1912
          %v1914 = vsel %vm1910, %v1851, 0.0
          %v1915 = vadd.f32 %v1913, %v1914
          %v1916 = vsel %vm1910, %v1853, 0.0
          %v1917 = vadd.f32 %v1915, %v1916
          %v1918 = vsel %vm1910, %v1855, 0.0
          %v1919 = vadd.f32 %v1917, %v1918
          %v1920 = vsel %vm1910, %v1857, 0.0
          %v1921 = vadd.f32 %v1919, %v1920
          %v1922 = vsel %vm1910, %v1859, 0.0
          %v1923 = vadd.f32 %v1921, %v1922
          %v1924 = vsel %vm1910, %v1861, 0.0
          %v1925 = vadd.f32 %v1923, %v1924
          %v1926 = vsel %vm1910, %v1863, 0.0
          %v1927 = vadd.f32 %v1925, %v1926
          %v1928 = vsel %vm1910, %v1865, 0.0
          %v1929 = vadd.f32 %v1927, %v1928
          %v1930 = vsel %vm1910, %v1867, 0.0
          %v1931 = vadd.f32 %v1929, %v1930
          %v1932 = vsel %vm1910, %v1869, 0.0
          %v1933 = vadd.f32 %v1931, %v1932
          %v1934 = vsel %vm1910, %v1871, 0.0
          %v1935 = vadd.f32 %v1933, %v1934
          %v1936 = vsel %vm1910, %v1873, 0.0
          %v1937 = vadd.f32 %v1935, %v1936
          %v1938 = vsel %vm1910, %v1875, 0.0
          %v1939 = vadd.f32 %v1937, %v1938
          %v1940 = vsel %vm1910, %v1877, 0.0
          %v1941 = vadd.f32 %v1939, %v1940
          %v1942 = vsel %vm1910, %v1879, 0.0
          %v1943 = vadd.f32 %v1941, %v1942
          %v1944 = vsel %vm1910, %v1881, 0.0
          %v1945 = vadd.f32 %v1943, %v1944
          %v1946 = vsel %vm1910, %v1883, 0.0
          %v1947 = vadd.f32 %v1945, %v1946
          %v1948 = vsel %vm1910, %v1885, 0.0
          %v1949 = vadd.f32 %v1947, %v1948
          %v1950 = vsel %vm1910, %v1887, 0.0
          %v1951 = vadd.f32 %v1949, %v1950
          %v1952 = vsel %vm1910, %v1889, 0.0
          %v1953 = vadd.f32 %v1951, %v1952
          %v1954 = vsel %vm1910, %v1891, 0.0
          %v1955 = vadd.f32 %v1953, %v1954
          %v1956 = vsel %vm1910, %v1893, 0.0
          %v1957 = vadd.f32 %v1955, %v1956
          %v1958 = vsel %vm1910, %v1895, 0.0
          %v1959 = vadd.f32 %v1957, %v1958
          %v1960 = vsel %vm1910, %v1897, 0.0
          %v1961 = vadd.f32 %v1959, %v1960
          %v1962 = vsel %vm1910, %v1899, 0.0
          %v1963 = vadd.f32 %v1961, %v1962
          %v1964 = vsel %vm1910, %v1901, 0.0
          %v1965 = vadd.f32 %v1963, %v1964
          %v1966 = vsel %vm1910, %v1903, 0.0
          %v1967 = vadd.f32 %v1965, %v1966
          %v1968 = vsel %vm1910, %v1905, 0.0
          %v1969 = vadd.f32 %v1967, %v1968
          %v1970 = vsel %vm1910, %v1907, 0.0
          %v1971 = vadd.f32 %v1969, %v1970
          %v1972 = vsel %vm1910, %v1909, 0.0
          %v1973 = vadd.f32 %v1971, %v1972
          %1974 = vadd.xlane.f32.xlu0 %v1973
          %v1975 = vpop.xlane.xlu0 %1974
          %v1976 = vrot.slane %v1975, 4
          %v1977 = vadd.f32 %v1975, %v1976
          %v1978 = vrot.slane %v1977, 2
          %v1979 = vadd.f32 %v1977, %v1978
          %v1980 = vrot.slane %v1979, 1
          %v1981 = vadd.f32 %v1979, %v1980
          %s1982 = vtos %v1981
          %v1983 = vstv %s1982
          %v1984 = vadd.f32 %v1813, %v1983
          %vm1985 = vcmask 0
          %1986 = vst.msk [vmem:[#allocation4] sm:$0x1] %vm1985, %v1984
        $region72: #{tpu_custom_call.1} parent=39 // pred_fallthru
          _
        // Predicated region
        $region73: #{tpu_custom_call.1} parent=39 // pred_check
          %p1987 = pneg %p1297
        $region74: #{tpu_custom_call.1} parent=39 // pred_check_branch
          %1989 = sbr.rel (%p1987) target = $region76
        $region75: #{tpu_custom_call.1} parent=39 // pred_region
          %v1992 = vrot.slane %v1671, 7
          %vm1993 = vcmask 1040384
          %v1994 = vsel %vm1993, %v1634, %v1992
          %v1996 = vlaneseq
          %vm1997 = vcmp.ge.s32.totalorder %v1996, 0
          %vm1998 = vcmp.lt.s32.totalorder %v1996, 256
          %vm1999 = vmand %vm1997, %vm1998
          %s2000 = sshra.s32 %s37, 1
          %s2001 = sand.u32 %s37, 1
          %s2002 = sshra.s32 %s37, 1
          %s2003 = sand.u32 %s37, 1
          %s2004 = smul.u32 %s2000, 2
          %s2005 = smul.u32 %s2004, 2
          %s2006 = sadd.s32 %s2005, %s2003
          %s2007 = scalar_lea.vmem [#allocation3], %s2006
          %2008 = vst.msk [vmem:[%s2007] ss:$2 sm:$0x3] %vm1999, %v1994
        $region76: #{tpu_custom_call.1} parent=39 // pred_fallthru
          _
        %p2009 = scmp.gt.s32.totalorder %s36, 0
        // Predicated region
        $region77: #{tpu_custom_call.1} parent=39 // pred_check
          %p2010 = pneg %p2009
        $region78: #{tpu_custom_call.1} parent=39 // pred_check_branch
          %2012 = sbr.rel (%p2010) target = $region80
        $region79: #{tpu_custom_call.1} parent=39 // pred_region
          %s2013 = sshra.s32 %s37, 1
          %s2014 = sand.u32 %s37, 1
          %s2015 = sshra.s32 %s37, 1
          %s2016 = sand.u32 %s37, 1
          %s2017 = smul.u32 %s2013, 2
          %s2018 = smul.u32 %s2017, 2
          %s2019 = sadd.s32 %s2018, %s2016
          %s2020 = scalar_lea.vmem [#allocation3], %s2019
          %v2021 = vld [vmem:[%s2020] ss:$2 sm:$0x3]
          %v2024 = vrot.slane %v1671, 7
          %vm2025 = vcmask 1040384
          %v2026 = vsel %vm2025, %v1634, %v2024
          %v2028 = vadd.f32 %v2021, %v2026
          %v2029 = vlaneseq
          %vm2030 = vcmp.ge.s32.totalorder %v2029, 0
          %vm2031 = vcmp.lt.s32.totalorder %v2029, 256
          %vm2032 = vmand %vm2030, %vm2031
          %2033 = vst.msk [vmem:[%s2020] ss:$2 sm:$0x3] %vm2032, %v2028
        $region80: #{tpu_custom_call.1} parent=39 // pred_fallthru
          _
        %p2034 = scmp.eq.s32.totalorder %s36, 1
        // Predicated region
        $region81: #{tpu_custom_call.1} parent=39 // pred_check
          %p2035 = pneg %p2034
        $region82: #{tpu_custom_call.1} parent=39 // pred_check_branch
          %2037 = sbr.rel (%p2035) target = $region84
        $region83: #{tpu_custom_call.1} parent=39 // pred_region
          %v2038 = vld [vmem:[#allocation5] sm:$0x1]
          %s2039 = sshra.s32 %s37, 1
          %s2040 = sand.u32 %s37, 1
          %s2041 = sshra.s32 %s37, 1
          %s2042 = sand.u32 %s37, 1
          %s2043 = smul.u32 %s2039, 2
          %s2044 = smul.u32 %s2043, 2
          %s2045 = sadd.s32 %s2044, %s2042
          %s2046 = scalar_lea.vmem [#allocation3], %s2045
          %v2047 = vld [vmem:[%s2046] ss:$2 sm:$0x3]
          %v2048 = vlog2.pop %v2047
          %v2049 = vmul.f32 %v2048, 0.6931472
          %v2051 = vperm.slane %v2049, 0
          %v2052 = vperm.slane %v2049, 1
          %vm2055 = vcmask 1040384
          %v2056 = vsel %vm2055, %v2051, 0.0
          %v2057 = vsel %vm2055, %v2052, 0.0
          %v2058 = vadd.f32 %v2056, %v2057
          %2059 = vadd.xlane.f32.xlu0 %v2058
          %v2060 = vpop.xlane.xlu0 %2059
          %v2061 = vrot.slane %v2060, 4
          %v2062 = vadd.f32 %v2060, %v2061
          %v2063 = vrot.slane %v2062, 2
          %v2064 = vadd.f32 %v2062, %v2063
          %v2065 = vrot.slane %v2064, 1
          %v2066 = vadd.f32 %v2064, %v2065
          %s2067 = vtos %v2066
          %v2068 = vstv %s2067
          %v2069 = vadd.f32 %v2038, %v2068
          %vm2070 = vcmask 0
          %2071 = vst.msk [vmem:[#allocation5] sm:$0x1] %vm2070, %v2069
        $region84: #{tpu_custom_call.1} parent=39 // pred_fallthru
          _
        %s2072 = smul.u32 %s36, 256
        %s2073 = smul.u32 %s37, 256
        %s2074 = sadd.s32 %s2073, 256
        %p2075 = scmp.lt.s32.totalorder %s2072, %s2074
        %s2076 = sadd.s32 %s2072, 256
        %p2077 = scmp.lt.s32.totalorder %s2073, %s2076
        %p2078 = pnand %p2075, %p2077
        %p2079 = pneg %p2078
        // Predicated region
        $region85: #{tpu_custom_call.1} parent=39 // pred_check
          _
        $region86: #{tpu_custom_call.1} parent=39 // pred_check_branch
          %2081 = sbr.rel (%p2078) target = $region88
        $region87: #{tpu_custom_call.1} parent=39 // pred_region
          %v2082 = vlaneseq
          %v2083 = vshrl.u32 %v2082, 7
          %v2084 = vadd.s32 %v2083, 8
          %v2085 = vadd.s32 %v2083, 16
          %v2086 = vadd.s32 %v2083, 24
          %v2087 = vadd.s32 %v2083, 32
          %v2088 = vadd.s32 %v2083, 40
          %v2089 = vadd.s32 %v2083, 48
          %v2090 = vadd.s32 %v2083, 56
          %v2091 = vadd.s32 %v2083, 64
          %v2092 = vadd.s32 %v2083, 72
          %v2093 = vadd.s32 %v2083, 80
          %v2094 = vadd.s32 %v2083, 88
          %v2095 = vadd.s32 %v2083, 96
          %v2096 = vadd.s32 %v2083, 104
          %v2097 = vadd.s32 %v2083, 112
          %v2098 = vadd.s32 %v2083, 120
          %v2099 = vadd.s32 %v2083, 128
          %v2100 = vadd.s32 %v2083, 136
          %v2101 = vadd.s32 %v2083, 144
          %v2102 = vadd.s32 %v2083, 152
          %v2103 = vadd.s32 %v2083, 160
          %v2104 = vadd.s32 %v2083, 168
          %v2105 = vadd.s32 %v2083, 176
          %v2106 = vadd.s32 %v2083, 184
          %v2107 = vadd.s32 %v2083, 192
          %v2108 = vadd.s32 %v2083, 200
          %v2109 = vadd.s32 %v2083, 208
          %v2110 = vadd.s32 %v2083, 216
          %v2111 = vadd.s32 %v2083, 224
          %v2112 = vadd.s32 %v2083, 232
          %v2113 = vadd.s32 %v2083, 240
          %v2114 = vadd.s32 %v2083, 248
          %v2115 = vstv %s2072
          %v2116 = vadd.s32 %v2115, %v2083
          %v2117 = vadd.s32 %v2115, %v2084
          %v2118 = vadd.s32 %v2115, %v2085
          %v2119 = vadd.s32 %v2115, %v2086
          %v2120 = vadd.s32 %v2115, %v2087
          %v2121 = vadd.s32 %v2115, %v2088
          %v2122 = vadd.s32 %v2115, %v2089
          %v2123 = vadd.s32 %v2115, %v2090
          %v2124 = vadd.s32 %v2115, %v2091
          %v2125 = vadd.s32 %v2115, %v2092
          %v2126 = vadd.s32 %v2115, %v2093
          %v2127 = vadd.s32 %v2115, %v2094
          %v2128 = vadd.s32 %v2115, %v2095
          %v2129 = vadd.s32 %v2115, %v2096
          %v2130 = vadd.s32 %v2115, %v2097
          %v2131 = vadd.s32 %v2115, %v2098
          %v2132 = vadd.s32 %v2115, %v2099
          %v2133 = vadd.s32 %v2115, %v2100
          %v2134 = vadd.s32 %v2115, %v2101
          %v2135 = vadd.s32 %v2115, %v2102
          %v2136 = vadd.s32 %v2115, %v2103
          %v2137 = vadd.s32 %v2115, %v2104
          %v2138 = vadd.s32 %v2115, %v2105
          %v2139 = vadd.s32 %v2115, %v2106
          %v2140 = vadd.s32 %v2115, %v2107
          %v2141 = vadd.s32 %v2115, %v2108
          %v2142 = vadd.s32 %v2115, %v2109
          %v2143 = vadd.s32 %v2115, %v2110
          %v2144 = vadd.s32 %v2115, %v2111
          %v2145 = vadd.s32 %v2115, %v2112
          %v2146 = vadd.s32 %v2115, %v2113
          %v2147 = vadd.s32 %v2115, %v2114
          %v2148 = vlaneseq
          %v2149 = vand.u32 %v2148, 127
          %v2150 = vadd.s32 %v2149, 128
          %v2151 = vstv %s2073
          %v2152 = vadd.s32 %v2151, %v2149
          %v2153 = vadd.s32 %v2151, %v2150
          %v2154 = vld [vmem:[#allocation6] sm:$0x1]
          %vm2155 = vcmp.eq.s32.totalorder %v2116, %v2152
          %vm2156 = vcmp.eq.s32.totalorder %v2116, %v2153
          %vm2157 = vcmp.eq.s32.totalorder %v2117, %v2152
          %vm2158 = vcmp.eq.s32.totalorder %v2117, %v2153
          %vm2159 = vcmp.eq.s32.totalorder %v2118, %v2152
          %vm2160 = vcmp.eq.s32.totalorder %v2118, %v2153
          %vm2161 = vcmp.eq.s32.totalorder %v2119, %v2152
          %vm2162 = vcmp.eq.s32.totalorder %v2119, %v2153
          %vm2163 = vcmp.eq.s32.totalorder %v2120, %v2152
          %vm2164 = vcmp.eq.s32.totalorder %v2120, %v2153
          %vm2165 = vcmp.eq.s32.totalorder %v2121, %v2152
          %vm2166 = vcmp.eq.s32.totalorder %v2121, %v2153
          %vm2167 = vcmp.eq.s32.totalorder %v2122, %v2152
          %vm2168 = vcmp.eq.s32.totalorder %v2122, %v2153
          %vm2169 = vcmp.eq.s32.totalorder %v2123, %v2152
          %vm2170 = vcmp.eq.s32.totalorder %v2123, %v2153
          %vm2171 = vcmp.eq.s32.totalorder %v2124, %v2152
          %vm2172 = vcmp.eq.s32.totalorder %v2124, %v2153
          %vm2173 = vcmp.eq.s32.totalorder %v2125, %v2152
          %vm2174 = vcmp.eq.s32.totalorder %v2125, %v2153
          %vm2175 = vcmp.eq.s32.totalorder %v2126, %v2152
          %vm2176 = vcmp.eq.s32.totalorder %v2126, %v2153
          %vm2177 = vcmp.eq.s32.totalorder %v2127, %v2152
          %vm2178 = vcmp.eq.s32.totalorder %v2127, %v2153
          %vm2179 = vcmp.eq.s32.totalorder %v2128, %v2152
          %vm2180 = vcmp.eq.s32.totalorder %v2128, %v2153
          %vm2181 = vcmp.eq.s32.totalorder %v2129, %v2152
          %vm2182 = vcmp.eq.s32.totalorder %v2129, %v2153
          %vm2183 = vcmp.eq.s32.totalorder %v2130, %v2152
          %vm2184 = vcmp.eq.s32.totalorder %v2130, %v2153
          %vm2185 = vcmp.eq.s32.totalorder %v2131, %v2152
          %vm2186 = vcmp.eq.s32.totalorder %v2131, %v2153
          %vm2187 = vcmp.eq.s32.totalorder %v2132, %v2152
          %vm2188 = vcmp.eq.s32.totalorder %v2132, %v2153
          %vm2189 = vcmp.eq.s32.totalorder %v2133, %v2152
          %vm2190 = vcmp.eq.s32.totalorder %v2133, %v2153
          %vm2191 = vcmp.eq.s32.totalorder %v2134, %v2152
          %vm2192 = vcmp.eq.s32.totalorder %v2134, %v2153
          %vm2193 = vcmp.eq.s32.totalorder %v2135, %v2152
          %vm2194 = vcmp.eq.s32.totalorder %v2135, %v2153
          %vm2195 = vcmp.eq.s32.totalorder %v2136, %v2152
          %vm2196 = vcmp.eq.s32.totalorder %v2136, %v2153
          %vm2197 = vcmp.eq.s32.totalorder %v2137, %v2152
          %vm2198 = vcmp.eq.s32.totalorder %v2137, %v2153
          %vm2199 = vcmp.eq.s32.totalorder %v2138, %v2152
          %vm2200 = vcmp.eq.s32.totalorder %v2138, %v2153
          %vm2201 = vcmp.eq.s32.totalorder %v2139, %v2152
          %vm2202 = vcmp.eq.s32.totalorder %v2139, %v2153
          %vm2203 = vcmp.eq.s32.totalorder %v2140, %v2152
          %vm2204 = vcmp.eq.s32.totalorder %v2140, %v2153
          %vm2205 = vcmp.eq.s32.totalorder %v2141, %v2152
          %vm2206 = vcmp.eq.s32.totalorder %v2141, %v2153
          %vm2207 = vcmp.eq.s32.totalorder %v2142, %v2152
          %vm2208 = vcmp.eq.s32.totalorder %v2142, %v2153
          %vm2209 = vcmp.eq.s32.totalorder %v2143, %v2152
          %vm2210 = vcmp.eq.s32.totalorder %v2143, %v2153
          %vm2211 = vcmp.eq.s32.totalorder %v2144, %v2152
          %vm2212 = vcmp.eq.s32.totalorder %v2144, %v2153
          %vm2213 = vcmp.eq.s32.totalorder %v2145, %v2152
          %vm2214 = vcmp.eq.s32.totalorder %v2145, %v2153
          %vm2215 = vcmp.eq.s32.totalorder %v2146, %v2152
          %vm2216 = vcmp.eq.s32.totalorder %v2146, %v2153
          %vm2217 = vcmp.eq.s32.totalorder %v2147, %v2152
          %vm2218 = vcmp.eq.s32.totalorder %v2147, %v2153
          %v2219 = vsel %vm2155, %v1169, 0.0
          %v2220 = vsel %vm2156, %v1170, 0.0
          %v2221 = vsel %vm2157, %v1171, 0.0
          %v2222 = vsel %vm2158, %v1172, 0.0
          %v2223 = vsel %vm2159, %v1173, 0.0
          %v2224 = vsel %vm2160, %v1174, 0.0
          %v2225 = vsel %vm2161, %v1175, 0.0
          %v2226 = vsel %vm2162, %v1176, 0.0
          %v2227 = vsel %vm2163, %v1177, 0.0
          %v2228 = vsel %vm2164, %v1178, 0.0
          %v2229 = vsel %vm2165, %v1179, 0.0
          %v2230 = vsel %vm2166, %v1180, 0.0
          %v2231 = vsel %vm2167, %v1181, 0.0
          %v2232 = vsel %vm2168, %v1182, 0.0
          %v2233 = vsel %vm2169, %v1183, 0.0
          %v2234 = vsel %vm2170, %v1184, 0.0
          %v2235 = vsel %vm2171, %v1185, 0.0
          %v2236 = vsel %vm2172, %v1186, 0.0
          %v2237 = vsel %vm2173, %v1187, 0.0
          %v2238 = vsel %vm2174, %v1188, 0.0
          %v2239 = vsel %vm2175, %v1189, 0.0
          %v2240 = vsel %vm2176, %v1190, 0.0
          %v2241 = vsel %vm2177, %v1191, 0.0
          %v2242 = vsel %vm2178, %v1192, 0.0
          %v2243 = vsel %vm2179, %v1193, 0.0
          %v2244 = vsel %vm2180, %v1194, 0.0
          %v2245 = vsel %vm2181, %v1195, 0.0
          %v2246 = vsel %vm2182, %v1196, 0.0
          %v2247 = vsel %vm2183, %v1197, 0.0
          %v2248 = vsel %vm2184, %v1198, 0.0
          %v2249 = vsel %vm2185, %v1199, 0.0
          %v2250 = vsel %vm2186, %v1200, 0.0
          %v2251 = vsel %vm2187, %v1201, 0.0
          %v2252 = vsel %vm2188, %v1202, 0.0
          %v2253 = vsel %vm2189, %v1203, 0.0
          %v2254 = vsel %vm2190, %v1204, 0.0
          %v2255 = vsel %vm2191, %v1205, 0.0
          %v2256 = vsel %vm2192, %v1206, 0.0
          %v2257 = vsel %vm2193, %v1207, 0.0
          %v2258 = vsel %vm2194, %v1208, 0.0
          %v2259 = vsel %vm2195, %v1209, 0.0
          %v2260 = vsel %vm2196, %v1210, 0.0
          %v2261 = vsel %vm2197, %v1211, 0.0
          %v2262 = vsel %vm2198, %v1212, 0.0
          %v2263 = vsel %vm2199, %v1213, 0.0
          %v2264 = vsel %vm2200, %v1214, 0.0
          %v2265 = vsel %vm2201, %v1215, 0.0
          %v2266 = vsel %vm2202, %v1216, 0.0
          %v2267 = vsel %vm2203, %v1217, 0.0
          %v2268 = vsel %vm2204, %v1218, 0.0
          %v2269 = vsel %vm2205, %v1219, 0.0
          %v2270 = vsel %vm2206, %v1220, 0.0
          %v2271 = vsel %vm2207, %v1221, 0.0
          %v2272 = vsel %vm2208, %v1222, 0.0
          %v2273 = vsel %vm2209, %v1223, 0.0
          %v2274 = vsel %vm2210, %v1224, 0.0
          %v2275 = vsel %vm2211, %v1225, 0.0
          %v2276 = vsel %vm2212, %v1226, 0.0
          %v2277 = vsel %vm2213, %v1227, 0.0
          %v2278 = vsel %vm2214, %v1228, 0.0
          %v2279 = vsel %vm2215, %v1229, 0.0
          %v2280 = vsel %vm2216, %v1230, 0.0
          %v2281 = vsel %vm2217, %v1231, 0.0
          %v2282 = vsel %vm2218, %v1232, 0.0
          %v2283 = vadd.f32 %v2219, %v2220
          %v2284 = vadd.f32 %v2283, %v2221
          %v2285 = vadd.f32 %v2284, %v2222
          %v2286 = vadd.f32 %v2285, %v2223
          %v2287 = vadd.f32 %v2286, %v2224
          %v2288 = vadd.f32 %v2287, %v2225
          %v2289 = vadd.f32 %v2288, %v2226
          %v2290 = vadd.f32 %v2289, %v2227
          %v2291 = vadd.f32 %v2290, %v2228
          %v2292 = vadd.f32 %v2291, %v2229
          %v2293 = vadd.f32 %v2292, %v2230
          %v2294 = vadd.f32 %v2293, %v2231
          %v2295 = vadd.f32 %v2294, %v2232
          %v2296 = vadd.f32 %v2295, %v2233
          %v2297 = vadd.f32 %v2296, %v2234
          %v2298 = vadd.f32 %v2297, %v2235
          %v2299 = vadd.f32 %v2298, %v2236
          %v2300 = vadd.f32 %v2299, %v2237
          %v2301 = vadd.f32 %v2300, %v2238
          %v2302 = vadd.f32 %v2301, %v2239
          %v2303 = vadd.f32 %v2302, %v2240
          %v2304 = vadd.f32 %v2303, %v2241
          %v2305 = vadd.f32 %v2304, %v2242
          %v2306 = vadd.f32 %v2305, %v2243
          %v2307 = vadd.f32 %v2306, %v2244
          %v2308 = vadd.f32 %v2307, %v2245
          %v2309 = vadd.f32 %v2308, %v2246
          %v2310 = vadd.f32 %v2309, %v2247
          %v2311 = vadd.f32 %v2310, %v2248
          %v2312 = vadd.f32 %v2311, %v2249
          %v2313 = vadd.f32 %v2312, %v2250
          %v2314 = vadd.f32 %v2313, %v2251
          %v2315 = vadd.f32 %v2314, %v2252
          %v2316 = vadd.f32 %v2315, %v2253
          %v2317 = vadd.f32 %v2316, %v2254
          %v2318 = vadd.f32 %v2317, %v2255
          %v2319 = vadd.f32 %v2318, %v2256
          %v2320 = vadd.f32 %v2319, %v2257
          %v2321 = vadd.f32 %v2320, %v2258
          %v2322 = vadd.f32 %v2321, %v2259
          %v2323 = vadd.f32 %v2322, %v2260
          %v2324 = vadd.f32 %v2323, %v2261
          %v2325 = vadd.f32 %v2324, %v2262
          %v2326 = vadd.f32 %v2325, %v2263
          %v2327 = vadd.f32 %v2326, %v2264
          %v2328 = vadd.f32 %v2327, %v2265
          %v2329 = vadd.f32 %v2328, %v2266
          %v2330 = vadd.f32 %v2329, %v2267
          %v2331 = vadd.f32 %v2330, %v2268
          %v2332 = vadd.f32 %v2331, %v2269
          %v2333 = vadd.f32 %v2332, %v2270
          %v2334 = vadd.f32 %v2333, %v2271
          %v2335 = vadd.f32 %v2334, %v2272
          %v2336 = vadd.f32 %v2335, %v2273
          %v2337 = vadd.f32 %v2336, %v2274
          %v2338 = vadd.f32 %v2337, %v2275
          %v2339 = vadd.f32 %v2338, %v2276
          %v2340 = vadd.f32 %v2339, %v2277
          %v2341 = vadd.f32 %v2340, %v2278
          %v2342 = vadd.f32 %v2341, %v2279
          %v2343 = vadd.f32 %v2342, %v2280
          %v2344 = vadd.f32 %v2343, %v2281
          %v2345 = vadd.f32 %v2344, %v2282
          %2346 = vadd.xlane.f32.xlu0 %v2345
          %v2347 = vpop.xlane.xlu0 %2346
          %v2348 = vrot.slane %v2347, 4
          %v2349 = vadd.f32 %v2347, %v2348
          %v2350 = vrot.slane %v2349, 2
          %v2351 = vadd.f32 %v2349, %v2350
          %v2352 = vrot.slane %v2351, 1
          %v2353 = vadd.f32 %v2351, %v2352
          %s2354 = vtos %v2353
          %v2355 = vstv %s2354
          %v2356 = vadd.f32 %v2154, %v2355
          %vm2357 = vcmask 0
          %2358 = vst.msk [vmem:[#allocation6] sm:$0x1] %vm2357, %v2356
        $region88: #{tpu_custom_call.1} parent=39 // pred_fallthru
          _
        // Predicated region
        $region89: #{tpu_custom_call.1} parent=39 // pred_check
          %p2359 = pneg %p1298
        $region90: #{tpu_custom_call.1} parent=39 // pred_check_branch
          %2361 = sbr.rel (%p2359) target = $region92
        $region91: #{tpu_custom_call.1} parent=39 // pred_region
          %v2362 = vld [vmem:[%s364] sm:$0xff]
          %v2363 = vld [vmem:[%s364 + $0x8] sm:$0xff]
          %v2364 = vld [vmem:[%s364 + $0x10] sm:$0xff]
          %v2365 = vld [vmem:[%s364 + $0x18] sm:$0xff]
          %v2366 = vld [vmem:[%s364 + $0x20] sm:$0xff]
          %v2367 = vld [vmem:[%s364 + $0x28] sm:$0xff]
          %v2368 = vld [vmem:[%s364 + $0x30] sm:$0xff]
          %v2369 = vld [vmem:[%s364 + $0x38] sm:$0xff]
          %v2370 = vld [vmem:[%s364 + $0x40] sm:$0xff]
          %v2371 = vld [vmem:[%s364 + $0x48] sm:$0xff]
          %v2372 = vld [vmem:[%s364 + $0x50] sm:$0xff]
          %v2373 = vld [vmem:[%s364 + $0x58] sm:$0xff]
          %v2374 = vld [vmem:[%s364 + $0x60] sm:$0xff]
          %v2375 = vld [vmem:[%s364 + $0x68] sm:$0xff]
          %v2376 = vld [vmem:[%s364 + $0x70] sm:$0xff]
          %v2377 = vld [vmem:[%s364 + $0x78] sm:$0xff]
          %v2378 = vld [vmem:[%s364 + $0x80] sm:$0xff]
          %v2379 = vld [vmem:[%s364 + $0x88] sm:$0xff]
          %v2380 = vld [vmem:[%s364 + $0x90] sm:$0xff]
          %v2381 = vld [vmem:[%s364 + $0x98] sm:$0xff]
          %v2382 = vld [vmem:[%s364 + $0xa0] sm:$0xff]
          %v2383 = vld [vmem:[%s364 + $0xa8] sm:$0xff]
          %v2384 = vld [vmem:[%s364 + $0xb0] sm:$0xff]
          %v2385 = vld [vmem:[%s364 + $0xb8] sm:$0xff]
          %v2386 = vld [vmem:[%s364 + $0xc0] sm:$0xff]
          %v2387 = vld [vmem:[%s364 + $0xc8] sm:$0xff]
          %v2388 = vld [vmem:[%s364 + $0xd0] sm:$0xff]
          %v2389 = vld [vmem:[%s364 + $0xd8] sm:$0xff]
          %v2390 = vld [vmem:[%s364 + $0xe0] sm:$0xff]
          %v2391 = vld [vmem:[%s364 + $0xe8] sm:$0xff]
          %v2392 = vld [vmem:[%s364 + $0xf0] sm:$0xff]
          %v2393 = vld [vmem:[%s364 + $0xf8] sm:$0xff]
          %v2394 = vunpack.c.l.bf16 %v2362
          %v2395 = vunpack.c.h.bf16 %v2362
          %v2396 = vunpack.c.l.bf16 %v2363
          %v2397 = vunpack.c.h.bf16 %v2363
          %v2398 = vunpack.c.l.bf16 %v2364
          %v2399 = vunpack.c.h.bf16 %v2364
          %v2400 = vunpack.c.l.bf16 %v2365
          %v2401 = vunpack.c.h.bf16 %v2365
          %v2402 = vunpack.c.l.bf16 %v2366
          %v2403 = vunpack.c.h.bf16 %v2366
          %v2404 = vunpack.c.l.bf16 %v2367
          %v2405 = vunpack.c.h.bf16 %v2367
          %v2406 = vunpack.c.l.bf16 %v2368
          %v2407 = vunpack.c.h.bf16 %v2368
          %v2408 = vunpack.c.l.bf16 %v2369
          %v2409 = vunpack.c.h.bf16 %v2369
          %v2410 = vunpack.c.l.bf16 %v2370
          %v2411 = vunpack.c.h.bf16 %v2370
          %v2412 = vunpack.c.l.bf16 %v2371
          %v2413 = vunpack.c.h.bf16 %v2371
          %v2414 = vunpack.c.l.bf16 %v2372
          %v2415 = vunpack.c.h.bf16 %v2372
          %v2416 = vunpack.c.l.bf16 %v2373
          %v2417 = vunpack.c.h.bf16 %v2373
          %v2418 = vunpack.c.l.bf16 %v2374
          %v2419 = vunpack.c.h.bf16 %v2374
          %v2420 = vunpack.c.l.bf16 %v2375
          %v2421 = vunpack.c.h.bf16 %v2375
          %v2422 = vunpack.c.l.bf16 %v2376
          %v2423 = vunpack.c.h.bf16 %v2376
          %v2424 = vunpack.c.l.bf16 %v2377
          %v2425 = vunpack.c.h.bf16 %v2377
          %v2426 = vunpack.c.l.bf16 %v2378
          %v2427 = vunpack.c.h.bf16 %v2378
          %v2428 = vunpack.c.l.bf16 %v2379
          %v2429 = vunpack.c.h.bf16 %v2379
          %v2430 = vunpack.c.l.bf16 %v2380
          %v2431 = vunpack.c.h.bf16 %v2380
          %v2432 = vunpack.c.l.bf16 %v2381
          %v2433 = vunpack.c.h.bf16 %v2381
          %v2434 = vunpack.c.l.bf16 %v2382
          %v2435 = vunpack.c.h.bf16 %v2382
          %v2436 = vunpack.c.l.bf16 %v2383
          %v2437 = vunpack.c.h.bf16 %v2383
          %v2438 = vunpack.c.l.bf16 %v2384
          %v2439 = vunpack.c.h.bf16 %v2384
          %v2440 = vunpack.c.l.bf16 %v2385
          %v2441 = vunpack.c.h.bf16 %v2385
          %v2442 = vunpack.c.l.bf16 %v2386
          %v2443 = vunpack.c.h.bf16 %v2386
          %v2444 = vunpack.c.l.bf16 %v2387
          %v2445 = vunpack.c.h.bf16 %v2387
          %v2446 = vunpack.c.l.bf16 %v2388
          %v2447 = vunpack.c.h.bf16 %v2388
          %v2448 = vunpack.c.l.bf16 %v2389
          %v2449 = vunpack.c.h.bf16 %v2389
          %v2450 = vunpack.c.l.bf16 %v2390
          %v2451 = vunpack.c.h.bf16 %v2390
          %v2452 = vunpack.c.l.bf16 %v2391
          %v2453 = vunpack.c.h.bf16 %v2391
          %v2454 = vunpack.c.l.bf16 %v2392
          %v2455 = vunpack.c.h.bf16 %v2392
          %v2456 = vunpack.c.l.bf16 %v2393
          %v2457 = vunpack.c.h.bf16 %v2393
          %v2458 = vld [vmem:[%s344] sm:$0xff]
          %v2459 = vld [vmem:[%s344 + $0x8] sm:$0xff]
          %v2460 = vld [vmem:[%s344 + $0x10] sm:$0xff]
          %v2461 = vld [vmem:[%s344 + $0x18] sm:$0xff]
          %v2462 = vld [vmem:[%s344 + $0x20] sm:$0xff]
          %v2463 = vld [vmem:[%s344 + $0x28] sm:$0xff]
          %v2464 = vld [vmem:[%s344 + $0x30] sm:$0xff]
          %v2465 = vld [vmem:[%s344 + $0x38] sm:$0xff]
          %v2466 = vld [vmem:[%s344 + $0x40] sm:$0xff]
          %v2467 = vld [vmem:[%s344 + $0x48] sm:$0xff]
          %v2468 = vld [vmem:[%s344 + $0x50] sm:$0xff]
          %v2469 = vld [vmem:[%s344 + $0x58] sm:$0xff]
          %v2470 = vld [vmem:[%s344 + $0x60] sm:$0xff]
          %v2471 = vld [vmem:[%s344 + $0x68] sm:$0xff]
          %v2472 = vld [vmem:[%s344 + $0x70] sm:$0xff]
          %v2473 = vld [vmem:[%s344 + $0x78] sm:$0xff]
          %v2474 = vld [vmem:[%s344 + $0x80] sm:$0xff]
          %v2475 = vld [vmem:[%s344 + $0x88] sm:$0xff]
          %v2476 = vld [vmem:[%s344 + $0x90] sm:$0xff]
          %v2477 = vld [vmem:[%s344 + $0x98] sm:$0xff]
          %v2478 = vld [vmem:[%s344 + $0xa0] sm:$0xff]
          %v2479 = vld [vmem:[%s344 + $0xa8] sm:$0xff]
          %v2480 = vld [vmem:[%s344 + $0xb0] sm:$0xff]
          %v2481 = vld [vmem:[%s344 + $0xb8] sm:$0xff]
          %v2482 = vld [vmem:[%s344 + $0xc0] sm:$0xff]
          %v2483 = vld [vmem:[%s344 + $0xc8] sm:$0xff]
          %v2484 = vld [vmem:[%s344 + $0xd0] sm:$0xff]
          %v2485 = vld [vmem:[%s344 + $0xd8] sm:$0xff]
          %v2486 = vld [vmem:[%s344 + $0xe0] sm:$0xff]
          %v2487 = vld [vmem:[%s344 + $0xe8] sm:$0xff]
          %v2488 = vld [vmem:[%s344 + $0xf0] sm:$0xff]
          %v2489 = vld [vmem:[%s344 + $0xf8] sm:$0xff]
          %v2490 = vunpack.c.l.bf16 %v2458
          %v2491 = vunpack.c.h.bf16 %v2458
          %v2492 = vunpack.c.l.bf16 %v2459
          %v2493 = vunpack.c.h.bf16 %v2459
          %v2494 = vunpack.c.l.bf16 %v2460
          %v2495 = vunpack.c.h.bf16 %v2460
          %v2496 = vunpack.c.l.bf16 %v2461
          %v2497 = vunpack.c.h.bf16 %v2461
          %v2498 = vunpack.c.l.bf16 %v2462
          %v2499 = vunpack.c.h.bf16 %v2462
          %v2500 = vunpack.c.l.bf16 %v2463
          %v2501 = vunpack.c.h.bf16 %v2463
          %v2502 = vunpack.c.l.bf16 %v2464
          %v2503 = vunpack.c.h.bf16 %v2464
          %v2504 = vunpack.c.l.bf16 %v2465
          %v2505 = vunpack.c.h.bf16 %v2465
          %v2506 = vunpack.c.l.bf16 %v2466
          %v2507 = vunpack.c.h.bf16 %v2466
          %v2508 = vunpack.c.l.bf16 %v2467
          %v2509 = vunpack.c.h.bf16 %v2467
          %v2510 = vunpack.c.l.bf16 %v2468
          %v2511 = vunpack.c.h.bf16 %v2468
          %v2512 = vunpack.c.l.bf16 %v2469
          %v2513 = vunpack.c.h.bf16 %v2469
          %v2514 = vunpack.c.l.bf16 %v2470
          %v2515 = vunpack.c.h.bf16 %v2470
          %v2516 = vunpack.c.l.bf16 %v2471
          %v2517 = vunpack.c.h.bf16 %v2471
          %v2518 = vunpack.c.l.bf16 %v2472
          %v2519 = vunpack.c.h.bf16 %v2472
          %v2520 = vunpack.c.l.bf16 %v2473
          %v2521 = vunpack.c.h.bf16 %v2473
          %v2522 = vunpack.c.l.bf16 %v2474
          %v2523 = vunpack.c.h.bf16 %v2474
          %v2524 = vunpack.c.l.bf16 %v2475
          %v2525 = vunpack.c.h.bf16 %v2475
          %v2526 = vunpack.c.l.bf16 %v2476
          %v2527 = vunpack.c.h.bf16 %v2476
          %v2528 = vunpack.c.l.bf16 %v2477
          %v2529 = vunpack.c.h.bf16 %v2477
          %v2530 = vunpack.c.l.bf16 %v2478
          %v2531 = vunpack.c.h.bf16 %v2478
          %v2532 = vunpack.c.l.bf16 %v2479
          %v2533 = vunpack.c.h.bf16 %v2479
          %v2534 = vunpack.c.l.bf16 %v2480
          %v2535 = vunpack.c.h.bf16 %v2480
          %v2536 = vunpack.c.l.bf16 %v2481
          %v2537 = vunpack.c.h.bf16 %v2481
          %v2538 = vunpack.c.l.bf16 %v2482
          %v2539 = vunpack.c.h.bf16 %v2482
          %v2540 = vunpack.c.l.bf16 %v2483
          %v2541 = vunpack.c.h.bf16 %v2483
          %v2542 = vunpack.c.l.bf16 %v2484
          %v2543 = vunpack.c.h.bf16 %v2484
          %v2544 = vunpack.c.l.bf16 %v2485
          %v2545 = vunpack.c.h.bf16 %v2485
          %v2546 = vunpack.c.l.bf16 %v2486
          %v2547 = vunpack.c.h.bf16 %v2486
          %v2548 = vunpack.c.l.bf16 %v2487
          %v2549 = vunpack.c.h.bf16 %v2487
          %v2550 = vunpack.c.l.bf16 %v2488
          %v2551 = vunpack.c.h.bf16 %v2488
          %v2552 = vunpack.c.l.bf16 %v2489
          %v2553 = vunpack.c.h.bf16 %v2489
          %v2554 = vsub.f32 %v2394, %v2490
          %v2555 = vsub.f32 %v2395, %v2491
          %v2556 = vsub.f32 %v2396, %v2492
          %v2557 = vsub.f32 %v2397, %v2493
          %v2558 = vsub.f32 %v2398, %v2494
          %v2559 = vsub.f32 %v2399, %v2495
          %v2560 = vsub.f32 %v2400, %v2496
          %v2561 = vsub.f32 %v2401, %v2497
          %v2562 = vsub.f32 %v2402, %v2498
          %v2563 = vsub.f32 %v2403, %v2499
          %v2564 = vsub.f32 %v2404, %v2500
          %v2565 = vsub.f32 %v2405, %v2501
          %v2566 = vsub.f32 %v2406, %v2502
          %v2567 = vsub.f32 %v2407, %v2503
          %v2568 = vsub.f32 %v2408, %v2504
          %v2569 = vsub.f32 %v2409, %v2505
          %v2570 = vsub.f32 %v2410, %v2506
          %v2571 = vsub.f32 %v2411, %v2507
          %v2572 = vsub.f32 %v2412, %v2508
          %v2573 = vsub.f32 %v2413, %v2509
          %v2574 = vsub.f32 %v2414, %v2510
          %v2575 = vsub.f32 %v2415, %v2511
          %v2576 = vsub.f32 %v2416, %v2512
          %v2577 = vsub.f32 %v2417, %v2513
          %v2578 = vsub.f32 %v2418, %v2514
          %v2579 = vsub.f32 %v2419, %v2515
          %v2580 = vsub.f32 %v2420, %v2516
          %v2581 = vsub.f32 %v2421, %v2517
          %v2582 = vsub.f32 %v2422, %v2518
          %v2583 = vsub.f32 %v2423, %v2519
          %v2584 = vsub.f32 %v2424, %v2520
          %v2585 = vsub.f32 %v2425, %v2521
          %v2586 = vsub.f32 %v2426, %v2522
          %v2587 = vsub.f32 %v2427, %v2523
          %v2588 = vsub.f32 %v2428, %v2524
          %v2589 = vsub.f32 %v2429, %v2525
          %v2590 = vsub.f32 %v2430, %v2526
          %v2591 = vsub.f32 %v2431, %v2527
          %v2592 = vsub.f32 %v2432, %v2528
          %v2593 = vsub.f32 %v2433, %v2529
          %v2594 = vsub.f32 %v2434, %v2530
          %v2595 = vsub.f32 %v2435, %v2531
          %v2596 = vsub.f32 %v2436, %v2532
          %v2597 = vsub.f32 %v2437, %v2533
          %v2598 = vsub.f32 %v2438, %v2534
          %v2599 = vsub.f32 %v2439, %v2535
          %v2600 = vsub.f32 %v2440, %v2536
          %v2601 = vsub.f32 %v2441, %v2537
          %v2602 = vsub.f32 %v2442, %v2538
          %v2603 = vsub.f32 %v2443, %v2539
          %v2604 = vsub.f32 %v2444, %v2540
          %v2605 = vsub.f32 %v2445, %v2541
          %v2606 = vsub.f32 %v2446, %v2542
          %v2607 = vsub.f32 %v2447, %v2543
          %v2608 = vsub.f32 %v2448, %v2544
          %v2609 = vsub.f32 %v2449, %v2545
          %v2610 = vsub.f32 %v2450, %v2546
          %v2611 = vsub.f32 %v2451, %v2547
          %v2612 = vsub.f32 %v2452, %v2548
          %v2613 = vsub.f32 %v2453, %v2549
          %v2614 = vsub.f32 %v2454, %v2550
          %v2615 = vsub.f32 %v2455, %v2551
          %v2616 = vsub.f32 %v2456, %v2552
          %v2617 = vsub.f32 %v2457, %v2553
          %v2618 = vld [vmem:[#allocation7] sm:$0x1]
          %v2619 = vmul.f32 %v2554, %v2554
          %v2620 = vmul.f32 %v2555, %v2555
          %v2621 = vmul.f32 %v2556, %v2556
          %v2622 = vmul.f32 %v2557, %v2557
          %v2623 = vmul.f32 %v2558, %v2558
          %v2624 = vmul.f32 %v2559, %v2559
          %v2625 = vmul.f32 %v2560, %v2560
          %v2626 = vmul.f32 %v2561, %v2561
          %v2627 = vmul.f32 %v2562, %v2562
          %v2628 = vmul.f32 %v2563, %v2563
          %v2629 = vmul.f32 %v2564, %v2564
          %v2630 = vmul.f32 %v2565, %v2565
          %v2631 = vmul.f32 %v2566, %v2566
          %v2632 = vmul.f32 %v2567, %v2567
          %v2633 = vmul.f32 %v2568, %v2568
          %v2634 = vmul.f32 %v2569, %v2569
          %v2635 = vmul.f32 %v2570, %v2570
          %v2636 = vmul.f32 %v2571, %v2571
          %v2637 = vmul.f32 %v2572, %v2572
          %v2638 = vmul.f32 %v2573, %v2573
          %v2639 = vmul.f32 %v2574, %v2574
          %v2640 = vmul.f32 %v2575, %v2575
          %v2641 = vmul.f32 %v2576, %v2576
          %v2642 = vmul.f32 %v2577, %v2577
          %v2643 = vmul.f32 %v2578, %v2578
          %v2644 = vmul.f32 %v2579, %v2579
          %v2645 = vmul.f32 %v2580, %v2580
          %v2646 = vmul.f32 %v2581, %v2581
          %v2647 = vmul.f32 %v2582, %v2582
          %v2648 = vmul.f32 %v2583, %v2583
          %v2649 = vmul.f32 %v2584, %v2584
          %v2650 = vmul.f32 %v2585, %v2585
          %v2651 = vmul.f32 %v2586, %v2586
          %v2652 = vmul.f32 %v2587, %v2587
          %v2653 = vmul.f32 %v2588, %v2588
          %v2654 = vmul.f32 %v2589, %v2589
          %v2655 = vmul.f32 %v2590, %v2590
          %v2656 = vmul.f32 %v2591, %v2591
          %v2657 = vmul.f32 %v2592, %v2592
          %v2658 = vmul.f32 %v2593, %v2593
          %v2659 = vmul.f32 %v2594, %v2594
          %v2660 = vmul.f32 %v2595, %v2595
          %v2661 = vmul.f32 %v2596, %v2596
          %v2662 = vmul.f32 %v2597, %v2597
          %v2663 = vmul.f32 %v2598, %v2598
          %v2664 = vmul.f32 %v2599, %v2599
          %v2665 = vmul.f32 %v2600, %v2600
          %v2666 = vmul.f32 %v2601, %v2601
          %v2667 = vmul.f32 %v2602, %v2602
          %v2668 = vmul.f32 %v2603, %v2603
          %v2669 = vmul.f32 %v2604, %v2604
          %v2670 = vmul.f32 %v2605, %v2605
          %v2671 = vmul.f32 %v2606, %v2606
          %v2672 = vmul.f32 %v2607, %v2607
          %v2673 = vmul.f32 %v2608, %v2608
          %v2674 = vmul.f32 %v2609, %v2609
          %v2675 = vmul.f32 %v2610, %v2610
          %v2676 = vmul.f32 %v2611, %v2611
          %v2677 = vmul.f32 %v2612, %v2612
          %v2678 = vmul.f32 %v2613, %v2613
          %v2679 = vmul.f32 %v2614, %v2614
          %v2680 = vmul.f32 %v2615, %v2615
          %v2681 = vmul.f32 %v2616, %v2616
          %v2682 = vmul.f32 %v2617, %v2617
          %v2683 = vadd.f32 %v2619, %v2620
          %v2684 = vadd.f32 %v2683, %v2621
          %v2685 = vadd.f32 %v2684, %v2622
          %v2686 = vadd.f32 %v2685, %v2623
          %v2687 = vadd.f32 %v2686, %v2624
          %v2688 = vadd.f32 %v2687, %v2625
          %v2689 = vadd.f32 %v2688, %v2626
          %v2690 = vadd.f32 %v2689, %v2627
          %v2691 = vadd.f32 %v2690, %v2628
          %v2692 = vadd.f32 %v2691, %v2629
          %v2693 = vadd.f32 %v2692, %v2630
          %v2694 = vadd.f32 %v2693, %v2631
          %v2695 = vadd.f32 %v2694, %v2632
          %v2696 = vadd.f32 %v2695, %v2633
          %v2697 = vadd.f32 %v2696, %v2634
          %v2698 = vadd.f32 %v2697, %v2635
          %v2699 = vadd.f32 %v2698, %v2636
          %v2700 = vadd.f32 %v2699, %v2637
          %v2701 = vadd.f32 %v2700, %v2638
          %v2702 = vadd.f32 %v2701, %v2639
          %v2703 = vadd.f32 %v2702, %v2640
          %v2704 = vadd.f32 %v2703, %v2641
          %v2705 = vadd.f32 %v2704, %v2642
          %v2706 = vadd.f32 %v2705, %v2643
          %v2707 = vadd.f32 %v2706, %v2644
          %v2708 = vadd.f32 %v2707, %v2645
          %v2709 = vadd.f32 %v2708, %v2646
          %v2710 = vadd.f32 %v2709, %v2647
          %v2711 = vadd.f32 %v2710, %v2648
          %v2712 = vadd.f32 %v2711, %v2649
          %v2713 = vadd.f32 %v2712, %v2650
          %v2714 = vadd.f32 %v2713, %v2651
          %v2715 = vadd.f32 %v2714, %v2652
          %v2716 = vadd.f32 %v2715, %v2653
          %v2717 = vadd.f32 %v2716, %v2654
          %v2718 = vadd.f32 %v2717, %v2655
          %v2719 = vadd.f32 %v2718, %v2656
          %v2720 = vadd.f32 %v2719, %v2657
          %v2721 = vadd.f32 %v2720, %v2658
          %v2722 = vadd.f32 %v2721, %v2659
          %v2723 = vadd.f32 %v2722, %v2660
          %v2724 = vadd.f32 %v2723, %v2661
          %v2725 = vadd.f32 %v2724, %v2662
          %v2726 = vadd.f32 %v2725, %v2663
          %v2727 = vadd.f32 %v2726, %v2664
          %v2728 = vadd.f32 %v2727, %v2665
          %v2729 = vadd.f32 %v2728, %v2666
          %v2730 = vadd.f32 %v2729, %v2667
          %v2731 = vadd.f32 %v2730, %v2668
          %v2732 = vadd.f32 %v2731, %v2669
          %v2733 = vadd.f32 %v2732, %v2670
          %v2734 = vadd.f32 %v2733, %v2671
          %v2735 = vadd.f32 %v2734, %v2672
          %v2736 = vadd.f32 %v2735, %v2673
          %v2737 = vadd.f32 %v2736, %v2674
          %v2738 = vadd.f32 %v2737, %v2675
          %v2739 = vadd.f32 %v2738, %v2676
          %v2740 = vadd.f32 %v2739, %v2677
          %v2741 = vadd.f32 %v2740, %v2678
          %v2742 = vadd.f32 %v2741, %v2679
          %v2743 = vadd.f32 %v2742, %v2680
          %v2744 = vadd.f32 %v2743, %v2681
          %v2745 = vadd.f32 %v2744, %v2682
          %2746 = vadd.xlane.f32.xlu0 %v2745
          %v2747 = vpop.xlane.xlu0 %2746
          %v2748 = vrot.slane %v2747, 4
          %v2749 = vadd.f32 %v2747, %v2748
          %v2750 = vrot.slane %v2749, 2
          %v2751 = vadd.f32 %v2749, %v2750
          %v2752 = vrot.slane %v2751, 1
          %v2753 = vadd.f32 %v2751, %v2752
          %s2754 = vtos %v2753
          %v2755 = vstv %s2754
          %v2756 = vadd.f32 %v2618, %v2755
          %vm2757 = vcmask 0
          %2758 = vst.msk [vmem:[#allocation7] sm:$0x1] %vm2757, %v2756
        $region92: #{tpu_custom_call.1} parent=39 // pred_fallthru
          _
        // Predicated region
        $region93: #{tpu_custom_call.1} parent=39 // pred_check
          %p2759 = pneg %p1297
        $region94: #{tpu_custom_call.1} parent=39 // pred_check_branch
          %2761 = sbr.rel (%p2759) target = $region96
        $region95: #{tpu_custom_call.1} parent=39 // pred_region
          %v2762 = vld [vmem:[%s374] sm:$0xff]
          %v2763 = vld [vmem:[%s374 + $0x8] sm:$0xff]
          %v2764 = vld [vmem:[%s374 + $0x10] sm:$0xff]
          %v2765 = vld [vmem:[%s374 + $0x18] sm:$0xff]
          %v2766 = vld [vmem:[%s374 + $0x20] sm:$0xff]
          %v2767 = vld [vmem:[%s374 + $0x28] sm:$0xff]
          %v2768 = vld [vmem:[%s374 + $0x30] sm:$0xff]
          %v2769 = vld [vmem:[%s374 + $0x38] sm:$0xff]
          %v2770 = vld [vmem:[%s374 + $0x40] sm:$0xff]
          %v2771 = vld [vmem:[%s374 + $0x48] sm:$0xff]
          %v2772 = vld [vmem:[%s374 + $0x50] sm:$0xff]
          %v2773 = vld [vmem:[%s374 + $0x58] sm:$0xff]
          %v2774 = vld [vmem:[%s374 + $0x60] sm:$0xff]
          %v2775 = vld [vmem:[%s374 + $0x68] sm:$0xff]
          %v2776 = vld [vmem:[%s374 + $0x70] sm:$0xff]
          %v2777 = vld [vmem:[%s374 + $0x78] sm:$0xff]
          %v2778 = vld [vmem:[%s374 + $0x80] sm:$0xff]
          %v2779 = vld [vmem:[%s374 + $0x88] sm:$0xff]
          %v2780 = vld [vmem:[%s374 + $0x90] sm:$0xff]
          %v2781 = vld [vmem:[%s374 + $0x98] sm:$0xff]
          %v2782 = vld [vmem:[%s374 + $0xa0] sm:$0xff]
          %v2783 = vld [vmem:[%s374 + $0xa8] sm:$0xff]
          %v2784 = vld [vmem:[%s374 + $0xb0] sm:$0xff]
          %v2785 = vld [vmem:[%s374 + $0xb8] sm:$0xff]
          %v2786 = vld [vmem:[%s374 + $0xc0] sm:$0xff]
          %v2787 = vld [vmem:[%s374 + $0xc8] sm:$0xff]
          %v2788 = vld [vmem:[%s374 + $0xd0] sm:$0xff]
          %v2789 = vld [vmem:[%s374 + $0xd8] sm:$0xff]
          %v2790 = vld [vmem:[%s374 + $0xe0] sm:$0xff]
          %v2791 = vld [vmem:[%s374 + $0xe8] sm:$0xff]
          %v2792 = vld [vmem:[%s374 + $0xf0] sm:$0xff]
          %v2793 = vld [vmem:[%s374 + $0xf8] sm:$0xff]
          %v2794 = vunpack.c.l.bf16 %v2762
          %v2795 = vunpack.c.h.bf16 %v2762
          %v2796 = vunpack.c.l.bf16 %v2763
          %v2797 = vunpack.c.h.bf16 %v2763
          %v2798 = vunpack.c.l.bf16 %v2764
          %v2799 = vunpack.c.h.bf16 %v2764
          %v2800 = vunpack.c.l.bf16 %v2765
          %v2801 = vunpack.c.h.bf16 %v2765
          %v2802 = vunpack.c.l.bf16 %v2766
          %v2803 = vunpack.c.h.bf16 %v2766
          %v2804 = vunpack.c.l.bf16 %v2767
          %v2805 = vunpack.c.h.bf16 %v2767
          %v2806 = vunpack.c.l.bf16 %v2768
          %v2807 = vunpack.c.h.bf16 %v2768
          %v2808 = vunpack.c.l.bf16 %v2769
          %v2809 = vunpack.c.h.bf16 %v2769
          %v2810 = vunpack.c.l.bf16 %v2770
          %v2811 = vunpack.c.h.bf16 %v2770
          %v2812 = vunpack.c.l.bf16 %v2771
          %v2813 = vunpack.c.h.bf16 %v2771
          %v2814 = vunpack.c.l.bf16 %v2772
          %v2815 = vunpack.c.h.bf16 %v2772
          %v2816 = vunpack.c.l.bf16 %v2773
          %v2817 = vunpack.c.h.bf16 %v2773
          %v2818 = vunpack.c.l.bf16 %v2774
          %v2819 = vunpack.c.h.bf16 %v2774
          %v2820 = vunpack.c.l.bf16 %v2775
          %v2821 = vunpack.c.h.bf16 %v2775
          %v2822 = vunpack.c.l.bf16 %v2776
          %v2823 = vunpack.c.h.bf16 %v2776
          %v2824 = vunpack.c.l.bf16 %v2777
          %v2825 = vunpack.c.h.bf16 %v2777
          %v2826 = vunpack.c.l.bf16 %v2778
          %v2827 = vunpack.c.h.bf16 %v2778
          %v2828 = vunpack.c.l.bf16 %v2779
          %v2829 = vunpack.c.h.bf16 %v2779
          %v2830 = vunpack.c.l.bf16 %v2780
          %v2831 = vunpack.c.h.bf16 %v2780
          %v2832 = vunpack.c.l.bf16 %v2781
          %v2833 = vunpack.c.h.bf16 %v2781
          %v2834 = vunpack.c.l.bf16 %v2782
          %v2835 = vunpack.c.h.bf16 %v2782
          %v2836 = vunpack.c.l.bf16 %v2783
          %v2837 = vunpack.c.h.bf16 %v2783
          %v2838 = vunpack.c.l.bf16 %v2784
          %v2839 = vunpack.c.h.bf16 %v2784
          %v2840 = vunpack.c.l.bf16 %v2785
          %v2841 = vunpack.c.h.bf16 %v2785
          %v2842 = vunpack.c.l.bf16 %v2786
          %v2843 = vunpack.c.h.bf16 %v2786
          %v2844 = vunpack.c.l.bf16 %v2787
          %v2845 = vunpack.c.h.bf16 %v2787
          %v2846 = vunpack.c.l.bf16 %v2788
          %v2847 = vunpack.c.h.bf16 %v2788
          %v2848 = vunpack.c.l.bf16 %v2789
          %v2849 = vunpack.c.h.bf16 %v2789
          %v2850 = vunpack.c.l.bf16 %v2790
          %v2851 = vunpack.c.h.bf16 %v2790
          %v2852 = vunpack.c.l.bf16 %v2791
          %v2853 = vunpack.c.h.bf16 %v2791
          %v2854 = vunpack.c.l.bf16 %v2792
          %v2855 = vunpack.c.h.bf16 %v2792
          %v2856 = vunpack.c.l.bf16 %v2793
          %v2857 = vunpack.c.h.bf16 %v2793
          %v2858 = vld [vmem:[%s354] sm:$0xff]
          %v2859 = vld [vmem:[%s354 + $0x8] sm:$0xff]
          %v2860 = vld [vmem:[%s354 + $0x10] sm:$0xff]
          %v2861 = vld [vmem:[%s354 + $0x18] sm:$0xff]
          %v2862 = vld [vmem:[%s354 + $0x20] sm:$0xff]
          %v2863 = vld [vmem:[%s354 + $0x28] sm:$0xff]
          %v2864 = vld [vmem:[%s354 + $0x30] sm:$0xff]
          %v2865 = vld [vmem:[%s354 + $0x38] sm:$0xff]
          %v2866 = vld [vmem:[%s354 + $0x40] sm:$0xff]
          %v2867 = vld [vmem:[%s354 + $0x48] sm:$0xff]
          %v2868 = vld [vmem:[%s354 + $0x50] sm:$0xff]
          %v2869 = vld [vmem:[%s354 + $0x58] sm:$0xff]
          %v2870 = vld [vmem:[%s354 + $0x60] sm:$0xff]
          %v2871 = vld [vmem:[%s354 + $0x68] sm:$0xff]
          %v2872 = vld [vmem:[%s354 + $0x70] sm:$0xff]
          %v2873 = vld [vmem:[%s354 + $0x78] sm:$0xff]
          %v2874 = vld [vmem:[%s354 + $0x80] sm:$0xff]
          %v2875 = vld [vmem:[%s354 + $0x88] sm:$0xff]
          %v2876 = vld [vmem:[%s354 + $0x90] sm:$0xff]
          %v2877 = vld [vmem:[%s354 + $0x98] sm:$0xff]
          %v2878 = vld [vmem:[%s354 + $0xa0] sm:$0xff]
          %v2879 = vld [vmem:[%s354 + $0xa8] sm:$0xff]
          %v2880 = vld [vmem:[%s354 + $0xb0] sm:$0xff]
          %v2881 = vld [vmem:[%s354 + $0xb8] sm:$0xff]
          %v2882 = vld [vmem:[%s354 + $0xc0] sm:$0xff]
          %v2883 = vld [vmem:[%s354 + $0xc8] sm:$0xff]
          %v2884 = vld [vmem:[%s354 + $0xd0] sm:$0xff]
          %v2885 = vld [vmem:[%s354 + $0xd8] sm:$0xff]
          %v2886 = vld [vmem:[%s354 + $0xe0] sm:$0xff]
          %v2887 = vld [vmem:[%s354 + $0xe8] sm:$0xff]
          %v2888 = vld [vmem:[%s354 + $0xf0] sm:$0xff]
          %v2889 = vld [vmem:[%s354 + $0xf8] sm:$0xff]
          %v2890 = vunpack.c.l.bf16 %v2858
          %v2891 = vunpack.c.h.bf16 %v2858
          %v2892 = vunpack.c.l.bf16 %v2859
          %v2893 = vunpack.c.h.bf16 %v2859
          %v2894 = vunpack.c.l.bf16 %v2860
          %v2895 = vunpack.c.h.bf16 %v2860
          %v2896 = vunpack.c.l.bf16 %v2861
          %v2897 = vunpack.c.h.bf16 %v2861
          %v2898 = vunpack.c.l.bf16 %v2862
          %v2899 = vunpack.c.h.bf16 %v2862
          %v2900 = vunpack.c.l.bf16 %v2863
          %v2901 = vunpack.c.h.bf16 %v2863
          %v2902 = vunpack.c.l.bf16 %v2864
          %v2903 = vunpack.c.h.bf16 %v2864
          %v2904 = vunpack.c.l.bf16 %v2865
          %v2905 = vunpack.c.h.bf16 %v2865
          %v2906 = vunpack.c.l.bf16 %v2866
          %v2907 = vunpack.c.h.bf16 %v2866
          %v2908 = vunpack.c.l.bf16 %v2867
          %v2909 = vunpack.c.h.bf16 %v2867
          %v2910 = vunpack.c.l.bf16 %v2868
          %v2911 = vunpack.c.h.bf16 %v2868
          %v2912 = vunpack.c.l.bf16 %v2869
          %v2913 = vunpack.c.h.bf16 %v2869
          %v2914 = vunpack.c.l.bf16 %v2870
          %v2915 = vunpack.c.h.bf16 %v2870
          %v2916 = vunpack.c.l.bf16 %v2871
          %v2917 = vunpack.c.h.bf16 %v2871
          %v2918 = vunpack.c.l.bf16 %v2872
          %v2919 = vunpack.c.h.bf16 %v2872
          %v2920 = vunpack.c.l.bf16 %v2873
          %v2921 = vunpack.c.h.bf16 %v2873
          %v2922 = vunpack.c.l.bf16 %v2874
          %v2923 = vunpack.c.h.bf16 %v2874
          %v2924 = vunpack.c.l.bf16 %v2875
          %v2925 = vunpack.c.h.bf16 %v2875
          %v2926 = vunpack.c.l.bf16 %v2876
          %v2927 = vunpack.c.h.bf16 %v2876
          %v2928 = vunpack.c.l.bf16 %v2877
          %v2929 = vunpack.c.h.bf16 %v2877
          %v2930 = vunpack.c.l.bf16 %v2878
          %v2931 = vunpack.c.h.bf16 %v2878
          %v2932 = vunpack.c.l.bf16 %v2879
          %v2933 = vunpack.c.h.bf16 %v2879
          %v2934 = vunpack.c.l.bf16 %v2880
          %v2935 = vunpack.c.h.bf16 %v2880
          %v2936 = vunpack.c.l.bf16 %v2881
          %v2937 = vunpack.c.h.bf16 %v2881
          %v2938 = vunpack.c.l.bf16 %v2882
          %v2939 = vunpack.c.h.bf16 %v2882
          %v2940 = vunpack.c.l.bf16 %v2883
          %v2941 = vunpack.c.h.bf16 %v2883
          %v2942 = vunpack.c.l.bf16 %v2884
          %v2943 = vunpack.c.h.bf16 %v2884
          %v2944 = vunpack.c.l.bf16 %v2885
          %v2945 = vunpack.c.h.bf16 %v2885
          %v2946 = vunpack.c.l.bf16 %v2886
          %v2947 = vunpack.c.h.bf16 %v2886
          %v2948 = vunpack.c.l.bf16 %v2887
          %v2949 = vunpack.c.h.bf16 %v2887
          %v2950 = vunpack.c.l.bf16 %v2888
          %v2951 = vunpack.c.h.bf16 %v2888
          %v2952 = vunpack.c.l.bf16 %v2889
          %v2953 = vunpack.c.h.bf16 %v2889
          %v2954 = vsub.f32 %v2794, %v2890
          %v2955 = vsub.f32 %v2795, %v2891
          %v2956 = vsub.f32 %v2796, %v2892
          %v2957 = vsub.f32 %v2797, %v2893
          %v2958 = vsub.f32 %v2798, %v2894
          %v2959 = vsub.f32 %v2799, %v2895
          %v2960 = vsub.f32 %v2800, %v2896
          %v2961 = vsub.f32 %v2801, %v2897
          %v2962 = vsub.f32 %v2802, %v2898
          %v2963 = vsub.f32 %v2803, %v2899
          %v2964 = vsub.f32 %v2804, %v2900
          %v2965 = vsub.f32 %v2805, %v2901
          %v2966 = vsub.f32 %v2806, %v2902
          %v2967 = vsub.f32 %v2807, %v2903
          %v2968 = vsub.f32 %v2808, %v2904
          %v2969 = vsub.f32 %v2809, %v2905
          %v2970 = vsub.f32 %v2810, %v2906
          %v2971 = vsub.f32 %v2811, %v2907
          %v2972 = vsub.f32 %v2812, %v2908
          %v2973 = vsub.f32 %v2813, %v2909
          %v2974 = vsub.f32 %v2814, %v2910
          %v2975 = vsub.f32 %v2815, %v2911
          %v2976 = vsub.f32 %v2816, %v2912
          %v2977 = vsub.f32 %v2817, %v2913
          %v2978 = vsub.f32 %v2818, %v2914
          %v2979 = vsub.f32 %v2819, %v2915
          %v2980 = vsub.f32 %v2820, %v2916
          %v2981 = vsub.f32 %v2821, %v2917
          %v2982 = vsub.f32 %v2822, %v2918
          %v2983 = vsub.f32 %v2823, %v2919
          %v2984 = vsub.f32 %v2824, %v2920
          %v2985 = vsub.f32 %v2825, %v2921
          %v2986 = vsub.f32 %v2826, %v2922
          %v2987 = vsub.f32 %v2827, %v2923
          %v2988 = vsub.f32 %v2828, %v2924
          %v2989 = vsub.f32 %v2829, %v2925
          %v2990 = vsub.f32 %v2830, %v2926
          %v2991 = vsub.f32 %v2831, %v2927
          %v2992 = vsub.f32 %v2832, %v2928
          %v2993 = vsub.f32 %v2833, %v2929
          %v2994 = vsub.f32 %v2834, %v2930
          %v2995 = vsub.f32 %v2835, %v2931
          %v2996 = vsub.f32 %v2836, %v2932
          %v2997 = vsub.f32 %v2837, %v2933
          %v2998 = vsub.f32 %v2838, %v2934
          %v2999 = vsub.f32 %v2839, %v2935
          %v3000 = vsub.f32 %v2840, %v2936
          %v3001 = vsub.f32 %v2841, %v2937
          %v3002 = vsub.f32 %v2842, %v2938
          %v3003 = vsub.f32 %v2843, %v2939
          %v3004 = vsub.f32 %v2844, %v2940
          %v3005 = vsub.f32 %v2845, %v2941
          %v3006 = vsub.f32 %v2846, %v2942
          %v3007 = vsub.f32 %v2847, %v2943
          %v3008 = vsub.f32 %v2848, %v2944
          %v3009 = vsub.f32 %v2849, %v2945
          %v3010 = vsub.f32 %v2850, %v2946
          %v3011 = vsub.f32 %v2851, %v2947
          %v3012 = vsub.f32 %v2852, %v2948
          %v3013 = vsub.f32 %v2853, %v2949
          %v3014 = vsub.f32 %v2854, %v2950
          %v3015 = vsub.f32 %v2855, %v2951
          %v3016 = vsub.f32 %v2856, %v2952
          %v3017 = vsub.f32 %v2857, %v2953
          %v3018 = vld [vmem:[#allocation8] sm:$0x1]
          %v3019 = vmul.f32 %v2954, %v2954
          %v3020 = vmul.f32 %v2955, %v2955
          %v3021 = vmul.f32 %v2956, %v2956
          %v3022 = vmul.f32 %v2957, %v2957
          %v3023 = vmul.f32 %v2958, %v2958
          %v3024 = vmul.f32 %v2959, %v2959
          %v3025 = vmul.f32 %v2960, %v2960
          %v3026 = vmul.f32 %v2961, %v2961
          %v3027 = vmul.f32 %v2962, %v2962
          %v3028 = vmul.f32 %v2963, %v2963
          %v3029 = vmul.f32 %v2964, %v2964
          %v3030 = vmul.f32 %v2965, %v2965
          %v3031 = vmul.f32 %v2966, %v2966
          %v3032 = vmul.f32 %v2967, %v2967
          %v3033 = vmul.f32 %v2968, %v2968
          %v3034 = vmul.f32 %v2969, %v2969
          %v3035 = vmul.f32 %v2970, %v2970
          %v3036 = vmul.f32 %v2971, %v2971
          %v3037 = vmul.f32 %v2972, %v2972
          %v3038 = vmul.f32 %v2973, %v2973
          %v3039 = vmul.f32 %v2974, %v2974
          %v3040 = vmul.f32 %v2975, %v2975
          %v3041 = vmul.f32 %v2976, %v2976
          %v3042 = vmul.f32 %v2977, %v2977
          %v3043 = vmul.f32 %v2978, %v2978
          %v3044 = vmul.f32 %v2979, %v2979
          %v3045 = vmul.f32 %v2980, %v2980
          %v3046 = vmul.f32 %v2981, %v2981
          %v3047 = vmul.f32 %v2982, %v2982
          %v3048 = vmul.f32 %v2983, %v2983
          %v3049 = vmul.f32 %v2984, %v2984
          %v3050 = vmul.f32 %v2985, %v2985
          %v3051 = vmul.f32 %v2986, %v2986
          %v3052 = vmul.f32 %v2987, %v2987
          %v3053 = vmul.f32 %v2988, %v2988
          %v3054 = vmul.f32 %v2989, %v2989
          %v3055 = vmul.f32 %v2990, %v2990
          %v3056 = vmul.f32 %v2991, %v2991
          %v3057 = vmul.f32 %v2992, %v2992
          %v3058 = vmul.f32 %v2993, %v2993
          %v3059 = vmul.f32 %v2994, %v2994
          %v3060 = vmul.f32 %v2995, %v2995
          %v3061 = vmul.f32 %v2996, %v2996
          %v3062 = vmul.f32 %v2997, %v2997
          %v3063 = vmul.f32 %v2998, %v2998
          %v3064 = vmul.f32 %v2999, %v2999
          %v3065 = vmul.f32 %v3000, %v3000
          %v3066 = vmul.f32 %v3001, %v3001
          %v3067 = vmul.f32 %v3002, %v3002
          %v3068 = vmul.f32 %v3003, %v3003
          %v3069 = vmul.f32 %v3004, %v3004
          %v3070 = vmul.f32 %v3005, %v3005
          %v3071 = vmul.f32 %v3006, %v3006
          %v3072 = vmul.f32 %v3007, %v3007
          %v3073 = vmul.f32 %v3008, %v3008
          %v3074 = vmul.f32 %v3009, %v3009
          %v3075 = vmul.f32 %v3010, %v3010
          %v3076 = vmul.f32 %v3011, %v3011
          %v3077 = vmul.f32 %v3012, %v3012
          %v3078 = vmul.f32 %v3013, %v3013
          %v3079 = vmul.f32 %v3014, %v3014
          %v3080 = vmul.f32 %v3015, %v3015
          %v3081 = vmul.f32 %v3016, %v3016
          %v3082 = vmul.f32 %v3017, %v3017
          %v3083 = vadd.f32 %v3019, %v3020
          %v3084 = vadd.f32 %v3083, %v3021
          %v3085 = vadd.f32 %v3084, %v3022
          %v3086 = vadd.f32 %v3085, %v3023
          %v3087 = vadd.f32 %v3086, %v3024
          %v3088 = vadd.f32 %v3087, %v3025
          %v3089 = vadd.f32 %v3088, %v3026
          %v3090 = vadd.f32 %v3089, %v3027
          %v3091 = vadd.f32 %v3090, %v3028
          %v3092 = vadd.f32 %v3091, %v3029
          %v3093 = vadd.f32 %v3092, %v3030
          %v3094 = vadd.f32 %v3093, %v3031
          %v3095 = vadd.f32 %v3094, %v3032
          %v3096 = vadd.f32 %v3095, %v3033
          %v3097 = vadd.f32 %v3096, %v3034
          %v3098 = vadd.f32 %v3097, %v3035
          %v3099 = vadd.f32 %v3098, %v3036
          %v3100 = vadd.f32 %v3099, %v3037
          %v3101 = vadd.f32 %v3100, %v3038
          %v3102 = vadd.f32 %v3101, %v3039
          %v3103 = vadd.f32 %v3102, %v3040
          %v3104 = vadd.f32 %v3103, %v3041
          %v3105 = vadd.f32 %v3104, %v3042
          %v3106 = vadd.f32 %v3105, %v3043
          %v3107 = vadd.f32 %v3106, %v3044
          %v3108 = vadd.f32 %v3107, %v3045
          %v3109 = vadd.f32 %v3108, %v3046
          %v3110 = vadd.f32 %v3109, %v3047
          %v3111 = vadd.f32 %v3110, %v3048
          %v3112 = vadd.f32 %v3111, %v3049
          %v3113 = vadd.f32 %v3112, %v3050
          %v3114 = vadd.f32 %v3113, %v3051
          %v3115 = vadd.f32 %v3114, %v3052
          %v3116 = vadd.f32 %v3115, %v3053
          %v3117 = vadd.f32 %v3116, %v3054
          %v3118 = vadd.f32 %v3117, %v3055
          %v3119 = vadd.f32 %v3118, %v3056
          %v3120 = vadd.f32 %v3119, %v3057
          %v3121 = vadd.f32 %v3120, %v3058
          %v3122 = vadd.f32 %v3121, %v3059
          %v3123 = vadd.f32 %v3122, %v3060
          %v3124 = vadd.f32 %v3123, %v3061
          %v3125 = vadd.f32 %v3124, %v3062
          %v3126 = vadd.f32 %v3125, %v3063
          %v3127 = vadd.f32 %v3126, %v3064
          %v3128 = vadd.f32 %v3127, %v3065
          %v3129 = vadd.f32 %v3128, %v3066
          %v3130 = vadd.f32 %v3129, %v3067
          %v3131 = vadd.f32 %v3130, %v3068
          %v3132 = vadd.f32 %v3131, %v3069
          %v3133 = vadd.f32 %v3132, %v3070
          %v3134 = vadd.f32 %v3133, %v3071
          %v3135 = vadd.f32 %v3134, %v3072
          %v3136 = vadd.f32 %v3135, %v3073
          %v3137 = vadd.f32 %v3136, %v3074
          %v3138 = vadd.f32 %v3137, %v3075
          %v3139 = vadd.f32 %v3138, %v3076
          %v3140 = vadd.f32 %v3139, %v3077
          %v3141 = vadd.f32 %v3140, %v3078
          %v3142 = vadd.f32 %v3141, %v3079
          %v3143 = vadd.f32 %v3142, %v3080
          %v3144 = vadd.f32 %v3143, %v3081
          %v3145 = vadd.f32 %v3144, %v3082
          %3146 = vadd.xlane.f32.xlu0 %v3145
          %v3147 = vpop.xlane.xlu0 %3146
          %v3148 = vrot.slane %v3147, 4
          %v3149 = vadd.f32 %v3147, %v3148
          %v3150 = vrot.slane %v3149, 2
          %v3151 = vadd.f32 %v3149, %v3150
          %v3152 = vrot.slane %v3151, 1
          %v3153 = vadd.f32 %v3151, %v3152
          %s3154 = vtos %v3153
          %v3155 = vstv %s3154
          %v3156 = vadd.f32 %v3018, %v3155
          %vm3157 = vcmask 0
          %3158 = vst.msk [vmem:[#allocation8] sm:$0x1] %vm3157, %v3156
        $region96: #{tpu_custom_call.1} parent=39 // pred_fallthru
          _
        %p3159 = pnand %p2034, %p1809
        %p3160 = pneg %p3159
        // Predicated region
        $region97: #{tpu_custom_call.1} parent=39 // pred_check
          _
        $region98: #{tpu_custom_call.1} parent=39 // pred_check_branch
          %3162 = sbr.rel (%p3159) target = $region100
        $region99: #{tpu_custom_call.1} parent=39 // pred_region
          %v3163 = vld [vmem:[#allocation4] sm:$0x1]
          %v3164 = vld [vmem:[#allocation5] sm:$0x1]
          %v3165 = vadd.f32 %v3163, %v3164
          %v3166 = vld [vmem:[#allocation6] sm:$0x1]
          %v3167 = vmul.f32 %v3166, 2.0
          %v3168 = vsub.f32 %v3165, %v3167
          %v3169 = vmul.f32 %v3168, 0.0009765625
          %v3170 = vadd.f32 %v3169, %v1168
          %v3171 = vld [vmem:[#allocation7] sm:$0x1]
          %v3172 = vld [vmem:[#allocation8] sm:$0x1]
          %v3173 = vadd.f32 %v3171, %v3172
          %v3174 = vmul.f32 %v3173, 7.6293945e-06
          %v3175 = vadd.f32 %v3170, %v3174
          %vm3176 = vcmask 0
          %3177 = vst.msk [vmem:[#allocation18] sm:$0x1] %vm3176, %v3175
        $region100: #{tpu_custom_call.1} parent=39 // pred_fallthru
          _
        %s3178 = sand.u32 %s204, 1
        %s3179 = scalar_lea.sflag [#allocation20], %s3178
        %s3180 = sand.u32 %s204, 1
        %s3181 = smul.addr %s3180, 512
        %s3182 = scalar_lea.vmem [#allocation19], %s3181
        // Predicated region
        $region101: #{tpu_custom_call.1} parent=39 // pred_check
          %p3183 = pneg %p186
        $region102: #{tpu_custom_call.1} parent=39 // pred_check_branch
          %3185 = sbr.rel (%p3183) target = $region104
        $region103: #{tpu_custom_call.1} parent=39 // pred_region
          %3187 = vsyncadd [#allocation12], 0
          %s3189 = sshll.u32 [#allocation18], 4
          %s3190 = int_to_ptr.vmem [resolvable:$true] %s3189
          %s3191 = sshll.u32 %s5, 4
          %s3192 = int_to_ptr.hbm [resolvable:$true] %s3191
          %3194 = dma.vmem_to_hbm [thread:$0]  %s3190, 16, %s3192, [#allocation12]
        $region104: #{tpu_custom_call.1} parent=39 // pred_fallthru
          _
        // Predicated region
        $region105: #{tpu_custom_call.1} parent=39 // pred_check
          %p3195 = pneg %p214
        $region106: #{tpu_custom_call.1} parent=39 // pred_check_branch
          %3197 = sbr.rel (%p3195) target = $region108
        $region107: #{tpu_custom_call.1} parent=39 // pred_region
          %s3198 = smul.u32 32, %s36
          %s3199 = smul.u32 2, %s37
          %3201 = vsyncadd %s3179, 0
          %s3202 = smul.addr %s3198, 4
          %s3203 = sadd.s32 %s3199, %s3202
          %s3204 = smul.addr %s3203, 8
          %s3205 = scalar_lea.hbm %s6, %s3204
          %s3206 = sshll.u32 %s3182, 4
          %s3207 = int_to_ptr.vmem [resolvable:$true] %s3206
          %s3208 = sshll.u32 %s3205, 4
          %s3209 = int_to_ptr.hbm [resolvable:$true] %s3208
          %3214 = dma.vmem_to_hbm [thread:$0]  %s3207, 8192, %s3209, %s3179, 256, 512, 16
        $region108: #{tpu_custom_call.1} parent=39 // pred_fallthru
          _
        // Predicated region
        $region109: #{tpu_custom_call.1} parent=39 // pred_check
          %p3215 = pneg %p186
        $region110: #{tpu_custom_call.1} parent=39 // pred_check_branch
          %3217 = sbr.rel (%p3215) target = $region112
        $region111: #{tpu_custom_call.1} parent=39 // pred_region
          %3219 = dma.done [#allocation12], 16
        $region112: #{tpu_custom_call.1} parent=39 // pred_fallthru
          _
      $region40: #{tpu_custom_call.1} parent=5 // pred_fallthru
        _
      %p3220 = scmp.le.s32.totalorder 2, %s27
      // Predicated region
      $region113: #{tpu_custom_call.1} parent=5 // pred_check
        %p3221 = pneg %p3220
      $region114: #{tpu_custom_call.1} parent=5 // pred_check_branch
        %3223 = sbr.rel (%p3221) target = $region116
      $region115: #{tpu_custom_call.1} parent=5 // pred_region
        %s3224 = ssub.s32 %s27, 2
        // Predicated region
        $region117: #{tpu_custom_call.1} parent=115 // pred_check
          %p3225 = pneg %p220
        $region118: #{tpu_custom_call.1} parent=115 // pred_check_branch
          %3227 = sbr.rel (%p3225) target = $region120
        $region119: #{tpu_custom_call.1} parent=115 // pred_region
          %s3228 = sand.u32 %s205, 1
          %s3229 = scalar_lea.sflag [#allocation20], %s3228
          %s3230 = sand.u32 %s205, 1
          %s3231 = smul.addr %s3230, 512
          %s3232 = scalar_lea.vmem [#allocation19], %s3231
          %3234 = dma.done %s3229, 8192
        $region120: #{tpu_custom_call.1} parent=115 // pred_fallthru
          _
      $region116: #{tpu_custom_call.1} parent=5 // pred_fallthru
        _
    $region6: #{tpu_custom_call.1} parent=1 // loop_footer
      %s31 = sadd.s32 1, %s27
    $region7: #{tpu_custom_call.1} parent=1 // loop_footer_branch
      %26 = sbr.rel target = $region3
    $region8: #{tpu_custom_call.1} parent=1 // loop_exit
      _
    %3235 = vsyncpa [#allocation11], 1
    %s3236 = scalar_lea.sflag [#allocation11], 1
    %3237 = vsyncpa %s3236, 1
    %3238 = vsyncpa [#allocation14], 1
    %s3239 = scalar_lea.sflag [#allocation14], 1
    %3240 = vsyncpa %s3239, 1
    %3241 = vsyncpa [#allocation17], 1
    %s3242 = scalar_lea.sflag [#allocation17], 1
    %3243 = vsyncpa %s3242, 1
    %3244 = vsyncpa [#allocation12], 1
    %s3245 = scalar_lea.sflag [#allocation12], 1
    %3246 = vsyncpa %s3245, 1
    %3247 = vsyncpa [#allocation20], 1
    %s3248 = scalar_lea.sflag [#allocation20], 1
    %3249 = vsyncpa %s3248, 1

</llo_original>
